<compile_context>
chip_gen: v7x
topology: tpu7x:2x2x1
jax: 0.10.0
libtpu: 0.0.40
codegen_flags: <defaults>
</compile_context>

<pallas_src>
import functools

import jax
import jax.numpy as jnp
from jax.experimental import pallas as pl
from jax.experimental.pallas import tpu as pltpu


# ----------------------------- Pallas kernel -----------------------------

def _ffn_kernel(x_ref, w1_ref, b1_ref, w2_ref, b2_ref, o_ref, *, compute_dtype):
    # One (TM, d) row-tile of x per grid step; weights are resident (constant
    # index_map). MXU matmuls accumulate in f32; elementwise math stays f32.
    x = x_ref[...].astype(compute_dtype)
    w1 = w1_ref[...].astype(compute_dtype)
    h = jnp.dot(x, w1, preferred_element_type=jnp.float32) + b1_ref[...]
    h = jnp.maximum(h, 0.0)                      # ReLU (f32 on the VPU)
    # dropout(0.1) is identity in eval mode
    w2 = w2_ref[...].astype(compute_dtype)
    o = jnp.dot(h.astype(compute_dtype), w2,
                preferred_element_type=jnp.float32) + b2_ref[...]
    o_ref[...] = o.astype(o_ref.dtype)


# ----------------------------- wrapper -----------------------------

def feed_forward(x, params, *, block_rows=128, use_bf16=False):
    """FeedForward forward pass.

    x:      (..., d_model) float32
    params: dict with
              w1: (d_model, middle_dim)   -- NOTE: already (in, out) layout
              b1: (middle_dim,)
              w2: (middle_dim, d_model)
              b2: (d_model,)
    """
    orig_shape = x.shape
    d = orig_shape[-1]
    x2 = x.reshape(-1, d)
    n = x2.shape[0]

    w1, b1, w2, b2 = params["w1"], params["b1"], params["w2"], params["b2"]
    mid = w1.shape[1]

    # Row tile: multiple of 8 (sublane), capped by N.
    tm = min(block_rows, n)
    tm = max(8, (tm // 8) * 8)
    n_pad = pl.cdiv(n, tm) * tm
    if n_pad != n:
        x2 = jnp.pad(x2, ((0, n_pad - n), (0, 0)))

    compute_dtype = jnp.bfloat16 if use_bf16 else x.dtype
    kernel = functools.partial(_ffn_kernel, compute_dtype=compute_dtype)

    out = pl.pallas_call(
        kernel,
        out_shape=jax.ShapeDtypeStruct((n_pad, d), x.dtype),
        grid=(n_pad // tm,),
        in_specs=[
            pl.BlockSpec((tm, d), lambda i: (i, 0)),      # x row-tile (streamed)
            pl.BlockSpec((d, mid), lambda i: (0, 0)),     # W1 (resident)
            pl.BlockSpec((1, mid), lambda i: (0, 0)),     # b1
            pl.BlockSpec((mid, d), lambda i: (0, 0)),     # W2 (resident)
            pl.BlockSpec((1, d), lambda i: (0, 0)),       # b2
        ],
        out_specs=pl.BlockSpec((tm, d), lambda i: (i, 0)),
        compiler_params=pltpu.CompilerParams(
            dimension_semantics=("parallel",),
        ),
    )(x2, w1, b1.reshape(1, mid), w2, b2.reshape(1, d))

    if n_pad != n:
        out = out[:n]
    return out.reshape(orig_shape)


# ----------------------------- parameter init -----------------------------

def init_feed_forward(key, d_model, middle_dim=2048):
    k1, k2, k3, k4 = jax.random.split(key, 4)
    # Weights kept in (in, out) layout so the kernel consumes them directly
    # (pre-transposed once at init instead of every forward call).
    return {
        "w1": jax.random.normal(k1, (d_model, middle_dim), jnp.float32) * 0.02,
        "b1": jax.random.normal(k2, (middle_dim,), jnp.float32) * 0.02,
        "w2": jax.random.normal(k3, (middle_dim, d_model), jnp.float32) * 0.02,
        "b2": jax.random.normal(k4, (d_model,), jnp.float32) * 0.02,
    }


# ---------------------------------- main ----------------------------------

if __name__ == "__main__":
    # Lane-dense dims (multiples of 128) per the perf review; middle_dim is the
    # module's default 2048. N = B*S = 256 rows -> 2 row-tiles, pipelined.
    d_model, middle_dim = 128, 2048
    B, S = 4, 64

    root = jax.random.PRNGKey(0)
    kp, kx = jax.random.split(root)
    params = init_feed_forward(kp, d_model, middle_dim)
    x = jax.random.normal(kx, (B, S, d_model), jnp.float32)

    # --- f32 path (faithful to the reference numerics) ---
    out = feed_forward(x, params, block_rows=128, use_bf16=False)
    out = jax.block_until_ready(out)

    # Pure-JAX reference (dropout is identity in eval mode).
    ref = jnp.maximum(x.reshape(-1, d_model) @ params["w1"] + params["b1"], 0.0)
    ref = (ref @ params["w2"] + params["b2"]).reshape(B, S, d_model)

    assert out.shape == (B, S, d_model), out.shape
    assert jnp.all(jnp.isfinite(out))
    assert jnp.allclose(out, ref, atol=2e-2, rtol=2e-2), float(
        jnp.max(jnp.abs(out - ref))
    )

    # --- bf16-operand path (perf option: bf16 MXU inputs, f32 accumulation) ---
    out_bf16 = jax.block_until_ready(
        feed_forward(x, params, block_rows=128, use_bf16=True)
    )
    assert out_bf16.shape == (B, S, d_model)
    assert jnp.all(jnp.isfinite(out_bf16))
    assert jnp.allclose(out_bf16, ref, atol=5e-2, rtol=5e-2), float(
        jnp.max(jnp.abs(out_bf16 - ref))
    )

    print("KERNEL_OK")
</pallas_src>

<mosaic_0001>
module attributes {stable_mosaic.version = 11 : i64} {
  func.func @_ffn_kernel(%arg0: i32, %arg1: memref<128x128xf32, #tpu.memory_space<vmem>>, %arg2: memref<128x2048xf32, #tpu.memory_space<vmem>>, %arg3: memref<1x2048xf32, #tpu.memory_space<vmem>>, %arg4: memref<2048x128xf32, #tpu.memory_space<vmem>>, %arg5: memref<1x128xf32, #tpu.memory_space<vmem>>, %arg6: memref<128x128xf32, #tpu.memory_space<vmem>>) attributes {dimension_semantics = [#tpu.dimension_semantics<parallel>], iteration_bounds = array<i64: 2>, scalar_prefetch = 0 : i64, scratch_operands = 0 : i64, tpu.core_type = #tpu.core_type<tc>, window_params = [{transform_indices = @transform_0, window_bounds = array<i64: 128, 128>}, {pipeline_mode = #tpu.pipeline_mode<synchronous>, transform_indices = @transform_1, window_bounds = array<i64: 128, 2048>}, {pipeline_mode = #tpu.pipeline_mode<synchronous>, transform_indices = @transform_2, window_bounds = array<i64: 1, 2048>}, {pipeline_mode = #tpu.pipeline_mode<synchronous>, transform_indices = @transform_3, window_bounds = array<i64: 2048, 128>}, {pipeline_mode = #tpu.pipeline_mode<synchronous>, transform_indices = @transform_4, window_bounds = array<i64: 1, 128>}, {transform_indices = @transform_5, window_bounds = array<i64: 128, 128>}]} {
    %c0 = arith.constant 0 : index
    %c0_0 = arith.constant 0 : index
    %0 = vector.load %arg1[%c0, %c0_0] : memref<128x128xf32, #tpu.memory_space<vmem>>, vector<128x128xf32>
    %c0_1 = arith.constant 0 : index
    %c0_2 = arith.constant 0 : index
    %1 = vector.load %arg2[%c0_1, %c0_2] : memref<128x2048xf32, #tpu.memory_space<vmem>>, vector<128x2048xf32>
    %cst = arith.constant dense<0.000000e+00> : vector<128x2048xf32>
    %2 = tpu.matmul %0, %1, %cst {dimension_numbers = #tpu.dot_dimension_numbers<[1], [0], [0], [1], [0, 0, 1, 1], [], []>} : vector<128x128xf32>, vector<128x2048xf32>, vector<128x2048xf32> -> vector<128x2048xf32>
    %c0_3 = arith.constant 0 : index
    %c0_4 = arith.constant 0 : index
    %3 = vector.load %arg3[%c0_3, %c0_4] : memref<1x2048xf32, #tpu.memory_space<vmem>>, vector<1x2048xf32>
    %4 = vector.broadcast %3 : vector<1x2048xf32> to vector<128x2048xf32>
    %5 = arith.addf %2, %4 : vector<128x2048xf32>
    %cst_5 = arith.constant 0.000000e+00 : f32
    %6 = vector.broadcast %cst_5 : f32 to vector<128x2048xf32>
    %7 = arith.maximumf %5, %6 : vector<128x2048xf32>
    %c0_6 = arith.constant 0 : index
    %c0_7 = arith.constant 0 : index
    %8 = vector.load %arg4[%c0_6, %c0_7] : memref<2048x128xf32, #tpu.memory_space<vmem>>, vector<2048x128xf32>
    %cst_8 = arith.constant dense<0.000000e+00> : vector<128x128xf32>
    %9 = tpu.matmul %7, %8, %cst_8 {dimension_numbers = #tpu.dot_dimension_numbers<[1], [0], [0], [1], [0, 0, 1, 1], [], []>} : vector<128x2048xf32>, vector<2048x128xf32>, vector<128x128xf32> -> vector<128x128xf32>
    %c0_9 = arith.constant 0 : index
    %c0_10 = arith.constant 0 : index
    %10 = vector.load %arg5[%c0_9, %c0_10] : memref<1x128xf32, #tpu.memory_space<vmem>>, vector<1x128xf32>
    %11 = vector.broadcast %10 : vector<1x128xf32> to vector<128x128xf32>
    %12 = arith.addf %9, %11 : vector<128x128xf32>
    %c0_11 = arith.constant 0 : index
    %c0_12 = arith.constant 0 : index
    %13 = vector.load %arg6[%c0_11, %c0_12] : memref<128x128xf32, #tpu.memory_space<vmem>>, vector<128x128xf32>
    tpu.vector_store %arg6[%c0_11, %c0_12], %12 {strides = array<i32>} : memref<128x128xf32, #tpu.memory_space<vmem>>, vector<128x128xf32>,
    return
  }
  func.func @transform_0(%arg0: i32) -> (i32, i32) {
    %c0_i32 = arith.constant 0 : i32
    %c0_i32_0 = arith.constant 0 : i32
    return %arg0, %c0_i32 : i32, i32
  }
  func.func @transform_1(%arg0: i32) -> (i32, i32) {
    %c0_i32 = arith.constant 0 : i32
    %c0_i32_0 = arith.constant 0 : i32
    %c0_i32_1 = arith.constant 0 : i32
    return %c0_i32, %c0_i32_0 : i32, i32
  }
  func.func @transform_2(%arg0: i32) -> (i32, i32) {
    %c0_i32 = arith.constant 0 : i32
    %c0_i32_0 = arith.constant 0 : i32
    %c0_i32_1 = arith.constant 0 : i32
    return %c0_i32, %c0_i32_0 : i32, i32
  }
  func.func @transform_3(%arg0: i32) -> (i32, i32) {
    %c0_i32 = arith.constant 0 : i32
    %c0_i32_0 = arith.constant 0 : i32
    %c0_i32_1 = arith.constant 0 : i32
    return %c0_i32, %c0_i32_0 : i32, i32
  }
  func.func @transform_4(%arg0: i32) -> (i32, i32) {
    %c0_i32 = arith.constant 0 : i32
    %c0_i32_0 = arith.constant 0 : i32
    %c0_i32_1 = arith.constant 0 : i32
    return %c0_i32, %c0_i32_0 : i32, i32
  }
  func.func @transform_5(%arg0: i32) -> (i32, i32) {
    %c0_i32 = arith.constant 0 : i32
    %c0_i32_0 = arith.constant 0 : i32
    return %arg0, %c0_i32 : i32, i32
  }
}

</mosaic_0001>

<llo_original>
// kernel: tpu_custom_call.1
$region0: #{tpu_custom_call.1}
  #allocation0 [shape = 'u32[]', space=smem, size = 0x4, offset = 0x4, fixed_abs, tag = 'smem constant byte address 0x4 - core index']
  #allocation1 [shape = 'u32[144,128]{1,0:T(1,128)}', space=vmem, size = 0x12000, scoped, tag = 'internal scratch']
  %s0 = inlined_call_operand.hbm [shape: f32[256,128], index: 0, kind: input, shape index: {}]
  %s1 = inlined_call_operand.hbm [shape: f32[128,2048], index: 1, kind: input, shape index: {}]
  %s2 = inlined_call_operand.hbm [shape: f32[1,2048], index: 2, kind: input, shape index: {}]
  %s3 = inlined_call_operand.hbm [shape: f32[2048,128], index: 3, kind: input, shape index: {}]
  %s4 = inlined_call_operand.vmem [shape: f32[1,128], index: 4, kind: input, shape index: {}]
  %s5 = inlined_call_operand.hbm [shape: f32[256,128], index: 5, kind: output, shape index: {}]
  %s6 = sld [smem:[#allocation0]]
  $region69: #{tpu_custom_call.1} parent=0
    _
  %s8 = ssub.s32 1, %s6
  %s9 = scalar_select 0, %s8, %s6
  $region1: #{tpu_custom_call.1} parent=0
    #allocation2 [shape = 'u8[131072]{0}', space=vmem, size = 0x20000, scoped, tag = 'input window, operand 0']
    #allocation3 [shape = 's32[2]{0}', space=sflag, size = 0x8, scoped, tag = 'scoped memory for tpu_custom_call.1']
    #allocation4 [shape = 's32[2]{0}', space=sflag, size = 0x8, scoped, tag = 'scoped memory for tpu_custom_call.1']
    #allocation5 [shape = 'u8[1048576]{0}', space=vmem, size = 0x100000, scoped, tag = 'input window, operand 1, single buffered']
    #allocation6 [shape = 's32[1]{0}', space=sflag, size = 0x4, scoped, tag = 'scoped memory for tpu_custom_call.1']
    #allocation7 [shape = 'u8[8192]{0}', space=vmem, size = 0x2000, scoped, tag = 'input window, operand 2, single buffered']
    #allocation8 [shape = 'u8[1048576]{0}', space=vmem, size = 0x100000, scoped, tag = 'input window, operand 3, single buffered']
    #allocation9 [shape = 's32[1]{0}', space=sflag, size = 0x4, scoped, tag = 'scoped memory for tpu_custom_call.1']
    #allocation10 [shape = 'u8[131072]{0}', space=vmem, size = 0x20000, scoped, tag = 'output window, operand 0']
    %10 = vsyncpa [#allocation3], 0
    %s11 = scalar_lea.sflag [#allocation3], 1
    %12 = vsyncpa %s11, 0
    %13 = vsyncpa [#allocation6], 0
    %14 = vsyncpa [#allocation9], 0
    %15 = vsyncpa [#allocation4], 0
    %s16 = scalar_lea.sflag [#allocation4], 1
    %17 = vsyncpa %s16, 0
    loop: start=0, step=1, limit=4
    $region2: #{tpu_custom_call.1} parent=1 // loop_pre_header
      _
    $region3: #{tpu_custom_call.1} parent=1 // loop_header
      %s19 = sphi 0, %s23
      %p20 = scmp.ge.s32.totalorder %s19, 4
      %s29 = sphi 0, %s31
      %s32 = sphi 0, %s29
      %s33 = sphi 0, %s32
      %s49 = sphi 0, %s33
      %s53 = sphi 0, %s53
      %s55 = sphi 0, %s53
      %s56 = sphi 0, %s55
      %s70 = sphi 0, %s56
      %s74 = sphi 0, %s74
      %s76 = sphi 0, %s74
      %s77 = sphi 0, %s76
      %s91 = sphi 0, %s77
      %s95 = sphi 0, %s95
      %s97 = sphi 0, %s95
      %s98 = sphi 0, %s97
      %s112 = sphi 0, %s98
      %s116 = sphi 0, %s116
      %s118 = sphi 0, %s116
      %s119 = sphi 0, %s118
      %s133 = sphi 0, %s119
      %s139 = sphi 0, %s141
      %s142 = sphi 0, %s139
      %s143 = sphi 0, %s142
      %s159 = sphi 0, %s143
    $region4: #{tpu_custom_call.1} parent=1 // loop_header_branch
      %22 = sbr.rel (%p20) target = $region8
    $region5: #{tpu_custom_call.1} parent=1 // loop_body
      %s24 = ssub.s32 %s19, 1
      %s25 = ssub.s32 %s19, 2
      %s26 = sadd.s32 %s19, 1
      %s27 = ssub.s32 %s19, %s26
      %p28 = scmp.eq.s32.totalorder %s27, 0
      %s30 = sadd.s32 %s29, 1
      %s31 = scalar_select %p28, %s29, %s30
      %p34 = pneg %p28
      %p35 = scmp.eq.s32.totalorder %s19, 1
      %p36 = por %p34, %p35
      %p37 = scmp.ne.s32.totalorder %s29, %s32
      %p38 = scmp.eq.s32.totalorder %s19, 0
      %p39 = por %p37, %p38
      %p40 = scmp.ne.s32.totalorder %s29, %s32
      %p41 = scmp.eq.s32.totalorder %s24, 1
      %p42 = por %p40, %p41
      %p43 = scmp.ne.s32.totalorder %s32, %s33
      %p44 = scmp.eq.s32.totalorder %s24, 0
      %p45 = por %p43, %p44
      %p46 = scmp.ne.s32.totalorder %s32, %s33
      %p47 = scmp.eq.s32.totalorder %s25, 1
      %p48 = por %p46, %p47
      %p50 = scmp.ne.s32.totalorder %s33, %s49
      %p51 = scmp.eq.s32.totalorder %s25, 0
      %p52 = por %p50, %p51
      %s54 = sadd.s32 %s53, 1
      %p57 = scmp.eq.s32.totalorder %s19, 1
      %p58 = scmp.ne.s32.totalorder %s53, %s55
      %p59 = scmp.eq.s32.totalorder %s19, 0
      %p60 = por %p58, %p59
      %p61 = scmp.ne.s32.totalorder %s53, %s55
      %p62 = scmp.eq.s32.totalorder %s24, 1
      %p63 = por %p61, %p62
      %p64 = scmp.ne.s32.totalorder %s55, %s56
      %p65 = scmp.eq.s32.totalorder %s24, 0
      %p66 = por %p64, %p65
      %p67 = scmp.ne.s32.totalorder %s55, %s56
      %p68 = scmp.eq.s32.totalorder %s25, 1
      %p69 = por %p67, %p68
      %p71 = scmp.ne.s32.totalorder %s56, %s70
      %p72 = scmp.eq.s32.totalorder %s25, 0
      %p73 = por %p71, %p72
      %s75 = sadd.s32 %s74, 1
      %p78 = scmp.eq.s32.totalorder %s19, 1
      %p79 = scmp.ne.s32.totalorder %s74, %s76
      %p80 = scmp.eq.s32.totalorder %s19, 0
      %p81 = por %p79, %p80
      %p82 = scmp.ne.s32.totalorder %s74, %s76
      %p83 = scmp.eq.s32.totalorder %s24, 1
      %p84 = por %p82, %p83
      %p85 = scmp.ne.s32.totalorder %s76, %s77
      %p86 = scmp.eq.s32.totalorder %s24, 0
      %p87 = por %p85, %p86
      %p88 = scmp.ne.s32.totalorder %s76, %s77
      %p89 = scmp.eq.s32.totalorder %s25, 1
      %p90 = por %p88, %p89
      %p92 = scmp.ne.s32.totalorder %s77, %s91
      %p93 = scmp.eq.s32.totalorder %s25, 0
      %p94 = por %p92, %p93
      %s96 = sadd.s32 %s95, 1
      %p99 = scmp.eq.s32.totalorder %s19, 1
      %p100 = scmp.ne.s32.totalorder %s95, %s97
      %p101 = scmp.eq.s32.totalorder %s19, 0
      %p102 = por %p100, %p101
      %p103 = scmp.ne.s32.totalorder %s95, %s97
      %p104 = scmp.eq.s32.totalorder %s24, 1
      %p105 = por %p103, %p104
      %p106 = scmp.ne.s32.totalorder %s97, %s98
      %p107 = scmp.eq.s32.totalorder %s24, 0
      %p108 = por %p106, %p107
      %p109 = scmp.ne.s32.totalorder %s97, %s98
      %p110 = scmp.eq.s32.totalorder %s25, 1
      %p111 = por %p109, %p110
      %p113 = scmp.ne.s32.totalorder %s98, %s112
      %p114 = scmp.eq.s32.totalorder %s25, 0
      %p115 = por %p113, %p114
      %s117 = sadd.s32 %s116, 1
      %p120 = scmp.eq.s32.totalorder %s19, 1
      %p121 = scmp.ne.s32.totalorder %s116, %s118
      %p122 = scmp.eq.s32.totalorder %s19, 0
      %p123 = por %p121, %p122
      %p124 = scmp.ne.s32.totalorder %s116, %s118
      %p125 = scmp.eq.s32.totalorder %s24, 1
      %p126 = por %p124, %p125
      %p127 = scmp.ne.s32.totalorder %s118, %s119
      %p128 = scmp.eq.s32.totalorder %s24, 0
      %p129 = por %p127, %p128
      %p130 = scmp.ne.s32.totalorder %s118, %s119
      %p131 = scmp.eq.s32.totalorder %s25, 1
      %p132 = por %p130, %p131
      %p134 = scmp.ne.s32.totalorder %s119, %s133
      %p135 = scmp.eq.s32.totalorder %s25, 0
      %p136 = por %p134, %p135
      %s137 = ssub.s32 %s19, %s26
      %p138 = scmp.eq.s32.totalorder %s137, 0
      %s140 = sadd.s32 %s139, 1
      %s141 = scalar_select %p138, %s139, %s140
      %p144 = pneg %p138
      %p145 = scmp.eq.s32.totalorder %s19, 1
      %p146 = por %p144, %p145
      %p147 = scmp.ne.s32.totalorder %s139, %s142
      %p148 = scmp.eq.s32.totalorder %s19, 0
      %p149 = por %p147, %p148
      %p150 = scmp.ne.s32.totalorder %s139, %s142
      %p151 = scmp.eq.s32.totalorder %s24, 1
      %p152 = por %p150, %p151
      %p153 = scmp.ne.s32.totalorder %s142, %s143
      %p154 = scmp.eq.s32.totalorder %s24, 0
      %p155 = por %p153, %p154
      %p156 = scmp.ne.s32.totalorder %s142, %s143
      %p157 = scmp.eq.s32.totalorder %s25, 1
      %p158 = por %p156, %p157
      %p160 = scmp.ne.s32.totalorder %s143, %s159
      %p161 = scmp.eq.s32.totalorder %s25, 0
      %p162 = por %p160, %p161
      %p163 = scmp.le.s32.totalorder 1, %s19
      %p164 = scmp.lt.s32.totalorder %s19, 3
      %p165 = pnand %p163, %p164
      %p166 = pneg %p165
      // Predicated region
      $region9: #{tpu_custom_call.1} parent=5 // pred_check
        _
      $region10: #{tpu_custom_call.1} parent=5 // pred_check_branch
        %168 = sbr.rel (%p165) target = $region12
      $region11: #{tpu_custom_call.1} parent=5 // pred_region
        %s169 = ssub.s32 %s19, 1
        // Predicated region
        $region13: #{tpu_custom_call.1} parent=11 // pred_check
          %p170 = pneg %p66
        $region14: #{tpu_custom_call.1} parent=11 // pred_check_branch
          %172 = sbr.rel (%p170) target = $region16
        $region15: #{tpu_custom_call.1} parent=11 // pred_region
          %s174 = ssub.s32 32768, 32768
          %175 = vsyncadd [#allocation6], %s174
          %s176 = sshll.u32 [#allocation5], 4
          %s177 = int_to_ptr.vmem [resolvable:$true] %s176
          %182 = dma.hbm_to_vmem [thread:$0]  %s1, 32768, %s177, [#allocation6], 2048, 2048, 128
        $region16: #{tpu_custom_call.1} parent=11 // pred_fallthru
          _
        // Predicated region
        $region17: #{tpu_custom_call.1} parent=11 // pred_check
          %p183 = pneg %p87
        $region18: #{tpu_custom_call.1} parent=11 // pred_check_branch
          %185 = sbr.rel (%p183) target = $region20
        $region19: #{tpu_custom_call.1} parent=11 // pred_region
          %s187 = ssub.s32 256, 256
          %188 = vsyncadd [#allocation6], %s187
          %s190 = sshll.u32 [#allocation7], 4
          %s191 = int_to_ptr.vmem [resolvable:$true] %s190
          %193 = dma.hbm_to_vmem [thread:$0]  %s2, 256, %s191, [#allocation6]
        $region20: #{tpu_custom_call.1} parent=11 // pred_fallthru
          _
        // Predicated region
        $region21: #{tpu_custom_call.1} parent=11 // pred_check
          %p194 = pneg %p108
        $region22: #{tpu_custom_call.1} parent=11 // pred_check_branch
          %196 = sbr.rel (%p194) target = $region24
        $region23: #{tpu_custom_call.1} parent=11 // pred_region
          %s198 = ssub.s32 32768, 32768
          %199 = vsyncadd [#allocation9], %s198
          %s200 = sshll.u32 [#allocation8], 4
          %s201 = int_to_ptr.vmem [resolvable:$true] %s200
          %206 = dma.hbm_to_vmem [thread:$0]  %s3, 32768, %s201, [#allocation9], 128, 128, 8
        $region24: #{tpu_custom_call.1} parent=11 // pred_fallthru
          _
        // Predicated region
        $region25: #{tpu_custom_call.1} parent=11 // pred_check
          %p207 = pneg %p129
        $region26: #{tpu_custom_call.1} parent=11 // pred_check_branch
          %209 = sbr.rel (%p207) target = $region28
        $region27: #{tpu_custom_call.1} parent=11 // pred_region
          _
        $region28: #{tpu_custom_call.1} parent=11 // pred_fallthru
          _
      $region12: #{tpu_custom_call.1} parent=5 // pred_fallthru
        _
      %p210 = scmp.lt.s32.totalorder %s19, 2
      // Predicated region
      $region29: #{tpu_custom_call.1} parent=5 // pred_check
        %p211 = pneg %p210
      $region30: #{tpu_custom_call.1} parent=5 // pred_check_branch
        %213 = sbr.rel (%p211) target = $region32
      $region31: #{tpu_custom_call.1} parent=5 // pred_region
        // Predicated region
        $region33: #{tpu_custom_call.1} parent=31 // pred_check
          %p214 = pneg %p39
        $region34: #{tpu_custom_call.1} parent=31 // pred_check_branch
          %216 = sbr.rel (%p214) target = $region36
        $region35: #{tpu_custom_call.1} parent=31 // pred_region
          %s217 = sand.u32 %s29, 1
          %s218 = scalar_lea.sflag [#allocation3], %s217
          %s219 = sand.u32 %s29, 1
          %s220 = smul.addr %s219, 128
          %s221 = scalar_lea.vmem [#allocation2], %s220
          %s222 = smul.u32 16, %s19
          %s224 = ssub.s32 2048, 2048
          %225 = vsyncadd %s218, %s224
          %s226 = smul.addr %s222, 128
          %s227 = scalar_lea.hbm %s0, %s226
          %s228 = sshll.u32 %s221, 4
          %s229 = int_to_ptr.vmem [resolvable:$true] %s228
          %234 = dma.hbm_to_vmem [thread:$0]  %s227, 2048, %s229, %s218, 128, 128, 8
        $region36: #{tpu_custom_call.1} parent=31 // pred_fallthru
          _
      $region32: #{tpu_custom_call.1} parent=5 // pred_fallthru
        _
      %p235 = scmp.le.s32.totalorder 1, %s19
      %p236 = scmp.lt.s32.totalorder %s19, 3
      %p237 = pnand %p235, %p236
      %p238 = pneg %p237
      // Predicated region
      $region37: #{tpu_custom_call.1} parent=5 // pred_check
        _
      $region38: #{tpu_custom_call.1} parent=5 // pred_check_branch
        %240 = sbr.rel (%p237) target = $region40
      $region39: #{tpu_custom_call.1} parent=5 // pred_region
        %s241 = ssub.s32 %s19, 1
        %s242 = sand.u32 %s32, 1
        %s243 = scalar_lea.sflag [#allocation3], %s242
        %s244 = sand.u32 %s32, 1
        %s245 = smul.addr %s244, 128
        %s246 = scalar_lea.vmem [#allocation2], %s245
        // Predicated region
        $region41: #{tpu_custom_call.1} parent=39 // pred_check
          %p247 = pneg %p45
        $region42: #{tpu_custom_call.1} parent=39 // pred_check_branch
          %249 = sbr.rel (%p247) target = $region44
        $region43: #{tpu_custom_call.1} parent=39 // pred_region
          %250 = dma.done %s243, 2048
        $region44: #{tpu_custom_call.1} parent=39 // pred_fallthru
          _
        // Predicated region
        $region45: #{tpu_custom_call.1} parent=39 // pred_check
          %p251 = pneg %p66
        $region46: #{tpu_custom_call.1} parent=39 // pred_check_branch
          %253 = sbr.rel (%p251) target = $region48
        $region47: #{tpu_custom_call.1} parent=39 // pred_region
          %254 = dma.done [#allocation6], 32768
        $region48: #{tpu_custom_call.1} parent=39 // pred_fallthru
          _
        // Predicated region
        $region49: #{tpu_custom_call.1} parent=39 // pred_check
          %p255 = pneg %p87
        $region50: #{tpu_custom_call.1} parent=39 // pred_check_branch
          %257 = sbr.rel (%p255) target = $region52
        $region51: #{tpu_custom_call.1} parent=39 // pred_region
          %258 = dma.done [#allocation6], 256
        $region52: #{tpu_custom_call.1} parent=39 // pred_fallthru
          _
        // Predicated region
        $region53: #{tpu_custom_call.1} parent=39 // pred_check
          %p259 = pneg %p108
        $region54: #{tpu_custom_call.1} parent=39 // pred_check_branch
          %261 = sbr.rel (%p259) target = $region56
        $region55: #{tpu_custom_call.1} parent=39 // pred_region
          %262 = dma.done [#allocation9], 32768
        $region56: #{tpu_custom_call.1} parent=39 // pred_fallthru
          _
        %s263 = sand.u32 %s32, 1
        %s264 = scalar_lea.sflag [#allocation3], %s263
        %s265 = sand.u32 %s32, 1
        %s266 = smul.addr %s265, 128
        %s267 = scalar_lea.vmem [#allocation2], %s266
        %p268 = pneg %p45
        %p269 = pneg %p42
        %p270 = pneg %p66
        %p271 = pneg %p63
        %p272 = pneg %p87
        %p273 = pneg %p84
        %p274 = pneg %p108
        %p275 = pneg %p105
        %p276 = pneg %p129
        %p277 = pneg %p126
        %p278 = pneg %p155
        %p279 = pneg %p152
        %s280 = sand.u32 %s142, 1
        %s281 = scalar_lea.sflag [#allocation4], %s280
        %s282 = sand.u32 %s142, 1
        %s283 = smul.addr %s282, 128
        %s284 = scalar_lea.vmem [#allocation10], %s283
        %s285 = smul.u32 16, %s24
        %s286 = smul.u32 16, %s24
        %v287 = vld [vmem:[%s246] sm:$0xff]
        %v288 = vld [vmem:[%s246 + $0x8] sm:$0xff]
        %v289 = vld [vmem:[%s246 + $0x10] sm:$0xff]
        %v290 = vld [vmem:[%s246 + $0x18] sm:$0xff]
        %v291 = vld [vmem:[%s246 + $0x20] sm:$0xff]
        %v292 = vld [vmem:[%s246 + $0x28] sm:$0xff]
        %v293 = vld [vmem:[%s246 + $0x30] sm:$0xff]
        %v294 = vld [vmem:[%s246 + $0x38] sm:$0xff]
        %v295 = vld [vmem:[%s246 + $0x40] sm:$0xff]
        %v296 = vld [vmem:[%s246 + $0x48] sm:$0xff]
        %v297 = vld [vmem:[%s246 + $0x50] sm:$0xff]
        %v298 = vld [vmem:[%s246 + $0x58] sm:$0xff]
        %v299 = vld [vmem:[%s246 + $0x60] sm:$0xff]
        %v300 = vld [vmem:[%s246 + $0x68] sm:$0xff]
        %v301 = vld [vmem:[%s246 + $0x70] sm:$0xff]
        %v302 = vld [vmem:[%s246 + $0x78] sm:$0xff]
        %v303 = vld [vmem:[#allocation5] sm:$0xff]
        %v304 = vld [vmem:[#allocation5 + $0x8] sm:$0xff]
        %v305 = vld [vmem:[#allocation5 + $0x10] sm:$0xff]
        %v306 = vld [vmem:[#allocation5 + $0x18] sm:$0xff]
        %v307 = vld [vmem:[#allocation5 + $0x20] sm:$0xff]
        %v308 = vld [vmem:[#allocation5 + $0x28] sm:$0xff]
        %v309 = vld [vmem:[#allocation5 + $0x30] sm:$0xff]
        %v310 = vld [vmem:[#allocation5 + $0x38] sm:$0xff]
        %v311 = vld [vmem:[#allocation5 + $0x40] sm:$0xff]
        %v312 = vld [vmem:[#allocation5 + $0x48] sm:$0xff]
        %v313 = vld [vmem:[#allocation5 + $0x50] sm:$0xff]
        %v314 = vld [vmem:[#allocation5 + $0x58] sm:$0xff]
        %v315 = vld [vmem:[#allocation5 + $0x60] sm:$0xff]
        %v316 = vld [vmem:[#allocation5 + $0x68] sm:$0xff]
        %v317 = vld [vmem:[#allocation5 + $0x70] sm:$0xff]
        %v318 = vld [vmem:[#allocation5 + $0x78] sm:$0xff]
        %v319 = vld [vmem:[#allocation5 + $0x80] sm:$0xff]
        %v320 = vld [vmem:[#allocation5 + $0x88] sm:$0xff]
        %v321 = vld [vmem:[#allocation5 + $0x90] sm:$0xff]
        %v322 = vld [vmem:[#allocation5 + $0x98] sm:$0xff]
        %v323 = vld [vmem:[#allocation5 + $0xa0] sm:$0xff]
        %v324 = vld [vmem:[#allocation5 + $0xa8] sm:$0xff]
        %v325 = vld [vmem:[#allocation5 + $0xb0] sm:$0xff]
        %v326 = vld [vmem:[#allocation5 + $0xb8] sm:$0xff]
        %v327 = vld [vmem:[#allocation5 + $0xc0] sm:$0xff]
        %v328 = vld [vmem:[#allocation5 + $0xc8] sm:$0xff]
        %v329 = vld [vmem:[#allocation5 + $0xd0] sm:$0xff]
        %v330 = vld [vmem:[#allocation5 + $0xd8] sm:$0xff]
        %v331 = vld [vmem:[#allocation5 + $0xe0] sm:$0xff]
        %v332 = vld [vmem:[#allocation5 + $0xe8] sm:$0xff]
        %v333 = vld [vmem:[#allocation5 + $0xf0] sm:$0xff]
        %v334 = vld [vmem:[#allocation5 + $0xf8] sm:$0xff]
        %v335 = vld [vmem:[#allocation5 + $0x100] sm:$0xff]
        %v336 = vld [vmem:[#allocation5 + $0x108] sm:$0xff]
        %v337 = vld [vmem:[#allocation5 + $0x110] sm:$0xff]
        %v338 = vld [vmem:[#allocation5 + $0x118] sm:$0xff]
        %v339 = vld [vmem:[#allocation5 + $0x120] sm:$0xff]
        %v340 = vld [vmem:[#allocation5 + $0x128] sm:$0xff]
        %v341 = vld [vmem:[#allocation5 + $0x130] sm:$0xff]
        %v342 = vld [vmem:[#allocation5 + $0x138] sm:$0xff]
        %v343 = vld [vmem:[#allocation5 + $0x140] sm:$0xff]
        %v344 = vld [vmem:[#allocation5 + $0x148] sm:$0xff]
        %v345 = vld [vmem:[#allocation5 + $0x150] sm:$0xff]
        %v346 = vld [vmem:[#allocation5 + $0x158] sm:$0xff]
        %v347 = vld [vmem:[#allocation5 + $0x160] sm:$0xff]
        %v348 = vld [vmem:[#allocation5 + $0x168] sm:$0xff]
        %v349 = vld [vmem:[#allocation5 + $0x170] sm:$0xff]
        %v350 = vld [vmem:[#allocation5 + $0x178] sm:$0xff]
        %v351 = vld [vmem:[#allocation5 + $0x180] sm:$0xff]
        %v352 = vld [vmem:[#allocation5 + $0x188] sm:$0xff]
        %v353 = vld [vmem:[#allocation5 + $0x190] sm:$0xff]
        %v354 = vld [vmem:[#allocation5 + $0x198] sm:$0xff]
        %v355 = vld [vmem:[#allocation5 + $0x1a0] sm:$0xff]
        %v356 = vld [vmem:[#allocation5 + $0x1a8] sm:$0xff]
        %v357 = vld [vmem:[#allocation5 + $0x1b0] sm:$0xff]
        %v358 = vld [vmem:[#allocation5 + $0x1b8] sm:$0xff]
        %v359 = vld [vmem:[#allocation5 + $0x1c0] sm:$0xff]
        %v360 = vld [vmem:[#allocation5 + $0x1c8] sm:$0xff]
        %v361 = vld [vmem:[#allocation5 + $0x1d0] sm:$0xff]
        %v362 = vld [vmem:[#allocation5 + $0x1d8] sm:$0xff]
        %v363 = vld [vmem:[#allocation5 + $0x1e0] sm:$0xff]
        %v364 = vld [vmem:[#allocation5 + $0x1e8] sm:$0xff]
        %v365 = vld [vmem:[#allocation5 + $0x1f0] sm:$0xff]
        %v366 = vld [vmem:[#allocation5 + $0x1f8] sm:$0xff]
        %v367 = vld [vmem:[#allocation5 + $0x200] sm:$0xff]
        %v368 = vld [vmem:[#allocation5 + $0x208] sm:$0xff]
        %v369 = vld [vmem:[#allocation5 + $0x210] sm:$0xff]
        %v370 = vld [vmem:[#allocation5 + $0x218] sm:$0xff]
        %v371 = vld [vmem:[#allocation5 + $0x220] sm:$0xff]
        %v372 = vld [vmem:[#allocation5 + $0x228] sm:$0xff]
        %v373 = vld [vmem:[#allocation5 + $0x230] sm:$0xff]
        %v374 = vld [vmem:[#allocation5 + $0x238] sm:$0xff]
        %v375 = vld [vmem:[#allocation5 + $0x240] sm:$0xff]
        %v376 = vld [vmem:[#allocation5 + $0x248] sm:$0xff]
        %v377 = vld [vmem:[#allocation5 + $0x250] sm:$0xff]
        %v378 = vld [vmem:[#allocation5 + $0x258] sm:$0xff]
        %v379 = vld [vmem:[#allocation5 + $0x260] sm:$0xff]
        %v380 = vld [vmem:[#allocation5 + $0x268] sm:$0xff]
        %v381 = vld [vmem:[#allocation5 + $0x270] sm:$0xff]
        %v382 = vld [vmem:[#allocation5 + $0x278] sm:$0xff]
        %v383 = vld [vmem:[#allocation5 + $0x280] sm:$0xff]
        %v384 = vld [vmem:[#allocation5 + $0x288] sm:$0xff]
        %v385 = vld [vmem:[#allocation5 + $0x290] sm:$0xff]
        %v386 = vld [vmem:[#allocation5 + $0x298] sm:$0xff]
        %v387 = vld [vmem:[#allocation5 + $0x2a0] sm:$0xff]
        %v388 = vld [vmem:[#allocation5 + $0x2a8] sm:$0xff]
        %v389 = vld [vmem:[#allocation5 + $0x2b0] sm:$0xff]
        %v390 = vld [vmem:[#allocation5 + $0x2b8] sm:$0xff]
        %v391 = vld [vmem:[#allocation5 + $0x2c0] sm:$0xff]
        %v392 = vld [vmem:[#allocation5 + $0x2c8] sm:$0xff]
        %v393 = vld [vmem:[#allocation5 + $0x2d0] sm:$0xff]
        %v394 = vld [vmem:[#allocation5 + $0x2d8] sm:$0xff]
        %v395 = vld [vmem:[#allocation5 + $0x2e0] sm:$0xff]
        %v396 = vld [vmem:[#allocation5 + $0x2e8] sm:$0xff]
        %v397 = vld [vmem:[#allocation5 + $0x2f0] sm:$0xff]
        %v398 = vld [vmem:[#allocation5 + $0x2f8] sm:$0xff]
        %v399 = vld [vmem:[#allocation5 + $0x300] sm:$0xff]
        %v400 = vld [vmem:[#allocation5 + $0x308] sm:$0xff]
        %v401 = vld [vmem:[#allocation5 + $0x310] sm:$0xff]
        %v402 = vld [vmem:[#allocation5 + $0x318] sm:$0xff]
        %v403 = vld [vmem:[#allocation5 + $0x320] sm:$0xff]
        %v404 = vld [vmem:[#allocation5 + $0x328] sm:$0xff]
        %v405 = vld [vmem:[#allocation5 + $0x330] sm:$0xff]
        %v406 = vld [vmem:[#allocation5 + $0x338] sm:$0xff]
        %v407 = vld [vmem:[#allocation5 + $0x340] sm:$0xff]
        %v408 = vld [vmem:[#allocation5 + $0x348] sm:$0xff]
        %v409 = vld [vmem:[#allocation5 + $0x350] sm:$0xff]
        %v410 = vld [vmem:[#allocation5 + $0x358] sm:$0xff]
        %v411 = vld [vmem:[#allocation5 + $0x360] sm:$0xff]
        %v412 = vld [vmem:[#allocation5 + $0x368] sm:$0xff]
        %v413 = vld [vmem:[#allocation5 + $0x370] sm:$0xff]
        %v414 = vld [vmem:[#allocation5 + $0x378] sm:$0xff]
        %v415 = vld [vmem:[#allocation5 + $0x380] sm:$0xff]
        %v416 = vld [vmem:[#allocation5 + $0x388] sm:$0xff]
        %v417 = vld [vmem:[#allocation5 + $0x390] sm:$0xff]
        %v418 = vld [vmem:[#allocation5 + $0x398] sm:$0xff]
        %v419 = vld [vmem:[#allocation5 + $0x3a0] sm:$0xff]
        %v420 = vld [vmem:[#allocation5 + $0x3a8] sm:$0xff]
        %v421 = vld [vmem:[#allocation5 + $0x3b0] sm:$0xff]
        %v422 = vld [vmem:[#allocation5 + $0x3b8] sm:$0xff]
        %v423 = vld [vmem:[#allocation5 + $0x3c0] sm:$0xff]
        %v424 = vld [vmem:[#allocation5 + $0x3c8] sm:$0xff]
        %v425 = vld [vmem:[#allocation5 + $0x3d0] sm:$0xff]
        %v426 = vld [vmem:[#allocation5 + $0x3d8] sm:$0xff]
        %v427 = vld [vmem:[#allocation5 + $0x3e0] sm:$0xff]
        %v428 = vld [vmem:[#allocation5 + $0x3e8] sm:$0xff]
        %v429 = vld [vmem:[#allocation5 + $0x3f0] sm:$0xff]
        %v430 = vld [vmem:[#allocation5 + $0x3f8] sm:$0xff]
        %v431 = vld [vmem:[#allocation5 + $0x400] sm:$0xff]
        %v432 = vld [vmem:[#allocation5 + $0x408] sm:$0xff]
        %v433 = vld [vmem:[#allocation5 + $0x410] sm:$0xff]
        %v434 = vld [vmem:[#allocation5 + $0x418] sm:$0xff]
        %v435 = vld [vmem:[#allocation5 + $0x420] sm:$0xff]
        %v436 = vld [vmem:[#allocation5 + $0x428] sm:$0xff]
        %v437 = vld [vmem:[#allocation5 + $0x430] sm:$0xff]
        %v438 = vld [vmem:[#allocation5 + $0x438] sm:$0xff]
        %v439 = vld [vmem:[#allocation5 + $0x440] sm:$0xff]
        %v440 = vld [vmem:[#allocation5 + $0x448] sm:$0xff]
        %v441 = vld [vmem:[#allocation5 + $0x450] sm:$0xff]
        %v442 = vld [vmem:[#allocation5 + $0x458] sm:$0xff]
        %v443 = vld [vmem:[#allocation5 + $0x460] sm:$0xff]
        %v444 = vld [vmem:[#allocation5 + $0x468] sm:$0xff]
        %v445 = vld [vmem:[#allocation5 + $0x470] sm:$0xff]
        %v446 = vld [vmem:[#allocation5 + $0x478] sm:$0xff]
        %v447 = vld [vmem:[#allocation5 + $0x480] sm:$0xff]
        %v448 = vld [vmem:[#allocation5 + $0x488] sm:$0xff]
        %v449 = vld [vmem:[#allocation5 + $0x490] sm:$0xff]
        %v450 = vld [vmem:[#allocation5 + $0x498] sm:$0xff]
        %v451 = vld [vmem:[#allocation5 + $0x4a0] sm:$0xff]
        %v452 = vld [vmem:[#allocation5 + $0x4a8] sm:$0xff]
        %v453 = vld [vmem:[#allocation5 + $0x4b0] sm:$0xff]
        %v454 = vld [vmem:[#allocation5 + $0x4b8] sm:$0xff]
        %v455 = vld [vmem:[#allocation5 + $0x4c0] sm:$0xff]
        %v456 = vld [vmem:[#allocation5 + $0x4c8] sm:$0xff]
        %v457 = vld [vmem:[#allocation5 + $0x4d0] sm:$0xff]
        %v458 = vld [vmem:[#allocation5 + $0x4d8] sm:$0xff]
        %v459 = vld [vmem:[#allocation5 + $0x4e0] sm:$0xff]
        %v460 = vld [vmem:[#allocation5 + $0x4e8] sm:$0xff]
        %v461 = vld [vmem:[#allocation5 + $0x4f0] sm:$0xff]
        %v462 = vld [vmem:[#allocation5 + $0x4f8] sm:$0xff]
        %v463 = vld [vmem:[#allocation5 + $0x500] sm:$0xff]
        %v464 = vld [vmem:[#allocation5 + $0x508] sm:$0xff]
        %v465 = vld [vmem:[#allocation5 + $0x510] sm:$0xff]
        %v466 = vld [vmem:[#allocation5 + $0x518] sm:$0xff]
        %v467 = vld [vmem:[#allocation5 + $0x520] sm:$0xff]
        %v468 = vld [vmem:[#allocation5 + $0x528] sm:$0xff]
        %v469 = vld [vmem:[#allocation5 + $0x530] sm:$0xff]
        %v470 = vld [vmem:[#allocation5 + $0x538] sm:$0xff]
        %v471 = vld [vmem:[#allocation5 + $0x540] sm:$0xff]
        %v472 = vld [vmem:[#allocation5 + $0x548] sm:$0xff]
        %v473 = vld [vmem:[#allocation5 + $0x550] sm:$0xff]
        %v474 = vld [vmem:[#allocation5 + $0x558] sm:$0xff]
        %v475 = vld [vmem:[#allocation5 + $0x560] sm:$0xff]
        %v476 = vld [vmem:[#allocation5 + $0x568] sm:$0xff]
        %v477 = vld [vmem:[#allocation5 + $0x570] sm:$0xff]
        %v478 = vld [vmem:[#allocation5 + $0x578] sm:$0xff]
        %v479 = vld [vmem:[#allocation5 + $0x580] sm:$0xff]
        %v480 = vld [vmem:[#allocation5 + $0x588] sm:$0xff]
        %v481 = vld [vmem:[#allocation5 + $0x590] sm:$0xff]
        %v482 = vld [vmem:[#allocation5 + $0x598] sm:$0xff]
        %v483 = vld [vmem:[#allocation5 + $0x5a0] sm:$0xff]
        %v484 = vld [vmem:[#allocation5 + $0x5a8] sm:$0xff]
        %v485 = vld [vmem:[#allocation5 + $0x5b0] sm:$0xff]
        %v486 = vld [vmem:[#allocation5 + $0x5b8] sm:$0xff]
        %v487 = vld [vmem:[#allocation5 + $0x5c0] sm:$0xff]
        %v488 = vld [vmem:[#allocation5 + $0x5c8] sm:$0xff]
        %v489 = vld [vmem:[#allocation5 + $0x5d0] sm:$0xff]
        %v490 = vld [vmem:[#allocation5 + $0x5d8] sm:$0xff]
        %v491 = vld [vmem:[#allocation5 + $0x5e0] sm:$0xff]
        %v492 = vld [vmem:[#allocation5 + $0x5e8] sm:$0xff]
        %v493 = vld [vmem:[#allocation5 + $0x5f0] sm:$0xff]
        %v494 = vld [vmem:[#allocation5 + $0x5f8] sm:$0xff]
        %v495 = vld [vmem:[#allocation5 + $0x600] sm:$0xff]
        %v496 = vld [vmem:[#allocation5 + $0x608] sm:$0xff]
        %v497 = vld [vmem:[#allocation5 + $0x610] sm:$0xff]
        %v498 = vld [vmem:[#allocation5 + $0x618] sm:$0xff]
        %v499 = vld [vmem:[#allocation5 + $0x620] sm:$0xff]
        %v500 = vld [vmem:[#allocation5 + $0x628] sm:$0xff]
        %v501 = vld [vmem:[#allocation5 + $0x630] sm:$0xff]
        %v502 = vld [vmem:[#allocation5 + $0x638] sm:$0xff]
        %v503 = vld [vmem:[#allocation5 + $0x640] sm:$0xff]
        %v504 = vld [vmem:[#allocation5 + $0x648] sm:$0xff]
        %v505 = vld [vmem:[#allocation5 + $0x650] sm:$0xff]
        %v506 = vld [vmem:[#allocation5 + $0x658] sm:$0xff]
        %v507 = vld [vmem:[#allocation5 + $0x660] sm:$0xff]
        %v508 = vld [vmem:[#allocation5 + $0x668] sm:$0xff]
        %v509 = vld [vmem:[#allocation5 + $0x670] sm:$0xff]
        %v510 = vld [vmem:[#allocation5 + $0x678] sm:$0xff]
        %v511 = vld [vmem:[#allocation5 + $0x680] sm:$0xff]
        %v512 = vld [vmem:[#allocation5 + $0x688] sm:$0xff]
        %v513 = vld [vmem:[#allocation5 + $0x690] sm:$0xff]
        %v514 = vld [vmem:[#allocation5 + $0x698] sm:$0xff]
        %v515 = vld [vmem:[#allocation5 + $0x6a0] sm:$0xff]
        %v516 = vld [vmem:[#allocation5 + $0x6a8] sm:$0xff]
        %v517 = vld [vmem:[#allocation5 + $0x6b0] sm:$0xff]
        %v518 = vld [vmem:[#allocation5 + $0x6b8] sm:$0xff]
        %v519 = vld [vmem:[#allocation5 + $0x6c0] sm:$0xff]
        %v520 = vld [vmem:[#allocation5 + $0x6c8] sm:$0xff]
        %v521 = vld [vmem:[#allocation5 + $0x6d0] sm:$0xff]
        %v522 = vld [vmem:[#allocation5 + $0x6d8] sm:$0xff]
        %v523 = vld [vmem:[#allocation5 + $0x6e0] sm:$0xff]
        %v524 = vld [vmem:[#allocation5 + $0x6e8] sm:$0xff]
        %v525 = vld [vmem:[#allocation5 + $0x6f0] sm:$0xff]
        %v526 = vld [vmem:[#allocation5 + $0x6f8] sm:$0xff]
        %v527 = vld [vmem:[#allocation5 + $0x700] sm:$0xff]
        %v528 = vld [vmem:[#allocation5 + $0x708] sm:$0xff]
        %v529 = vld [vmem:[#allocation5 + $0x710] sm:$0xff]
        %v530 = vld [vmem:[#allocation5 + $0x718] sm:$0xff]
        %v531 = vld [vmem:[#allocation5 + $0x720] sm:$0xff]
        %v532 = vld [vmem:[#allocation5 + $0x728] sm:$0xff]
        %v533 = vld [vmem:[#allocation5 + $0x730] sm:$0xff]
        %v534 = vld [vmem:[#allocation5 + $0x738] sm:$0xff]
        %v535 = vld [vmem:[#allocation5 + $0x740] sm:$0xff]
        %v536 = vld [vmem:[#allocation5 + $0x748] sm:$0xff]
        %v537 = vld [vmem:[#allocation5 + $0x750] sm:$0xff]
        %v538 = vld [vmem:[#allocation5 + $0x758] sm:$0xff]
        %v539 = vld [vmem:[#allocation5 + $0x760] sm:$0xff]
        %v540 = vld [vmem:[#allocation5 + $0x768] sm:$0xff]
        %v541 = vld [vmem:[#allocation5 + $0x770] sm:$0xff]
        %v542 = vld [vmem:[#allocation5 + $0x778] sm:$0xff]
        %v543 = vld [vmem:[#allocation5 + $0x780] sm:$0xff]
        %v544 = vld [vmem:[#allocation5 + $0x788] sm:$0xff]
        %v545 = vld [vmem:[#allocation5 + $0x790] sm:$0xff]
        %v546 = vld [vmem:[#allocation5 + $0x798] sm:$0xff]
        %v547 = vld [vmem:[#allocation5 + $0x7a0] sm:$0xff]
        %v548 = vld [vmem:[#allocation5 + $0x7a8] sm:$0xff]
        %v549 = vld [vmem:[#allocation5 + $0x7b0] sm:$0xff]
        %v550 = vld [vmem:[#allocation5 + $0x7b8] sm:$0xff]
        %v551 = vld [vmem:[#allocation5 + $0x7c0] sm:$0xff]
        %v552 = vld [vmem:[#allocation5 + $0x7c8] sm:$0xff]
        %v553 = vld [vmem:[#allocation5 + $0x7d0] sm:$0xff]
        %v554 = vld [vmem:[#allocation5 + $0x7d8] sm:$0xff]
        %v555 = vld [vmem:[#allocation5 + $0x7e0] sm:$0xff]
        %v556 = vld [vmem:[#allocation5 + $0x7e8] sm:$0xff]
        %v557 = vld [vmem:[#allocation5 + $0x7f0] sm:$0xff]
        %v558 = vld [vmem:[#allocation5 + $0x7f8] sm:$0xff]
        %v559 = vld [vmem:[#allocation7] sm:$0xff]
        %v560 = vld [vmem:[#allocation7 + $0x8] sm:$0xff]
        %v563 = vlaneseq
        %v564 = vshrl.u32 %v563, 7
        %v565 = vsub.s32 0, %v564
        %v566 = vrot.slane %v559, %v565
        %v567 = vlaneseq
        %v568 = vshrl.u32 %v567, 7
        %v569 = vsub.s32 1, %v568
        %v570 = vrot.slane %v559, %v569
        %v571 = vlaneseq
        %v572 = vshrl.u32 %v571, 7
        %v573 = vsub.s32 2, %v572
        %v574 = vrot.slane %v559, %v573
        %v575 = vlaneseq
        %v576 = vshrl.u32 %v575, 7
        %v577 = vsub.s32 3, %v576
        %v578 = vrot.slane %v559, %v577
        %v579 = vlaneseq
        %v580 = vshrl.u32 %v579, 7
        %v581 = vsub.s32 4, %v580
        %v582 = vrot.slane %v559, %v581
        %v583 = vlaneseq
        %v584 = vshrl.u32 %v583, 7
        %v585 = vsub.s32 5, %v584
        %v586 = vrot.slane %v559, %v585
        %v587 = vlaneseq
        %v588 = vshrl.u32 %v587, 7
        %v589 = vsub.s32 6, %v588
        %v590 = vrot.slane %v559, %v589
        %v591 = vlaneseq
        %v592 = vshrl.u32 %v591, 7
        %v593 = vsub.s32 7, %v592
        %v594 = vrot.slane %v559, %v593
        %v595 = vlaneseq
        %v596 = vshrl.u32 %v595, 7
        %v597 = vsub.s32 0, %v596
        %v598 = vrot.slane %v560, %v597
        %v599 = vlaneseq
        %v600 = vshrl.u32 %v599, 7
        %v601 = vsub.s32 1, %v600
        %v602 = vrot.slane %v560, %v601
        %v603 = vlaneseq
        %v604 = vshrl.u32 %v603, 7
        %v605 = vsub.s32 2, %v604
        %v606 = vrot.slane %v560, %v605
        %v607 = vlaneseq
        %v608 = vshrl.u32 %v607, 7
        %v609 = vsub.s32 3, %v608
        %v610 = vrot.slane %v560, %v609
        %v611 = vlaneseq
        %v612 = vshrl.u32 %v611, 7
        %v613 = vsub.s32 4, %v612
        %v614 = vrot.slane %v560, %v613
        %v615 = vlaneseq
        %v616 = vshrl.u32 %v615, 7
        %v617 = vsub.s32 5, %v616
        %v618 = vrot.slane %v560, %v617
        %v619 = vlaneseq
        %v620 = vshrl.u32 %v619, 7
        %v621 = vsub.s32 6, %v620
        %v622 = vrot.slane %v560, %v621
        %v623 = vlaneseq
        %v624 = vshrl.u32 %v623, 7
        %v625 = vsub.s32 7, %v624
        %v626 = vrot.slane %v560, %v625
        %643 = vmatprep.subr.mxu0 %v304
        %644 = vmatpush1.msra.mxu0 %v303
        %645 = vmatprep.subr.mxu0 %v320
        %646 = vmatpush1.msra.mxu0 %v319
        %647 = vmatprep.subr.mxu0 %v336
        %648 = vmatpush1.msra.mxu0 %v335
        %649 = vmatprep.subr.mxu0 %v352
        %650 = vmatpush1.msra.mxu0 %v351
        %651 = vmatprep.subr.mxu0 %v368
        %652 = vmatpush1.msra.mxu0 %v367
        %653 = vmatprep.subr.mxu0 %v384
        %654 = vmatpush1.msra.mxu0 %v383
        %655 = vmatprep.subr.mxu0 %v400
        %656 = vmatpush1.msra.mxu0 %v399
        %657 = vmatprep.subr.mxu0 %v416
        %658 = vmatpush1.msra.mxu0 %v415
        %659 = vmatprep.subr.mxu0 %v432
        %660 = vmatpush1.msra.mxu0 %v431
        %661 = vmatprep.subr.mxu0 %v448
        %662 = vmatpush1.msra.mxu0 %v447
        %663 = vmatprep.subr.mxu0 %v464
        %664 = vmatpush1.msra.mxu0 %v463
        %665 = vmatprep.subr.mxu0 %v480
        %666 = vmatpush1.msra.mxu0 %v479
        %667 = vmatprep.subr.mxu0 %v496
        %668 = vmatpush1.msra.mxu0 %v495
        %669 = vmatprep.subr.mxu0 %v512
        %670 = vmatpush1.msra.mxu0 %v511
        %671 = vmatprep.subr.mxu0 %v528
        %672 = vmatpush1.msra.mxu0 %v527
        %673 = vmatprep.subr.mxu0 %v544
        %674 = vmatpush1.msra.mxu0 %v543
        %675 = vmatprep.subr.mxu0 0.0
        %676 = vmatpush1.msra.mxu0 0.0
        %677 = vmatprep.subr.mxu0 0.0
        %678 = vmatpush1.msra.mxu0 0.0
        %679 = vmatprep.subr.mxu0 0.0
        %680 = vmatpush1.msra.mxu0 0.0
        %681 = vmatprep.subr.mxu0 0.0
        %682 = vmatpush1.msra.mxu0 0.0
        %683 = vmatprep.subr.mxu0 0.0
        %684 = vmatpush1.msra.mxu0 0.0
        %685 = vmatprep.subr.mxu0 0.0
        %686 = vmatpush1.msra.mxu0 0.0
        %687 = vmatprep.subr.mxu0 0.0
        %688 = vmatpush1.msra.mxu0 0.0
        %689 = vmatprep.subr.mxu0 0.0
        %690 = vmatpush1.msra.mxu0 0.0
        %691 = vmatprep.subr.mxu0 0.0
        %692 = vmatpush1.msra.mxu0 0.0
        %693 = vmatprep.subr.mxu0 0.0
        %694 = vmatpush1.msra.mxu0 0.0
        %695 = vmatprep.subr.mxu0 0.0
        %696 = vmatpush1.msra.mxu0 0.0
        %697 = vmatprep.subr.mxu0 0.0
        %698 = vmatpush1.msra.mxu0 0.0
        %699 = vmatprep.subr.mxu0 0.0
        %700 = vmatpush1.msra.mxu0 0.0
        %701 = vmatprep.subr.mxu0 0.0
        %702 = vmatpush1.msra.mxu0 0.0
        %703 = vmatprep.subr.mxu0 0.0
        %704 = vmatpush1.msra.mxu0 0.0
        %705 = vmatprep.subr.mxu0 0.0
        %706 = vmatpush1.msra.mxu0 0.0
        %707 = vmatprep.mubr.f32.mxu0 0.0
        %708 = vmatmul.mubr.f32.gmra.mrb[0].mxu0 %v287
        %v709 = vpop.f32.mrb[0].mxu0
        %v710 = vadd.f32 %v566, %v709
        %v711 = vpop.f32.mrb[0].mxu0
        %v712 = vadd.f32 %v570, %v711
        %713 = vmatprep.mubr.f32.mxu0 0.0
        %714 = vmatmul.mubr.f32.gmra.mrb[0].mxu0 %v288
        %v715 = vpop.f32.mrb[0].mxu0
        %v716 = vadd.f32 %v566, %v715
        %v717 = vpop.f32.mrb[0].mxu0
        %v718 = vadd.f32 %v570, %v717
        %719 = vmatprep.mubr.f32.mxu0 0.0
        %720 = vmatmul.mubr.f32.gmra.mrb[0].mxu0 %v289
        %v721 = vpop.f32.mrb[0].mxu0
        %v722 = vadd.f32 %v566, %v721
        %v723 = vpop.f32.mrb[0].mxu0
        %v724 = vadd.f32 %v570, %v723
        %725 = vmatprep.mubr.f32.mxu0 0.0
        %726 = vmatmul.mubr.f32.gmra.mrb[0].mxu0 %v290
        %v727 = vpop.f32.mrb[0].mxu0
        %v728 = vadd.f32 %v566, %v727
        %v729 = vpop.f32.mrb[0].mxu0
        %v730 = vadd.f32 %v570, %v729
        %731 = vmatprep.mubr.f32.mxu0 0.0
        %732 = vmatmul.mubr.f32.gmra.mrb[0].mxu0 %v291
        %v733 = vpop.f32.mrb[0].mxu0
        %v734 = vadd.f32 %v566, %v733
        %v735 = vpop.f32.mrb[0].mxu0
        %v736 = vadd.f32 %v570, %v735
        %737 = vmatprep.mubr.f32.mxu0 0.0
        %738 = vmatmul.mubr.f32.gmra.mrb[0].mxu0 %v292
        %v739 = vpop.f32.mrb[0].mxu0
        %v740 = vadd.f32 %v566, %v739
        %v741 = vpop.f32.mrb[0].mxu0
        %v742 = vadd.f32 %v570, %v741
        %743 = vmatprep.mubr.f32.mxu0 0.0
        %744 = vmatmul.mubr.f32.gmra.mrb[0].mxu0 %v293
        %v745 = vpop.f32.mrb[0].mxu0
        %v746 = vadd.f32 %v566, %v745
        %v747 = vpop.f32.mrb[0].mxu0
        %v748 = vadd.f32 %v570, %v747
        %749 = vmatprep.mubr.f32.mxu0 0.0
        %750 = vmatmul.mubr.f32.gmra.mrb[0].mxu0 %v294
        %v751 = vpop.f32.mrb[0].mxu0
        %v752 = vadd.f32 %v566, %v751
        %v753 = vpop.f32.mrb[0].mxu0
        %v754 = vadd.f32 %v570, %v753
        %755 = vmatprep.mubr.f32.mxu0 0.0
        %756 = vmatmul.mubr.f32.gmra.mrb[0].mxu0 %v295
        %v757 = vpop.f32.mrb[0].mxu0
        %v758 = vadd.f32 %v566, %v757
        %v759 = vpop.f32.mrb[0].mxu0
        %v760 = vadd.f32 %v570, %v759
        %761 = vmatprep.mubr.f32.mxu0 0.0
        %762 = vmatmul.mubr.f32.gmra.mrb[0].mxu0 %v296
        %v763 = vpop.f32.mrb[0].mxu0
        %v764 = vadd.f32 %v566, %v763
        %v765 = vpop.f32.mrb[0].mxu0
        %v766 = vadd.f32 %v570, %v765
        %767 = vmatprep.mubr.f32.mxu0 0.0
        %768 = vmatmul.mubr.f32.gmra.mrb[0].mxu0 %v297
        %v769 = vpop.f32.mrb[0].mxu0
        %v770 = vadd.f32 %v566, %v769
        %v771 = vpop.f32.mrb[0].mxu0
        %v772 = vadd.f32 %v570, %v771
        %773 = vmatprep.mubr.f32.mxu0 0.0
        %774 = vmatmul.mubr.f32.gmra.mrb[0].mxu0 %v298
        %v775 = vpop.f32.mrb[0].mxu0
        %v776 = vadd.f32 %v566, %v775
        %v777 = vpop.f32.mrb[0].mxu0
        %v778 = vadd.f32 %v570, %v777
        %779 = vmatprep.mubr.f32.mxu0 0.0
        %780 = vmatmul.mubr.f32.gmra.mrb[0].mxu0 %v299
        %v781 = vpop.f32.mrb[0].mxu0
        %v782 = vadd.f32 %v566, %v781
        %v783 = vpop.f32.mrb[0].mxu0
        %v784 = vadd.f32 %v570, %v783
        %785 = vmatprep.mubr.f32.mxu0 0.0
        %786 = vmatmul.mubr.f32.gmra.mrb[0].mxu0 %v300
        %v787 = vpop.f32.mrb[0].mxu0
        %v788 = vadd.f32 %v566, %v787
        %v789 = vpop.f32.mrb[0].mxu0
        %v790 = vadd.f32 %v570, %v789
        %791 = vmatprep.mubr.f32.mxu0 0.0
        %792 = vmatmul.mubr.f32.gmra.mrb[0].mxu0 %v301
        %v793 = vpop.f32.mrb[0].mxu0
        %v794 = vadd.f32 %v566, %v793
        %v795 = vpop.f32.mrb[0].mxu0
        %v796 = vadd.f32 %v570, %v795
        %797 = vmatprep.mubr.f32.mxu0 0.0
        %798 = vmatmul.mubr.f32.gmra.mrb[0].mxu0 %v302
        %v799 = vpop.f32.mrb[0].mxu0
        %v800 = vadd.f32 %v566, %v799
        %v801 = vpop.f32.mrb[0].mxu0
        %v802 = vadd.f32 %v570, %v801
        %803 = vdwg.mxu0
        %804 = vmatprep.subr.mxu0 %v306
        %805 = vmatpush1.msra.mxu0 %v305
        %806 = vmatprep.subr.mxu0 %v322
        %807 = vmatpush1.msra.mxu0 %v321
        %808 = vmatprep.subr.mxu0 %v338
        %809 = vmatpush1.msra.mxu0 %v337
        %810 = vmatprep.subr.mxu0 %v354
        %811 = vmatpush1.msra.mxu0 %v353
        %812 = vmatprep.subr.mxu0 %v370
        %813 = vmatpush1.msra.mxu0 %v369
        %814 = vmatprep.subr.mxu0 %v386
        %815 = vmatpush1.msra.mxu0 %v385
        %816 = vmatprep.subr.mxu0 %v402
        %817 = vmatpush1.msra.mxu0 %v401
        %818 = vmatprep.subr.mxu0 %v418
        %819 = vmatpush1.msra.mxu0 %v417
        %820 = vmatprep.subr.mxu0 %v434
        %821 = vmatpush1.msra.mxu0 %v433
        %822 = vmatprep.subr.mxu0 %v450
        %823 = vmatpush1.msra.mxu0 %v449
        %824 = vmatprep.subr.mxu0 %v466
        %825 = vmatpush1.msra.mxu0 %v465
        %826 = vmatprep.subr.mxu0 %v482
        %827 = vmatpush1.msra.mxu0 %v481
        %828 = vmatprep.subr.mxu0 %v498
        %829 = vmatpush1.msra.mxu0 %v497
        %830 = vmatprep.subr.mxu0 %v514
        %831 = vmatpush1.msra.mxu0 %v513
        %832 = vmatprep.subr.mxu0 %v530
        %833 = vmatpush1.msra.mxu0 %v529
        %834 = vmatprep.subr.mxu0 %v546
        %835 = vmatpush1.msra.mxu0 %v545
        %836 = vmatprep.subr.mxu0 0.0
        %837 = vmatpush1.msra.mxu0 0.0
        %838 = vmatprep.subr.mxu0 0.0
        %839 = vmatpush1.msra.mxu0 0.0
        %840 = vmatprep.subr.mxu0 0.0
        %841 = vmatpush1.msra.mxu0 0.0
        %842 = vmatprep.subr.mxu0 0.0
        %843 = vmatpush1.msra.mxu0 0.0
        %844 = vmatprep.subr.mxu0 0.0
        %845 = vmatpush1.msra.mxu0 0.0
        %846 = vmatprep.subr.mxu0 0.0
        %847 = vmatpush1.msra.mxu0 0.0
        %848 = vmatprep.subr.mxu0 0.0
        %849 = vmatpush1.msra.mxu0 0.0
        %850 = vmatprep.subr.mxu0 0.0
        %851 = vmatpush1.msra.mxu0 0.0
        %852 = vmatprep.subr.mxu0 0.0
        %853 = vmatpush1.msra.mxu0 0.0
        %854 = vmatprep.subr.mxu0 0.0
        %855 = vmatpush1.msra.mxu0 0.0
        %856 = vmatprep.subr.mxu0 0.0
        %857 = vmatpush1.msra.mxu0 0.0
        %858 = vmatprep.subr.mxu0 0.0
        %859 = vmatpush1.msra.mxu0 0.0
        %860 = vmatprep.subr.mxu0 0.0
        %861 = vmatpush1.msra.mxu0 0.0
        %862 = vmatprep.subr.mxu0 0.0
        %863 = vmatpush1.msra.mxu0 0.0
        %864 = vmatprep.subr.mxu0 0.0
        %865 = vmatpush1.msra.mxu0 0.0
        %866 = vmatprep.subr.mxu0 0.0
        %867 = vmatpush1.msra.mxu0 0.0
        %868 = vmatprep.mubr.f32.mxu0 0.0
        %869 = vmatmul.mubr.f32.gmra.mrb[0].mxu0 %v287
        %v870 = vpop.f32.mrb[0].mxu0
        %v871 = vadd.f32 %v574, %v870
        %v872 = vpop.f32.mrb[0].mxu0
        %v873 = vadd.f32 %v578, %v872
        %874 = vmatprep.mubr.f32.mxu0 0.0
        %875 = vmatmul.mubr.f32.gmra.mrb[0].mxu0 %v288
        %v876 = vpop.f32.mrb[0].mxu0
        %v877 = vadd.f32 %v574, %v876
        %v878 = vpop.f32.mrb[0].mxu0
        %v879 = vadd.f32 %v578, %v878
        %880 = vmatprep.mubr.f32.mxu0 0.0
        %881 = vmatmul.mubr.f32.gmra.mrb[0].mxu0 %v289
        %v882 = vpop.f32.mrb[0].mxu0
        %v883 = vadd.f32 %v574, %v882
        %v884 = vpop.f32.mrb[0].mxu0
        %v885 = vadd.f32 %v578, %v884
        %886 = vmatprep.mubr.f32.mxu0 0.0
        %887 = vmatmul.mubr.f32.gmra.mrb[0].mxu0 %v290
        %v888 = vpop.f32.mrb[0].mxu0
        %v889 = vadd.f32 %v574, %v888
        %v890 = vpop.f32.mrb[0].mxu0
        %v891 = vadd.f32 %v578, %v890
        %892 = vmatprep.mubr.f32.mxu0 0.0
        %893 = vmatmul.mubr.f32.gmra.mrb[0].mxu0 %v291
        %v894 = vpop.f32.mrb[0].mxu0
        %v895 = vadd.f32 %v574, %v894
        %v896 = vpop.f32.mrb[0].mxu0
        %v897 = vadd.f32 %v578, %v896
        %898 = vmatprep.mubr.f32.mxu0 0.0
        %899 = vmatmul.mubr.f32.gmra.mrb[0].mxu0 %v292
        %v900 = vpop.f32.mrb[0].mxu0
        %v901 = vadd.f32 %v574, %v900
        %v902 = vpop.f32.mrb[0].mxu0
        %v903 = vadd.f32 %v578, %v902
        %904 = vmatprep.mubr.f32.mxu0 0.0
        %905 = vmatmul.mubr.f32.gmra.mrb[0].mxu0 %v293
        %v906 = vpop.f32.mrb[0].mxu0
        %v907 = vadd.f32 %v574, %v906
        %v908 = vpop.f32.mrb[0].mxu0
        %v909 = vadd.f32 %v578, %v908
        %910 = vmatprep.mubr.f32.mxu0 0.0
        %911 = vmatmul.mubr.f32.gmra.mrb[0].mxu0 %v294
        %v912 = vpop.f32.mrb[0].mxu0
        %v913 = vadd.f32 %v574, %v912
        %v914 = vpop.f32.mrb[0].mxu0
        %v915 = vadd.f32 %v578, %v914
        %916 = vmatprep.mubr.f32.mxu0 0.0
        %917 = vmatmul.mubr.f32.gmra.mrb[0].mxu0 %v295
        %v918 = vpop.f32.mrb[0].mxu0
        %v919 = vadd.f32 %v574, %v918
        %v920 = vpop.f32.mrb[0].mxu0
        %v921 = vadd.f32 %v578, %v920
        %922 = vmatprep.mubr.f32.mxu0 0.0
        %923 = vmatmul.mubr.f32.gmra.mrb[0].mxu0 %v296
        %v924 = vpop.f32.mrb[0].mxu0
        %v925 = vadd.f32 %v574, %v924
        %v926 = vpop.f32.mrb[0].mxu0
        %v927 = vadd.f32 %v578, %v926
        %928 = vmatprep.mubr.f32.mxu0 0.0
        %929 = vmatmul.mubr.f32.gmra.mrb[0].mxu0 %v297
        %v930 = vpop.f32.mrb[0].mxu0
        %v931 = vadd.f32 %v574, %v930
        %v932 = vpop.f32.mrb[0].mxu0
        %v933 = vadd.f32 %v578, %v932
        %934 = vmatprep.mubr.f32.mxu0 0.0
        %935 = vmatmul.mubr.f32.gmra.mrb[0].mxu0 %v298
        %v936 = vpop.f32.mrb[0].mxu0
        %v937 = vadd.f32 %v574, %v936
        %v938 = vpop.f32.mrb[0].mxu0
        %v939 = vadd.f32 %v578, %v938
        %940 = vmatprep.mubr.f32.mxu0 0.0
        %941 = vmatmul.mubr.f32.gmra.mrb[0].mxu0 %v299
        %v942 = vpop.f32.mrb[0].mxu0
        %v943 = vadd.f32 %v574, %v942
        %v944 = vpop.f32.mrb[0].mxu0
        %v945 = vadd.f32 %v578, %v944
        %946 = vmatprep.mubr.f32.mxu0 0.0
        %947 = vmatmul.mubr.f32.gmra.mrb[0].mxu0 %v300
        %v948 = vpop.f32.mrb[0].mxu0
        %v949 = vadd.f32 %v574, %v948
        %v950 = vpop.f32.mrb[0].mxu0
        %v951 = vadd.f32 %v578, %v950
        %952 = vmatprep.mubr.f32.mxu0 0.0
        %953 = vmatmul.mubr.f32.gmra.mrb[0].mxu0 %v301
        %v954 = vpop.f32.mrb[0].mxu0
        %v955 = vadd.f32 %v574, %v954
        %v956 = vpop.f32.mrb[0].mxu0
        %v957 = vadd.f32 %v578, %v956
        %958 = vmatprep.mubr.f32.mxu0 0.0
        %959 = vmatmul.mubr.f32.gmra.mrb[0].mxu0 %v302
        %v960 = vpop.f32.mrb[0].mxu0
        %v961 = vadd.f32 %v574, %v960
        %v962 = vpop.f32.mrb[0].mxu0
        %v963 = vadd.f32 %v578, %v962
        %964 = vdwg.mxu0
        %965 = vmatprep.subr.mxu0 %v308
        %966 = vmatpush1.msra.mxu0 %v307
        %967 = vmatprep.subr.mxu0 %v324
        %968 = vmatpush1.msra.mxu0 %v323
        %969 = vmatprep.subr.mxu0 %v340
        %970 = vmatpush1.msra.mxu0 %v339
        %971 = vmatprep.subr.mxu0 %v356
        %972 = vmatpush1.msra.mxu0 %v355
        %973 = vmatprep.subr.mxu0 %v372
        %974 = vmatpush1.msra.mxu0 %v371
        %975 = vmatprep.subr.mxu0 %v388
        %976 = vmatpush1.msra.mxu0 %v387
        %977 = vmatprep.subr.mxu0 %v404
        %978 = vmatpush1.msra.mxu0 %v403
        %979 = vmatprep.subr.mxu0 %v420
        %980 = vmatpush1.msra.mxu0 %v419
        %981 = vmatprep.subr.mxu0 %v436
        %982 = vmatpush1.msra.mxu0 %v435
        %983 = vmatprep.subr.mxu0 %v452
        %984 = vmatpush1.msra.mxu0 %v451
        %985 = vmatprep.subr.mxu0 %v468
        %986 = vmatpush1.msra.mxu0 %v467
        %987 = vmatprep.subr.mxu0 %v484
        %988 = vmatpush1.msra.mxu0 %v483
        %989 = vmatprep.subr.mxu0 %v500
        %990 = vmatpush1.msra.mxu0 %v499
        %991 = vmatprep.subr.mxu0 %v516
        %992 = vmatpush1.msra.mxu0 %v515
        %993 = vmatprep.subr.mxu0 %v532
        %994 = vmatpush1.msra.mxu0 %v531
        %995 = vmatprep.subr.mxu0 %v548
        %996 = vmatpush1.msra.mxu0 %v547
        %997 = vmatprep.subr.mxu0 0.0
        %998 = vmatpush1.msra.mxu0 0.0
        %999 = vmatprep.subr.mxu0 0.0
        %1000 = vmatpush1.msra.mxu0 0.0
        %1001 = vmatprep.subr.mxu0 0.0
        %1002 = vmatpush1.msra.mxu0 0.0
        %1003 = vmatprep.subr.mxu0 0.0
        %1004 = vmatpush1.msra.mxu0 0.0
        %1005 = vmatprep.subr.mxu0 0.0
        %1006 = vmatpush1.msra.mxu0 0.0
        %1007 = vmatprep.subr.mxu0 0.0
        %1008 = vmatpush1.msra.mxu0 0.0
        %1009 = vmatprep.subr.mxu0 0.0
        %1010 = vmatpush1.msra.mxu0 0.0
        %1011 = vmatprep.subr.mxu0 0.0
        %1012 = vmatpush1.msra.mxu0 0.0
        %1013 = vmatprep.subr.mxu0 0.0
        %1014 = vmatpush1.msra.mxu0 0.0
        %1015 = vmatprep.subr.mxu0 0.0
        %1016 = vmatpush1.msra.mxu0 0.0
        %1017 = vmatprep.subr.mxu0 0.0
        %1018 = vmatpush1.msra.mxu0 0.0
        %1019 = vmatprep.subr.mxu0 0.0
        %1020 = vmatpush1.msra.mxu0 0.0
        %1021 = vmatprep.subr.mxu0 0.0
        %1022 = vmatpush1.msra.mxu0 0.0
        %1023 = vmatprep.subr.mxu0 0.0
        %1024 = vmatpush1.msra.mxu0 0.0
        %1025 = vmatprep.subr.mxu0 0.0
        %1026 = vmatpush1.msra.mxu0 0.0
        %1027 = vmatprep.subr.mxu0 0.0
        %1028 = vmatpush1.msra.mxu0 0.0
        %1029 = vmatprep.mubr.f32.mxu0 0.0
        %1030 = vmatmul.mubr.f32.gmra.mrb[0].mxu0 %v287
        %v1031 = vpop.f32.mrb[0].mxu0
        %v1032 = vadd.f32 %v582, %v1031
        %v1033 = vpop.f32.mrb[0].mxu0
        %v1034 = vadd.f32 %v586, %v1033
        %1035 = vmatprep.mubr.f32.mxu0 0.0
        %1036 = vmatmul.mubr.f32.gmra.mrb[0].mxu0 %v288
        %v1037 = vpop.f32.mrb[0].mxu0
        %v1038 = vadd.f32 %v582, %v1037
        %v1039 = vpop.f32.mrb[0].mxu0
        %v1040 = vadd.f32 %v586, %v1039
        %1041 = vmatprep.mubr.f32.mxu0 0.0
        %1042 = vmatmul.mubr.f32.gmra.mrb[0].mxu0 %v289
        %v1043 = vpop.f32.mrb[0].mxu0
        %v1044 = vadd.f32 %v582, %v1043
        %v1045 = vpop.f32.mrb[0].mxu0
        %v1046 = vadd.f32 %v586, %v1045
        %1047 = vmatprep.mubr.f32.mxu0 0.0
        %1048 = vmatmul.mubr.f32.gmra.mrb[0].mxu0 %v290
        %v1049 = vpop.f32.mrb[0].mxu0
        %v1050 = vadd.f32 %v582, %v1049
        %v1051 = vpop.f32.mrb[0].mxu0
        %v1052 = vadd.f32 %v586, %v1051
        %1053 = vmatprep.mubr.f32.mxu0 0.0
        %1054 = vmatmul.mubr.f32.gmra.mrb[0].mxu0 %v291
        %v1055 = vpop.f32.mrb[0].mxu0
        %v1056 = vadd.f32 %v582, %v1055
        %v1057 = vpop.f32.mrb[0].mxu0
        %v1058 = vadd.f32 %v586, %v1057
        %1059 = vmatprep.mubr.f32.mxu0 0.0
        %1060 = vmatmul.mubr.f32.gmra.mrb[0].mxu0 %v292
        %v1061 = vpop.f32.mrb[0].mxu0
        %v1062 = vadd.f32 %v582, %v1061
        %v1063 = vpop.f32.mrb[0].mxu0
        %v1064 = vadd.f32 %v586, %v1063
        %1065 = vmatprep.mubr.f32.mxu0 0.0
        %1066 = vmatmul.mubr.f32.gmra.mrb[0].mxu0 %v293
        %v1067 = vpop.f32.mrb[0].mxu0
        %v1068 = vadd.f32 %v582, %v1067
        %v1069 = vpop.f32.mrb[0].mxu0
        %v1070 = vadd.f32 %v586, %v1069
        %1071 = vmatprep.mubr.f32.mxu0 0.0
        %1072 = vmatmul.mubr.f32.gmra.mrb[0].mxu0 %v294
        %v1073 = vpop.f32.mrb[0].mxu0
        %v1074 = vadd.f32 %v582, %v1073
        %v1075 = vpop.f32.mrb[0].mxu0
        %v1076 = vadd.f32 %v586, %v1075
        %1077 = vmatprep.mubr.f32.mxu0 0.0
        %1078 = vmatmul.mubr.f32.gmra.mrb[0].mxu0 %v295
        %v1079 = vpop.f32.mrb[0].mxu0
        %v1080 = vadd.f32 %v582, %v1079
        %v1081 = vpop.f32.mrb[0].mxu0
        %v1082 = vadd.f32 %v586, %v1081
        %1083 = vmatprep.mubr.f32.mxu0 0.0
        %1084 = vmatmul.mubr.f32.gmra.mrb[0].mxu0 %v296
        %v1085 = vpop.f32.mrb[0].mxu0
        %v1086 = vadd.f32 %v582, %v1085
        %v1087 = vpop.f32.mrb[0].mxu0
        %v1088 = vadd.f32 %v586, %v1087
        %1089 = vmatprep.mubr.f32.mxu0 0.0
        %1090 = vmatmul.mubr.f32.gmra.mrb[0].mxu0 %v297
        %v1091 = vpop.f32.mrb[0].mxu0
        %v1092 = vadd.f32 %v582, %v1091
        %v1093 = vpop.f32.mrb[0].mxu0
        %v1094 = vadd.f32 %v586, %v1093
        %1095 = vmatprep.mubr.f32.mxu0 0.0
        %1096 = vmatmul.mubr.f32.gmra.mrb[0].mxu0 %v298
        %v1097 = vpop.f32.mrb[0].mxu0
        %v1098 = vadd.f32 %v582, %v1097
        %v1099 = vpop.f32.mrb[0].mxu0
        %v1100 = vadd.f32 %v586, %v1099
        %1101 = vmatprep.mubr.f32.mxu0 0.0
        %1102 = vmatmul.mubr.f32.gmra.mrb[0].mxu0 %v299
        %v1103 = vpop.f32.mrb[0].mxu0
        %v1104 = vadd.f32 %v582, %v1103
        %v1105 = vpop.f32.mrb[0].mxu0
        %v1106 = vadd.f32 %v586, %v1105
        %1107 = vmatprep.mubr.f32.mxu0 0.0
        %1108 = vmatmul.mubr.f32.gmra.mrb[0].mxu0 %v300
        %v1109 = vpop.f32.mrb[0].mxu0
        %v1110 = vadd.f32 %v582, %v1109
        %v1111 = vpop.f32.mrb[0].mxu0
        %v1112 = vadd.f32 %v586, %v1111
        %1113 = vmatprep.mubr.f32.mxu0 0.0
        %1114 = vmatmul.mubr.f32.gmra.mrb[0].mxu0 %v301
        %v1115 = vpop.f32.mrb[0].mxu0
        %v1116 = vadd.f32 %v582, %v1115
        %v1117 = vpop.f32.mrb[0].mxu0
        %v1118 = vadd.f32 %v586, %v1117
        %1119 = vmatprep.mubr.f32.mxu0 0.0
        %1120 = vmatmul.mubr.f32.gmra.mrb[0].mxu0 %v302
        %v1121 = vpop.f32.mrb[0].mxu0
        %v1122 = vadd.f32 %v582, %v1121
        %v1123 = vpop.f32.mrb[0].mxu0
        %v1124 = vadd.f32 %v586, %v1123
        %1125 = vdwg.mxu0
        %1126 = vmatprep.subr.mxu0 %v310
        %1127 = vmatpush1.msra.mxu0 %v309
        %1128 = vmatprep.subr.mxu0 %v326
        %1129 = vmatpush1.msra.mxu0 %v325
        %1130 = vmatprep.subr.mxu0 %v342
        %1131 = vmatpush1.msra.mxu0 %v341
        %1132 = vmatprep.subr.mxu0 %v358
        %1133 = vmatpush1.msra.mxu0 %v357
        %1134 = vmatprep.subr.mxu0 %v374
        %1135 = vmatpush1.msra.mxu0 %v373
        %1136 = vmatprep.subr.mxu0 %v390
        %1137 = vmatpush1.msra.mxu0 %v389
        %1138 = vmatprep.subr.mxu0 %v406
        %1139 = vmatpush1.msra.mxu0 %v405
        %1140 = vmatprep.subr.mxu0 %v422
        %1141 = vmatpush1.msra.mxu0 %v421
        %1142 = vmatprep.subr.mxu0 %v438
        %1143 = vmatpush1.msra.mxu0 %v437
        %1144 = vmatprep.subr.mxu0 %v454
        %1145 = vmatpush1.msra.mxu0 %v453
        %1146 = vmatprep.subr.mxu0 %v470
        %1147 = vmatpush1.msra.mxu0 %v469
        %1148 = vmatprep.subr.mxu0 %v486
        %1149 = vmatpush1.msra.mxu0 %v485
        %1150 = vmatprep.subr.mxu0 %v502
        %1151 = vmatpush1.msra.mxu0 %v501
        %1152 = vmatprep.subr.mxu0 %v518
        %1153 = vmatpush1.msra.mxu0 %v517
        %1154 = vmatprep.subr.mxu0 %v534
        %1155 = vmatpush1.msra.mxu0 %v533
        %1156 = vmatprep.subr.mxu0 %v550
        %1157 = vmatpush1.msra.mxu0 %v549
        %1158 = vmatprep.subr.mxu0 0.0
        %1159 = vmatpush1.msra.mxu0 0.0
        %1160 = vmatprep.subr.mxu0 0.0
        %1161 = vmatpush1.msra.mxu0 0.0
        %1162 = vmatprep.subr.mxu0 0.0
        %1163 = vmatpush1.msra.mxu0 0.0
        %1164 = vmatprep.subr.mxu0 0.0
        %1165 = vmatpush1.msra.mxu0 0.0
        %1166 = vmatprep.subr.mxu0 0.0
        %1167 = vmatpush1.msra.mxu0 0.0
        %1168 = vmatprep.subr.mxu0 0.0
        %1169 = vmatpush1.msra.mxu0 0.0
        %1170 = vmatprep.subr.mxu0 0.0
        %1171 = vmatpush1.msra.mxu0 0.0
        %1172 = vmatprep.subr.mxu0 0.0
        %1173 = vmatpush1.msra.mxu0 0.0
        %1174 = vmatprep.subr.mxu0 0.0
        %1175 = vmatpush1.msra.mxu0 0.0
        %1176 = vmatprep.subr.mxu0 0.0
        %1177 = vmatpush1.msra.mxu0 0.0
        %1178 = vmatprep.subr.mxu0 0.0
        %1179 = vmatpush1.msra.mxu0 0.0
        %1180 = vmatprep.subr.mxu0 0.0
        %1181 = vmatpush1.msra.mxu0 0.0
        %1182 = vmatprep.subr.mxu0 0.0
        %1183 = vmatpush1.msra.mxu0 0.0
        %1184 = vmatprep.subr.mxu0 0.0
        %1185 = vmatpush1.msra.mxu0 0.0
        %1186 = vmatprep.subr.mxu0 0.0
        %1187 = vmatpush1.msra.mxu0 0.0
        %1188 = vmatprep.subr.mxu0 0.0
        %1189 = vmatpush1.msra.mxu0 0.0
        %1190 = vmatprep.mubr.f32.mxu0 0.0
        %1191 = vmatmul.mubr.f32.gmra.mrb[0].mxu0 %v287
        %v1192 = vpop.f32.mrb[0].mxu0
        %v1193 = vadd.f32 %v590, %v1192
        %v1194 = vpop.f32.mrb[0].mxu0
        %v1195 = vadd.f32 %v594, %v1194
        %1196 = vmatprep.mubr.f32.mxu0 0.0
        %1197 = vmatmul.mubr.f32.gmra.mrb[0].mxu0 %v288
        %v1198 = vpop.f32.mrb[0].mxu0
        %v1199 = vadd.f32 %v590, %v1198
        %v1200 = vpop.f32.mrb[0].mxu0
        %v1201 = vadd.f32 %v594, %v1200
        %1202 = vmatprep.mubr.f32.mxu0 0.0
        %1203 = vmatmul.mubr.f32.gmra.mrb[0].mxu0 %v289
        %v1204 = vpop.f32.mrb[0].mxu0
        %v1205 = vadd.f32 %v590, %v1204
        %v1206 = vpop.f32.mrb[0].mxu0
        %v1207 = vadd.f32 %v594, %v1206
        %1208 = vmatprep.mubr.f32.mxu0 0.0
        %1209 = vmatmul.mubr.f32.gmra.mrb[0].mxu0 %v290
        %v1210 = vpop.f32.mrb[0].mxu0
        %v1211 = vadd.f32 %v590, %v1210
        %v1212 = vpop.f32.mrb[0].mxu0
        %v1213 = vadd.f32 %v594, %v1212
        %1214 = vmatprep.mubr.f32.mxu0 0.0
        %1215 = vmatmul.mubr.f32.gmra.mrb[0].mxu0 %v291
        %v1216 = vpop.f32.mrb[0].mxu0
        %v1217 = vadd.f32 %v590, %v1216
        %v1218 = vpop.f32.mrb[0].mxu0
        %v1219 = vadd.f32 %v594, %v1218
        %1220 = vmatprep.mubr.f32.mxu0 0.0
        %1221 = vmatmul.mubr.f32.gmra.mrb[0].mxu0 %v292
        %v1222 = vpop.f32.mrb[0].mxu0
        %v1223 = vadd.f32 %v590, %v1222
        %v1224 = vpop.f32.mrb[0].mxu0
        %v1225 = vadd.f32 %v594, %v1224
        %1226 = vmatprep.mubr.f32.mxu0 0.0
        %1227 = vmatmul.mubr.f32.gmra.mrb[0].mxu0 %v293
        %v1228 = vpop.f32.mrb[0].mxu0
        %v1229 = vadd.f32 %v590, %v1228
        %v1230 = vpop.f32.mrb[0].mxu0
        %v1231 = vadd.f32 %v594, %v1230
        %1232 = vmatprep.mubr.f32.mxu0 0.0
        %1233 = vmatmul.mubr.f32.gmra.mrb[0].mxu0 %v294
        %v1234 = vpop.f32.mrb[0].mxu0
        %v1235 = vadd.f32 %v590, %v1234
        %v1236 = vpop.f32.mrb[0].mxu0
        %v1237 = vadd.f32 %v594, %v1236
        %1238 = vmatprep.mubr.f32.mxu0 0.0
        %1239 = vmatmul.mubr.f32.gmra.mrb[0].mxu0 %v295
        %v1240 = vpop.f32.mrb[0].mxu0
        %v1241 = vadd.f32 %v590, %v1240
        %v1242 = vpop.f32.mrb[0].mxu0
        %v1243 = vadd.f32 %v594, %v1242
        %1244 = vmatprep.mubr.f32.mxu0 0.0
        %1245 = vmatmul.mubr.f32.gmra.mrb[0].mxu0 %v296
        %v1246 = vpop.f32.mrb[0].mxu0
        %v1247 = vadd.f32 %v590, %v1246
        %v1248 = vpop.f32.mrb[0].mxu0
        %v1249 = vadd.f32 %v594, %v1248
        %1250 = vmatprep.mubr.f32.mxu0 0.0
        %1251 = vmatmul.mubr.f32.gmra.mrb[0].mxu0 %v297
        %v1252 = vpop.f32.mrb[0].mxu0
        %v1253 = vadd.f32 %v590, %v1252
        %v1254 = vpop.f32.mrb[0].mxu0
        %v1255 = vadd.f32 %v594, %v1254
        %1256 = vmatprep.mubr.f32.mxu0 0.0
        %1257 = vmatmul.mubr.f32.gmra.mrb[0].mxu0 %v298
        %v1258 = vpop.f32.mrb[0].mxu0
        %v1259 = vadd.f32 %v590, %v1258
        %v1260 = vpop.f32.mrb[0].mxu0
        %v1261 = vadd.f32 %v594, %v1260
        %1262 = vmatprep.mubr.f32.mxu0 0.0
        %1263 = vmatmul.mubr.f32.gmra.mrb[0].mxu0 %v299
        %v1264 = vpop.f32.mrb[0].mxu0
        %v1265 = vadd.f32 %v590, %v1264
        %v1266 = vpop.f32.mrb[0].mxu0
        %v1267 = vadd.f32 %v594, %v1266
        %1268 = vmatprep.mubr.f32.mxu0 0.0
        %1269 = vmatmul.mubr.f32.gmra.mrb[0].mxu0 %v300
        %v1270 = vpop.f32.mrb[0].mxu0
        %v1271 = vadd.f32 %v590, %v1270
        %v1272 = vpop.f32.mrb[0].mxu0
        %v1273 = vadd.f32 %v594, %v1272
        %1274 = vmatprep.mubr.f32.mxu0 0.0
        %1275 = vmatmul.mubr.f32.gmra.mrb[0].mxu0 %v301
        %v1276 = vpop.f32.mrb[0].mxu0
        %v1277 = vadd.f32 %v590, %v1276
        %v1278 = vpop.f32.mrb[0].mxu0
        %v1279 = vadd.f32 %v594, %v1278
        %1280 = vmatprep.mubr.f32.mxu0 0.0
        %1281 = vmatmul.mubr.f32.gmra.mrb[0].mxu0 %v302
        %v1282 = vpop.f32.mrb[0].mxu0
        %v1283 = vadd.f32 %v590, %v1282
        %v1284 = vpop.f32.mrb[0].mxu0
        %v1285 = vadd.f32 %v594, %v1284
        %1286 = vdwg.mxu0
        %1287 = vmatprep.subr.mxu0 %v312
        %1288 = vmatpush1.msra.mxu0 %v311
        %1289 = vmatprep.subr.mxu0 %v328
        %1290 = vmatpush1.msra.mxu0 %v327
        %1291 = vmatprep.subr.mxu0 %v344
        %1292 = vmatpush1.msra.mxu0 %v343
        %1293 = vmatprep.subr.mxu0 %v360
        %1294 = vmatpush1.msra.mxu0 %v359
        %1295 = vmatprep.subr.mxu0 %v376
        %1296 = vmatpush1.msra.mxu0 %v375
        %1297 = vmatprep.subr.mxu0 %v392
        %1298 = vmatpush1.msra.mxu0 %v391
        %1299 = vmatprep.subr.mxu0 %v408
        %1300 = vmatpush1.msra.mxu0 %v407
        %1301 = vmatprep.subr.mxu0 %v424
        %1302 = vmatpush1.msra.mxu0 %v423
        %1303 = vmatprep.subr.mxu0 %v440
        %1304 = vmatpush1.msra.mxu0 %v439
        %1305 = vmatprep.subr.mxu0 %v456
        %1306 = vmatpush1.msra.mxu0 %v455
        %1307 = vmatprep.subr.mxu0 %v472
        %1308 = vmatpush1.msra.mxu0 %v471
        %1309 = vmatprep.subr.mxu0 %v488
        %1310 = vmatpush1.msra.mxu0 %v487
        %1311 = vmatprep.subr.mxu0 %v504
        %1312 = vmatpush1.msra.mxu0 %v503
        %1313 = vmatprep.subr.mxu0 %v520
        %1314 = vmatpush1.msra.mxu0 %v519
        %1315 = vmatprep.subr.mxu0 %v536
        %1316 = vmatpush1.msra.mxu0 %v535
        %1317 = vmatprep.subr.mxu0 %v552
        %1318 = vmatpush1.msra.mxu0 %v551
        %1319 = vmatprep.subr.mxu0 0.0
        %1320 = vmatpush1.msra.mxu0 0.0
        %1321 = vmatprep.subr.mxu0 0.0
        %1322 = vmatpush1.msra.mxu0 0.0
        %1323 = vmatprep.subr.mxu0 0.0
        %1324 = vmatpush1.msra.mxu0 0.0
        %1325 = vmatprep.subr.mxu0 0.0
        %1326 = vmatpush1.msra.mxu0 0.0
        %1327 = vmatprep.subr.mxu0 0.0
        %1328 = vmatpush1.msra.mxu0 0.0
        %1329 = vmatprep.subr.mxu0 0.0
        %1330 = vmatpush1.msra.mxu0 0.0
        %1331 = vmatprep.subr.mxu0 0.0
        %1332 = vmatpush1.msra.mxu0 0.0
        %1333 = vmatprep.subr.mxu0 0.0
        %1334 = vmatpush1.msra.mxu0 0.0
        %1335 = vmatprep.subr.mxu0 0.0
        %1336 = vmatpush1.msra.mxu0 0.0
        %1337 = vmatprep.subr.mxu0 0.0
        %1338 = vmatpush1.msra.mxu0 0.0
        %1339 = vmatprep.subr.mxu0 0.0
        %1340 = vmatpush1.msra.mxu0 0.0
        %1341 = vmatprep.subr.mxu0 0.0
        %1342 = vmatpush1.msra.mxu0 0.0
        %1343 = vmatprep.subr.mxu0 0.0
        %1344 = vmatpush1.msra.mxu0 0.0
        %1345 = vmatprep.subr.mxu0 0.0
        %1346 = vmatpush1.msra.mxu0 0.0
        %1347 = vmatprep.subr.mxu0 0.0
        %1348 = vmatpush1.msra.mxu0 0.0
        %1349 = vmatprep.subr.mxu0 0.0
        %1350 = vmatpush1.msra.mxu0 0.0
        %1351 = vmatprep.mubr.f32.mxu0 0.0
        %1352 = vmatmul.mubr.f32.gmra.mrb[0].mxu0 %v287
        %v1353 = vpop.f32.mrb[0].mxu0
        %v1354 = vadd.f32 %v598, %v1353
        %v1355 = vpop.f32.mrb[0].mxu0
        %v1356 = vadd.f32 %v602, %v1355
        %1357 = vmatprep.mubr.f32.mxu0 0.0
        %1358 = vmatmul.mubr.f32.gmra.mrb[0].mxu0 %v288
        %v1359 = vpop.f32.mrb[0].mxu0
        %v1360 = vadd.f32 %v598, %v1359
        %v1361 = vpop.f32.mrb[0].mxu0
        %v1362 = vadd.f32 %v602, %v1361
        %1363 = vmatprep.mubr.f32.mxu0 0.0
        %1364 = vmatmul.mubr.f32.gmra.mrb[0].mxu0 %v289
        %v1365 = vpop.f32.mrb[0].mxu0
        %v1366 = vadd.f32 %v598, %v1365
        %v1367 = vpop.f32.mrb[0].mxu0
        %v1368 = vadd.f32 %v602, %v1367
        %1369 = vmatprep.mubr.f32.mxu0 0.0
        %1370 = vmatmul.mubr.f32.gmra.mrb[0].mxu0 %v290
        %v1371 = vpop.f32.mrb[0].mxu0
        %v1372 = vadd.f32 %v598, %v1371
        %v1373 = vpop.f32.mrb[0].mxu0
        %v1374 = vadd.f32 %v602, %v1373
        %1375 = vmatprep.mubr.f32.mxu0 0.0
        %1376 = vmatmul.mubr.f32.gmra.mrb[0].mxu0 %v291
        %v1377 = vpop.f32.mrb[0].mxu0
        %v1378 = vadd.f32 %v598, %v1377
        %v1379 = vpop.f32.mrb[0].mxu0
        %v1380 = vadd.f32 %v602, %v1379
        %1381 = vmatprep.mubr.f32.mxu0 0.0
        %1382 = vmatmul.mubr.f32.gmra.mrb[0].mxu0 %v292
        %v1383 = vpop.f32.mrb[0].mxu0
        %v1384 = vadd.f32 %v598, %v1383
        %v1385 = vpop.f32.mrb[0].mxu0
        %v1386 = vadd.f32 %v602, %v1385
        %1387 = vmatprep.mubr.f32.mxu0 0.0
        %1388 = vmatmul.mubr.f32.gmra.mrb[0].mxu0 %v293
        %v1389 = vpop.f32.mrb[0].mxu0
        %v1390 = vadd.f32 %v598, %v1389
        %v1391 = vpop.f32.mrb[0].mxu0
        %v1392 = vadd.f32 %v602, %v1391
        %1393 = vmatprep.mubr.f32.mxu0 0.0
        %1394 = vmatmul.mubr.f32.gmra.mrb[0].mxu0 %v294
        %v1395 = vpop.f32.mrb[0].mxu0
        %v1396 = vadd.f32 %v598, %v1395
        %v1397 = vpop.f32.mrb[0].mxu0
        %v1398 = vadd.f32 %v602, %v1397
        %1399 = vmatprep.mubr.f32.mxu0 0.0
        %1400 = vmatmul.mubr.f32.gmra.mrb[0].mxu0 %v295
        %v1401 = vpop.f32.mrb[0].mxu0
        %v1402 = vadd.f32 %v598, %v1401
        %v1403 = vpop.f32.mrb[0].mxu0
        %v1404 = vadd.f32 %v602, %v1403
        %1405 = vmatprep.mubr.f32.mxu0 0.0
        %1406 = vmatmul.mubr.f32.gmra.mrb[0].mxu0 %v296
        %v1407 = vpop.f32.mrb[0].mxu0
        %v1408 = vadd.f32 %v598, %v1407
        %v1409 = vpop.f32.mrb[0].mxu0
        %v1410 = vadd.f32 %v602, %v1409
        %1411 = vmatprep.mubr.f32.mxu0 0.0
        %1412 = vmatmul.mubr.f32.gmra.mrb[0].mxu0 %v297
        %v1413 = vpop.f32.mrb[0].mxu0
        %v1414 = vadd.f32 %v598, %v1413
        %v1415 = vpop.f32.mrb[0].mxu0
        %v1416 = vadd.f32 %v602, %v1415
        %1417 = vmatprep.mubr.f32.mxu0 0.0
        %1418 = vmatmul.mubr.f32.gmra.mrb[0].mxu0 %v298
        %v1419 = vpop.f32.mrb[0].mxu0
        %v1420 = vadd.f32 %v598, %v1419
        %v1421 = vpop.f32.mrb[0].mxu0
        %v1422 = vadd.f32 %v602, %v1421
        %1423 = vmatprep.mubr.f32.mxu0 0.0
        %1424 = vmatmul.mubr.f32.gmra.mrb[0].mxu0 %v299
        %v1425 = vpop.f32.mrb[0].mxu0
        %v1426 = vadd.f32 %v598, %v1425
        %v1427 = vpop.f32.mrb[0].mxu0
        %v1428 = vadd.f32 %v602, %v1427
        %1429 = vmatprep.mubr.f32.mxu0 0.0
        %1430 = vmatmul.mubr.f32.gmra.mrb[0].mxu0 %v300
        %v1431 = vpop.f32.mrb[0].mxu0
        %v1432 = vadd.f32 %v598, %v1431
        %v1433 = vpop.f32.mrb[0].mxu0
        %v1434 = vadd.f32 %v602, %v1433
        %1435 = vmatprep.mubr.f32.mxu0 0.0
        %1436 = vmatmul.mubr.f32.gmra.mrb[0].mxu0 %v301
        %v1437 = vpop.f32.mrb[0].mxu0
        %v1438 = vadd.f32 %v598, %v1437
        %v1439 = vpop.f32.mrb[0].mxu0
        %v1440 = vadd.f32 %v602, %v1439
        %1441 = vmatprep.mubr.f32.mxu0 0.0
        %1442 = vmatmul.mubr.f32.gmra.mrb[0].mxu0 %v302
        %v1443 = vpop.f32.mrb[0].mxu0
        %v1444 = vadd.f32 %v598, %v1443
        %v1445 = vpop.f32.mrb[0].mxu0
        %v1446 = vadd.f32 %v602, %v1445
        %1447 = vdwg.mxu0
        %1448 = vmatprep.subr.mxu0 %v314
        %1449 = vmatpush1.msra.mxu0 %v313
        %1450 = vmatprep.subr.mxu0 %v330
        %1451 = vmatpush1.msra.mxu0 %v329
        %1452 = vmatprep.subr.mxu0 %v346
        %1453 = vmatpush1.msra.mxu0 %v345
        %1454 = vmatprep.subr.mxu0 %v362
        %1455 = vmatpush1.msra.mxu0 %v361
        %1456 = vmatprep.subr.mxu0 %v378
        %1457 = vmatpush1.msra.mxu0 %v377
        %1458 = vmatprep.subr.mxu0 %v394
        %1459 = vmatpush1.msra.mxu0 %v393
        %1460 = vmatprep.subr.mxu0 %v410
        %1461 = vmatpush1.msra.mxu0 %v409
        %1462 = vmatprep.subr.mxu0 %v426
        %1463 = vmatpush1.msra.mxu0 %v425
        %1464 = vmatprep.subr.mxu0 %v442
        %1465 = vmatpush1.msra.mxu0 %v441
        %1466 = vmatprep.subr.mxu0 %v458
        %1467 = vmatpush1.msra.mxu0 %v457
        %1468 = vmatprep.subr.mxu0 %v474
        %1469 = vmatpush1.msra.mxu0 %v473
        %1470 = vmatprep.subr.mxu0 %v490
        %1471 = vmatpush1.msra.mxu0 %v489
        %1472 = vmatprep.subr.mxu0 %v506
        %1473 = vmatpush1.msra.mxu0 %v505
        %1474 = vmatprep.subr.mxu0 %v522
        %1475 = vmatpush1.msra.mxu0 %v521
        %1476 = vmatprep.subr.mxu0 %v538
        %1477 = vmatpush1.msra.mxu0 %v537
        %1478 = vmatprep.subr.mxu0 %v554
        %1479 = vmatpush1.msra.mxu0 %v553
        %1480 = vmatprep.subr.mxu0 0.0
        %1481 = vmatpush1.msra.mxu0 0.0
        %1482 = vmatprep.subr.mxu0 0.0
        %1483 = vmatpush1.msra.mxu0 0.0
        %1484 = vmatprep.subr.mxu0 0.0
        %1485 = vmatpush1.msra.mxu0 0.0
        %1486 = vmatprep.subr.mxu0 0.0
        %1487 = vmatpush1.msra.mxu0 0.0
        %1488 = vmatprep.subr.mxu0 0.0
        %1489 = vmatpush1.msra.mxu0 0.0
        %1490 = vmatprep.subr.mxu0 0.0
        %1491 = vmatpush1.msra.mxu0 0.0
        %1492 = vmatprep.subr.mxu0 0.0
        %1493 = vmatpush1.msra.mxu0 0.0
        %1494 = vmatprep.subr.mxu0 0.0
        %1495 = vmatpush1.msra.mxu0 0.0
        %1496 = vmatprep.subr.mxu0 0.0
        %1497 = vmatpush1.msra.mxu0 0.0
        %1498 = vmatprep.subr.mxu0 0.0
        %1499 = vmatpush1.msra.mxu0 0.0
        %1500 = vmatprep.subr.mxu0 0.0
        %1501 = vmatpush1.msra.mxu0 0.0
        %1502 = vmatprep.subr.mxu0 0.0
        %1503 = vmatpush1.msra.mxu0 0.0
        %1504 = vmatprep.subr.mxu0 0.0
        %1505 = vmatpush1.msra.mxu0 0.0
        %1506 = vmatprep.subr.mxu0 0.0
        %1507 = vmatpush1.msra.mxu0 0.0
        %1508 = vmatprep.subr.mxu0 0.0
        %1509 = vmatpush1.msra.mxu0 0.0
        %1510 = vmatprep.subr.mxu0 0.0
        %1511 = vmatpush1.msra.mxu0 0.0
        %1512 = vmatprep.mubr.f32.mxu0 0.0
        %1513 = vmatmul.mubr.f32.gmra.mrb[0].mxu0 %v287
        %v1514 = vpop.f32.mrb[0].mxu0
        %v1515 = vadd.f32 %v606, %v1514
        %v1516 = vpop.f32.mrb[0].mxu0
        %v1517 = vadd.f32 %v610, %v1516
        %1518 = vmatprep.mubr.f32.mxu0 0.0
        %1519 = vmatmul.mubr.f32.gmra.mrb[0].mxu0 %v288
        %v1520 = vpop.f32.mrb[0].mxu0
        %v1521 = vadd.f32 %v606, %v1520
        %v1522 = vpop.f32.mrb[0].mxu0
        %v1523 = vadd.f32 %v610, %v1522
        %1524 = vmatprep.mubr.f32.mxu0 0.0
        %1525 = vmatmul.mubr.f32.gmra.mrb[0].mxu0 %v289
        %v1526 = vpop.f32.mrb[0].mxu0
        %v1527 = vadd.f32 %v606, %v1526
        %v1528 = vpop.f32.mrb[0].mxu0
        %v1529 = vadd.f32 %v610, %v1528
        %1530 = vmatprep.mubr.f32.mxu0 0.0
        %1531 = vmatmul.mubr.f32.gmra.mrb[0].mxu0 %v290
        %v1532 = vpop.f32.mrb[0].mxu0
        %v1533 = vadd.f32 %v606, %v1532
        %v1534 = vpop.f32.mrb[0].mxu0
        %v1535 = vadd.f32 %v610, %v1534
        %1536 = vmatprep.mubr.f32.mxu0 0.0
        %1537 = vmatmul.mubr.f32.gmra.mrb[0].mxu0 %v291
        %v1538 = vpop.f32.mrb[0].mxu0
        %v1539 = vadd.f32 %v606, %v1538
        %v1540 = vpop.f32.mrb[0].mxu0
        %v1541 = vadd.f32 %v610, %v1540
        %1542 = vmatprep.mubr.f32.mxu0 0.0
        %1543 = vmatmul.mubr.f32.gmra.mrb[0].mxu0 %v292
        %v1544 = vpop.f32.mrb[0].mxu0
        %v1545 = vadd.f32 %v606, %v1544
        %v1546 = vpop.f32.mrb[0].mxu0
        %v1547 = vadd.f32 %v610, %v1546
        %1548 = vmatprep.mubr.f32.mxu0 0.0
        %1549 = vmatmul.mubr.f32.gmra.mrb[0].mxu0 %v293
        %v1550 = vpop.f32.mrb[0].mxu0
        %v1551 = vadd.f32 %v606, %v1550
        %v1552 = vpop.f32.mrb[0].mxu0
        %v1553 = vadd.f32 %v610, %v1552
        %1554 = vmatprep.mubr.f32.mxu0 0.0
        %1555 = vmatmul.mubr.f32.gmra.mrb[0].mxu0 %v294
        %v1556 = vpop.f32.mrb[0].mxu0
        %v1557 = vadd.f32 %v606, %v1556
        %v1558 = vpop.f32.mrb[0].mxu0
        %v1559 = vadd.f32 %v610, %v1558
        %1560 = vmatprep.mubr.f32.mxu0 0.0
        %1561 = vmatmul.mubr.f32.gmra.mrb[0].mxu0 %v295
        %v1562 = vpop.f32.mrb[0].mxu0
        %v1563 = vadd.f32 %v606, %v1562
        %v1564 = vpop.f32.mrb[0].mxu0
        %v1565 = vadd.f32 %v610, %v1564
        %1566 = vmatprep.mubr.f32.mxu0 0.0
        %1567 = vmatmul.mubr.f32.gmra.mrb[0].mxu0 %v296
        %v1568 = vpop.f32.mrb[0].mxu0
        %v1569 = vadd.f32 %v606, %v1568
        %v1570 = vpop.f32.mrb[0].mxu0
        %v1571 = vadd.f32 %v610, %v1570
        %1572 = vmatprep.mubr.f32.mxu0 0.0
        %1573 = vmatmul.mubr.f32.gmra.mrb[0].mxu0 %v297
        %v1574 = vpop.f32.mrb[0].mxu0
        %v1575 = vadd.f32 %v606, %v1574
        %v1576 = vpop.f32.mrb[0].mxu0
        %v1577 = vadd.f32 %v610, %v1576
        %1578 = vmatprep.mubr.f32.mxu0 0.0
        %1579 = vmatmul.mubr.f32.gmra.mrb[0].mxu0 %v298
        %v1580 = vpop.f32.mrb[0].mxu0
        %v1581 = vadd.f32 %v606, %v1580
        %v1582 = vpop.f32.mrb[0].mxu0
        %v1583 = vadd.f32 %v610, %v1582
        %1584 = vmatprep.mubr.f32.mxu0 0.0
        %1585 = vmatmul.mubr.f32.gmra.mrb[0].mxu0 %v299
        %v1586 = vpop.f32.mrb[0].mxu0
        %v1587 = vadd.f32 %v606, %v1586
        %v1588 = vpop.f32.mrb[0].mxu0
        %v1589 = vadd.f32 %v610, %v1588
        %1590 = vmatprep.mubr.f32.mxu0 0.0
        %1591 = vmatmul.mubr.f32.gmra.mrb[0].mxu0 %v300
        %v1592 = vpop.f32.mrb[0].mxu0
        %v1593 = vadd.f32 %v606, %v1592
        %v1594 = vpop.f32.mrb[0].mxu0
        %v1595 = vadd.f32 %v610, %v1594
        %1596 = vmatprep.mubr.f32.mxu0 0.0
        %1597 = vmatmul.mubr.f32.gmra.mrb[0].mxu0 %v301
        %v1598 = vpop.f32.mrb[0].mxu0
        %v1599 = vadd.f32 %v606, %v1598
        %v1600 = vpop.f32.mrb[0].mxu0
        %v1601 = vadd.f32 %v610, %v1600
        %1602 = vmatprep.mubr.f32.mxu0 0.0
        %1603 = vmatmul.mubr.f32.gmra.mrb[0].mxu0 %v302
        %v1604 = vpop.f32.mrb[0].mxu0
        %v1605 = vadd.f32 %v606, %v1604
        %v1606 = vpop.f32.mrb[0].mxu0
        %v1607 = vadd.f32 %v610, %v1606
        %1608 = vdwg.mxu0
        %1609 = vmatprep.subr.mxu0 %v316
        %1610 = vmatpush1.msra.mxu0 %v315
        %1611 = vmatprep.subr.mxu0 %v332
        %1612 = vmatpush1.msra.mxu0 %v331
        %1613 = vmatprep.subr.mxu0 %v348
        %1614 = vmatpush1.msra.mxu0 %v347
        %1615 = vmatprep.subr.mxu0 %v364
        %1616 = vmatpush1.msra.mxu0 %v363
        %1617 = vmatprep.subr.mxu0 %v380
        %1618 = vmatpush1.msra.mxu0 %v379
        %1619 = vmatprep.subr.mxu0 %v396
        %1620 = vmatpush1.msra.mxu0 %v395
        %1621 = vmatprep.subr.mxu0 %v412
        %1622 = vmatpush1.msra.mxu0 %v411
        %1623 = vmatprep.subr.mxu0 %v428
        %1624 = vmatpush1.msra.mxu0 %v427
        %1625 = vmatprep.subr.mxu0 %v444
        %1626 = vmatpush1.msra.mxu0 %v443
        %1627 = vmatprep.subr.mxu0 %v460
        %1628 = vmatpush1.msra.mxu0 %v459
        %1629 = vmatprep.subr.mxu0 %v476
        %1630 = vmatpush1.msra.mxu0 %v475
        %1631 = vmatprep.subr.mxu0 %v492
        %1632 = vmatpush1.msra.mxu0 %v491
        %1633 = vmatprep.subr.mxu0 %v508
        %1634 = vmatpush1.msra.mxu0 %v507
        %1635 = vmatprep.subr.mxu0 %v524
        %1636 = vmatpush1.msra.mxu0 %v523
        %1637 = vmatprep.subr.mxu0 %v540
        %1638 = vmatpush1.msra.mxu0 %v539
        %1639 = vmatprep.subr.mxu0 %v556
        %1640 = vmatpush1.msra.mxu0 %v555
        %1641 = vmatprep.subr.mxu0 0.0
        %1642 = vmatpush1.msra.mxu0 0.0
        %1643 = vmatprep.subr.mxu0 0.0
        %1644 = vmatpush1.msra.mxu0 0.0
        %1645 = vmatprep.subr.mxu0 0.0
        %1646 = vmatpush1.msra.mxu0 0.0
        %1647 = vmatprep.subr.mxu0 0.0
        %1648 = vmatpush1.msra.mxu0 0.0
        %1649 = vmatprep.subr.mxu0 0.0
        %1650 = vmatpush1.msra.mxu0 0.0
        %1651 = vmatprep.subr.mxu0 0.0
        %1652 = vmatpush1.msra.mxu0 0.0
        %1653 = vmatprep.subr.mxu0 0.0
        %1654 = vmatpush1.msra.mxu0 0.0
        %1655 = vmatprep.subr.mxu0 0.0
        %1656 = vmatpush1.msra.mxu0 0.0
        %1657 = vmatprep.subr.mxu0 0.0
        %1658 = vmatpush1.msra.mxu0 0.0
        %1659 = vmatprep.subr.mxu0 0.0
        %1660 = vmatpush1.msra.mxu0 0.0
        %1661 = vmatprep.subr.mxu0 0.0
        %1662 = vmatpush1.msra.mxu0 0.0
        %1663 = vmatprep.subr.mxu0 0.0
        %1664 = vmatpush1.msra.mxu0 0.0
        %1665 = vmatprep.subr.mxu0 0.0
        %1666 = vmatpush1.msra.mxu0 0.0
        %1667 = vmatprep.subr.mxu0 0.0
        %1668 = vmatpush1.msra.mxu0 0.0
        %1669 = vmatprep.subr.mxu0 0.0
        %1670 = vmatpush1.msra.mxu0 0.0
        %1671 = vmatprep.subr.mxu0 0.0
        %1672 = vmatpush1.msra.mxu0 0.0
        %1673 = vmatprep.mubr.f32.mxu0 0.0
        %1674 = vmatmul.mubr.f32.gmra.mrb[0].mxu0 %v287
        %v1675 = vpop.f32.mrb[0].mxu0
        %v1676 = vadd.f32 %v614, %v1675
        %v1677 = vpop.f32.mrb[0].mxu0
        %v1678 = vadd.f32 %v618, %v1677
        %1679 = vmatprep.mubr.f32.mxu0 0.0
        %1680 = vmatmul.mubr.f32.gmra.mrb[0].mxu0 %v288
        %v1681 = vpop.f32.mrb[0].mxu0
        %v1682 = vadd.f32 %v614, %v1681
        %v1683 = vpop.f32.mrb[0].mxu0
        %v1684 = vadd.f32 %v618, %v1683
        %1685 = vmatprep.mubr.f32.mxu0 0.0
        %1686 = vmatmul.mubr.f32.gmra.mrb[0].mxu0 %v289
        %v1687 = vpop.f32.mrb[0].mxu0
        %v1688 = vadd.f32 %v614, %v1687
        %v1689 = vpop.f32.mrb[0].mxu0
        %v1690 = vadd.f32 %v618, %v1689
        %1691 = vmatprep.mubr.f32.mxu0 0.0
        %1692 = vmatmul.mubr.f32.gmra.mrb[0].mxu0 %v290
        %v1693 = vpop.f32.mrb[0].mxu0
        %v1694 = vadd.f32 %v614, %v1693
        %v1695 = vpop.f32.mrb[0].mxu0
        %v1696 = vadd.f32 %v618, %v1695
        %1697 = vmatprep.mubr.f32.mxu0 0.0
        %1698 = vmatmul.mubr.f32.gmra.mrb[0].mxu0 %v291
        %v1699 = vpop.f32.mrb[0].mxu0
        %v1700 = vadd.f32 %v614, %v1699
        %v1701 = vpop.f32.mrb[0].mxu0
        %v1702 = vadd.f32 %v618, %v1701
        %1703 = vmatprep.mubr.f32.mxu0 0.0
        %1704 = vmatmul.mubr.f32.gmra.mrb[0].mxu0 %v292
        %v1705 = vpop.f32.mrb[0].mxu0
        %v1706 = vadd.f32 %v614, %v1705
        %v1707 = vpop.f32.mrb[0].mxu0
        %v1708 = vadd.f32 %v618, %v1707
        %1709 = vmatprep.mubr.f32.mxu0 0.0
        %1710 = vmatmul.mubr.f32.gmra.mrb[0].mxu0 %v293
        %v1711 = vpop.f32.mrb[0].mxu0
        %v1712 = vadd.f32 %v614, %v1711
        %v1713 = vpop.f32.mrb[0].mxu0
        %v1714 = vadd.f32 %v618, %v1713
        %1715 = vmatprep.mubr.f32.mxu0 0.0
        %1716 = vmatmul.mubr.f32.gmra.mrb[0].mxu0 %v294
        %v1717 = vpop.f32.mrb[0].mxu0
        %v1718 = vadd.f32 %v614, %v1717
        %v1719 = vpop.f32.mrb[0].mxu0
        %v1720 = vadd.f32 %v618, %v1719
        %1721 = vmatprep.mubr.f32.mxu0 0.0
        %1722 = vmatmul.mubr.f32.gmra.mrb[0].mxu0 %v295
        %v1723 = vpop.f32.mrb[0].mxu0
        %v1724 = vadd.f32 %v614, %v1723
        %v1725 = vpop.f32.mrb[0].mxu0
        %v1726 = vadd.f32 %v618, %v1725
        %1727 = vmatprep.mubr.f32.mxu0 0.0
        %1728 = vmatmul.mubr.f32.gmra.mrb[0].mxu0 %v296
        %v1729 = vpop.f32.mrb[0].mxu0
        %v1730 = vadd.f32 %v614, %v1729
        %v1731 = vpop.f32.mrb[0].mxu0
        %v1732 = vadd.f32 %v618, %v1731
        %1733 = vmatprep.mubr.f32.mxu0 0.0
        %1734 = vmatmul.mubr.f32.gmra.mrb[0].mxu0 %v297
        %v1735 = vpop.f32.mrb[0].mxu0
        %v1736 = vadd.f32 %v614, %v1735
        %v1737 = vpop.f32.mrb[0].mxu0
        %v1738 = vadd.f32 %v618, %v1737
        %1739 = vmatprep.mubr.f32.mxu0 0.0
        %1740 = vmatmul.mubr.f32.gmra.mrb[0].mxu0 %v298
        %v1741 = vpop.f32.mrb[0].mxu0
        %v1742 = vadd.f32 %v614, %v1741
        %v1743 = vpop.f32.mrb[0].mxu0
        %v1744 = vadd.f32 %v618, %v1743
        %1745 = vmatprep.mubr.f32.mxu0 0.0
        %1746 = vmatmul.mubr.f32.gmra.mrb[0].mxu0 %v299
        %v1747 = vpop.f32.mrb[0].mxu0
        %v1748 = vadd.f32 %v614, %v1747
        %v1749 = vpop.f32.mrb[0].mxu0
        %v1750 = vadd.f32 %v618, %v1749
        %1751 = vmatprep.mubr.f32.mxu0 0.0
        %1752 = vmatmul.mubr.f32.gmra.mrb[0].mxu0 %v300
        %v1753 = vpop.f32.mrb[0].mxu0
        %v1754 = vadd.f32 %v614, %v1753
        %v1755 = vpop.f32.mrb[0].mxu0
        %v1756 = vadd.f32 %v618, %v1755
        %1757 = vmatprep.mubr.f32.mxu0 0.0
        %1758 = vmatmul.mubr.f32.gmra.mrb[0].mxu0 %v301
        %v1759 = vpop.f32.mrb[0].mxu0
        %v1760 = vadd.f32 %v614, %v1759
        %v1761 = vpop.f32.mrb[0].mxu0
        %v1762 = vadd.f32 %v618, %v1761
        %1763 = vmatprep.mubr.f32.mxu0 0.0
        %1764 = vmatmul.mubr.f32.gmra.mrb[0].mxu0 %v302
        %v1765 = vpop.f32.mrb[0].mxu0
        %v1766 = vadd.f32 %v614, %v1765
        %v1767 = vpop.f32.mrb[0].mxu0
        %v1768 = vadd.f32 %v618, %v1767
        %1769 = vdwg.mxu0
        %1770 = vmatprep.subr.mxu0 %v318
        %1771 = vmatpush1.msra.mxu0 %v317
        %1772 = vmatprep.subr.mxu0 %v334
        %1773 = vmatpush1.msra.mxu0 %v333
        %1774 = vmatprep.subr.mxu0 %v350
        %1775 = vmatpush1.msra.mxu0 %v349
        %1776 = vmatprep.subr.mxu0 %v366
        %1777 = vmatpush1.msra.mxu0 %v365
        %1778 = vmatprep.subr.mxu0 %v382
        %1779 = vmatpush1.msra.mxu0 %v381
        %1780 = vmatprep.subr.mxu0 %v398
        %1781 = vmatpush1.msra.mxu0 %v397
        %1782 = vmatprep.subr.mxu0 %v414
        %1783 = vmatpush1.msra.mxu0 %v413
        %1784 = vmatprep.subr.mxu0 %v430
        %1785 = vmatpush1.msra.mxu0 %v429
        %1786 = vmatprep.subr.mxu0 %v446
        %1787 = vmatpush1.msra.mxu0 %v445
        %1788 = vmatprep.subr.mxu0 %v462
        %1789 = vmatpush1.msra.mxu0 %v461
        %1790 = vmatprep.subr.mxu0 %v478
        %1791 = vmatpush1.msra.mxu0 %v477
        %1792 = vmatprep.subr.mxu0 %v494
        %1793 = vmatpush1.msra.mxu0 %v493
        %1794 = vmatprep.subr.mxu0 %v510
        %1795 = vmatpush1.msra.mxu0 %v509
        %1796 = vmatprep.subr.mxu0 %v526
        %1797 = vmatpush1.msra.mxu0 %v525
        %1798 = vmatprep.subr.mxu0 %v542
        %1799 = vmatpush1.msra.mxu0 %v541
        %1800 = vmatprep.subr.mxu0 %v558
        %1801 = vmatpush1.msra.mxu0 %v557
        %1802 = vmatprep.subr.mxu0 0.0
        %1803 = vmatpush1.msra.mxu0 0.0
        %1804 = vmatprep.subr.mxu0 0.0
        %1805 = vmatpush1.msra.mxu0 0.0
        %1806 = vmatprep.subr.mxu0 0.0
        %1807 = vmatpush1.msra.mxu0 0.0
        %1808 = vmatprep.subr.mxu0 0.0
        %1809 = vmatpush1.msra.mxu0 0.0
        %1810 = vmatprep.subr.mxu0 0.0
        %1811 = vmatpush1.msra.mxu0 0.0
        %1812 = vmatprep.subr.mxu0 0.0
        %1813 = vmatpush1.msra.mxu0 0.0
        %1814 = vmatprep.subr.mxu0 0.0
        %1815 = vmatpush1.msra.mxu0 0.0
        %1816 = vmatprep.subr.mxu0 0.0
        %1817 = vmatpush1.msra.mxu0 0.0
        %1818 = vmatprep.subr.mxu0 0.0
        %1819 = vmatpush1.msra.mxu0 0.0
        %1820 = vmatprep.subr.mxu0 0.0
        %1821 = vmatpush1.msra.mxu0 0.0
        %1822 = vmatprep.subr.mxu0 0.0
        %1823 = vmatpush1.msra.mxu0 0.0
        %1824 = vmatprep.subr.mxu0 0.0
        %1825 = vmatpush1.msra.mxu0 0.0
        %1826 = vmatprep.subr.mxu0 0.0
        %1827 = vmatpush1.msra.mxu0 0.0
        %1828 = vmatprep.subr.mxu0 0.0
        %1829 = vmatpush1.msra.mxu0 0.0
        %1830 = vmatprep.subr.mxu0 0.0
        %1831 = vmatpush1.msra.mxu0 0.0
        %1832 = vmatprep.subr.mxu0 0.0
        %1833 = vmatpush1.msra.mxu0 0.0
        %1834 = vmatprep.mubr.f32.mxu0 0.0
        %1835 = vmatmul.mubr.f32.gmra.mrb[0].mxu0 %v287
        %v1836 = vpop.f32.mrb[0].mxu0
        %v1837 = vadd.f32 %v622, %v1836
        %v1838 = vpop.f32.mrb[0].mxu0
        %v1839 = vadd.f32 %v626, %v1838
        %1840 = vmatprep.mubr.f32.mxu0 0.0
        %1841 = vmatmul.mubr.f32.gmra.mrb[0].mxu0 %v288
        %v1842 = vpop.f32.mrb[0].mxu0
        %v1843 = vadd.f32 %v622, %v1842
        %v1844 = vpop.f32.mrb[0].mxu0
        %v1845 = vadd.f32 %v626, %v1844
        %1846 = vmatprep.mubr.f32.mxu0 0.0
        %1847 = vmatmul.mubr.f32.gmra.mrb[0].mxu0 %v289
        %v1848 = vpop.f32.mrb[0].mxu0
        %v1849 = vadd.f32 %v622, %v1848
        %v1850 = vpop.f32.mrb[0].mxu0
        %v1851 = vadd.f32 %v626, %v1850
        %1852 = vmatprep.mubr.f32.mxu0 0.0
        %1853 = vmatmul.mubr.f32.gmra.mrb[0].mxu0 %v290
        %v1854 = vpop.f32.mrb[0].mxu0
        %v1855 = vadd.f32 %v622, %v1854
        %v1856 = vpop.f32.mrb[0].mxu0
        %v1857 = vadd.f32 %v626, %v1856
        %1858 = vmatprep.mubr.f32.mxu0 0.0
        %1859 = vmatmul.mubr.f32.gmra.mrb[0].mxu0 %v291
        %v1860 = vpop.f32.mrb[0].mxu0
        %v1861 = vadd.f32 %v622, %v1860
        %v1862 = vpop.f32.mrb[0].mxu0
        %v1863 = vadd.f32 %v626, %v1862
        %1864 = vmatprep.mubr.f32.mxu0 0.0
        %1865 = vmatmul.mubr.f32.gmra.mrb[0].mxu0 %v292
        %v1866 = vpop.f32.mrb[0].mxu0
        %v1867 = vadd.f32 %v622, %v1866
        %v1868 = vpop.f32.mrb[0].mxu0
        %v1869 = vadd.f32 %v626, %v1868
        %1870 = vmatprep.mubr.f32.mxu0 0.0
        %1871 = vmatmul.mubr.f32.gmra.mrb[0].mxu0 %v293
        %v1872 = vpop.f32.mrb[0].mxu0
        %v1873 = vadd.f32 %v622, %v1872
        %v1874 = vpop.f32.mrb[0].mxu0
        %v1875 = vadd.f32 %v626, %v1874
        %1876 = vmatprep.mubr.f32.mxu0 0.0
        %1877 = vmatmul.mubr.f32.gmra.mrb[0].mxu0 %v294
        %v1878 = vpop.f32.mrb[0].mxu0
        %v1879 = vadd.f32 %v622, %v1878
        %v1880 = vpop.f32.mrb[0].mxu0
        %v1881 = vadd.f32 %v626, %v1880
        %1882 = vmatprep.mubr.f32.mxu0 0.0
        %1883 = vmatmul.mubr.f32.gmra.mrb[0].mxu0 %v295
        %v1884 = vpop.f32.mrb[0].mxu0
        %v1885 = vadd.f32 %v622, %v1884
        %v1886 = vpop.f32.mrb[0].mxu0
        %v1887 = vadd.f32 %v626, %v1886
        %1888 = vmatprep.mubr.f32.mxu0 0.0
        %1889 = vmatmul.mubr.f32.gmra.mrb[0].mxu0 %v296
        %v1890 = vpop.f32.mrb[0].mxu0
        %v1891 = vadd.f32 %v622, %v1890
        %v1892 = vpop.f32.mrb[0].mxu0
        %v1893 = vadd.f32 %v626, %v1892
        %1894 = vmatprep.mubr.f32.mxu0 0.0
        %1895 = vmatmul.mubr.f32.gmra.mrb[0].mxu0 %v297
        %v1896 = vpop.f32.mrb[0].mxu0
        %v1897 = vadd.f32 %v622, %v1896
        %v1898 = vpop.f32.mrb[0].mxu0
        %v1899 = vadd.f32 %v626, %v1898
        %1900 = vmatprep.mubr.f32.mxu0 0.0
        %1901 = vmatmul.mubr.f32.gmra.mrb[0].mxu0 %v298
        %v1902 = vpop.f32.mrb[0].mxu0
        %v1903 = vadd.f32 %v622, %v1902
        %v1904 = vpop.f32.mrb[0].mxu0
        %v1905 = vadd.f32 %v626, %v1904
        %1906 = vmatprep.mubr.f32.mxu0 0.0
        %1907 = vmatmul.mubr.f32.gmra.mrb[0].mxu0 %v299
        %v1908 = vpop.f32.mrb[0].mxu0
        %v1909 = vadd.f32 %v622, %v1908
        %v1910 = vpop.f32.mrb[0].mxu0
        %v1911 = vadd.f32 %v626, %v1910
        %1912 = vmatprep.mubr.f32.mxu0 0.0
        %1913 = vmatmul.mubr.f32.gmra.mrb[0].mxu0 %v300
        %v1914 = vpop.f32.mrb[0].mxu0
        %v1915 = vadd.f32 %v622, %v1914
        %v1916 = vpop.f32.mrb[0].mxu0
        %v1917 = vadd.f32 %v626, %v1916
        %1918 = vmatprep.mubr.f32.mxu0 0.0
        %1919 = vmatmul.mubr.f32.gmra.mrb[0].mxu0 %v301
        %v1920 = vpop.f32.mrb[0].mxu0
        %v1921 = vadd.f32 %v622, %v1920
        %v1922 = vpop.f32.mrb[0].mxu0
        %v1923 = vadd.f32 %v626, %v1922
        %1924 = vmatprep.mubr.f32.mxu0 0.0
        %1925 = vmatmul.mubr.f32.gmra.mrb[0].mxu0 %v302
        %v1926 = vpop.f32.mrb[0].mxu0
        %v1927 = vadd.f32 %v622, %v1926
        %v1928 = vpop.f32.mrb[0].mxu0
        %v1929 = vadd.f32 %v626, %v1928
        %1930 = vdwg.mxu0
        %v1931 = vmax.f32 %v710, 0.0
        %v1932 = vmax.f32 %v712, 0.0
        %v1933 = vmax.f32 %v871, 0.0
        %v1934 = vmax.f32 %v873, 0.0
        %v1935 = vmax.f32 %v1032, 0.0
        %v1936 = vmax.f32 %v1034, 0.0
        %v1937 = vmax.f32 %v1193, 0.0
        %v1938 = vmax.f32 %v1195, 0.0
        %v1939 = vmax.f32 %v1354, 0.0
        %v1940 = vmax.f32 %v1356, 0.0
        %v1941 = vmax.f32 %v1515, 0.0
        %v1942 = vmax.f32 %v1517, 0.0
        %v1943 = vmax.f32 %v1676, 0.0
        %v1944 = vmax.f32 %v1678, 0.0
        %v1945 = vmax.f32 %v1837, 0.0
        %v1946 = vmax.f32 %v1839, 0.0
        %v1947 = vmax.f32 %v716, 0.0
        %v1948 = vmax.f32 %v718, 0.0
        %v1949 = vmax.f32 %v877, 0.0
        %v1950 = vmax.f32 %v879, 0.0
        %v1951 = vmax.f32 %v1038, 0.0
        %v1952 = vmax.f32 %v1040, 0.0
        %v1953 = vmax.f32 %v1199, 0.0
        %v1954 = vmax.f32 %v1201, 0.0
        %v1955 = vmax.f32 %v1360, 0.0
        %v1956 = vmax.f32 %v1362, 0.0
        %v1957 = vmax.f32 %v1521, 0.0
        %v1958 = vmax.f32 %v1523, 0.0
        %v1959 = vmax.f32 %v1682, 0.0
        %v1960 = vmax.f32 %v1684, 0.0
        %v1961 = vmax.f32 %v1843, 0.0
        %v1962 = vmax.f32 %v1845, 0.0
        %v1963 = vmax.f32 %v722, 0.0
        %v1964 = vmax.f32 %v724, 0.0
        %v1965 = vmax.f32 %v883, 0.0
        %v1966 = vmax.f32 %v885, 0.0
        %v1967 = vmax.f32 %v1044, 0.0
        %v1968 = vmax.f32 %v1046, 0.0
        %v1969 = vmax.f32 %v1205, 0.0
        %v1970 = vmax.f32 %v1207, 0.0
        %v1971 = vmax.f32 %v1366, 0.0
        %v1972 = vmax.f32 %v1368, 0.0
        %v1973 = vmax.f32 %v1527, 0.0
        %v1974 = vmax.f32 %v1529, 0.0
        %v1975 = vmax.f32 %v1688, 0.0
        %v1976 = vmax.f32 %v1690, 0.0
        %v1977 = vmax.f32 %v1849, 0.0
        %v1978 = vmax.f32 %v1851, 0.0
        %v1979 = vmax.f32 %v728, 0.0
        %v1980 = vmax.f32 %v730, 0.0
        %v1981 = vmax.f32 %v889, 0.0
        %v1982 = vmax.f32 %v891, 0.0
        %v1983 = vmax.f32 %v1050, 0.0
        %v1984 = vmax.f32 %v1052, 0.0
        %v1985 = vmax.f32 %v1211, 0.0
        %v1986 = vmax.f32 %v1213, 0.0
        %v1987 = vmax.f32 %v1372, 0.0
        %v1988 = vmax.f32 %v1374, 0.0
        %v1989 = vmax.f32 %v1533, 0.0
        %v1990 = vmax.f32 %v1535, 0.0
        %v1991 = vmax.f32 %v1694, 0.0
        %v1992 = vmax.f32 %v1696, 0.0
        %v1993 = vmax.f32 %v1855, 0.0
        %v1994 = vmax.f32 %v1857, 0.0
        %v1995 = vmax.f32 %v734, 0.0
        %v1996 = vmax.f32 %v736, 0.0
        %v1997 = vmax.f32 %v895, 0.0
        %v1998 = vmax.f32 %v897, 0.0
        %v1999 = vmax.f32 %v1056, 0.0
        %v2000 = vmax.f32 %v1058, 0.0
        %v2001 = vmax.f32 %v1217, 0.0
        %v2002 = vmax.f32 %v1219, 0.0
        %v2003 = vmax.f32 %v1378, 0.0
        %v2004 = vmax.f32 %v1380, 0.0
        %v2005 = vmax.f32 %v1539, 0.0
        %v2006 = vmax.f32 %v1541, 0.0
        %v2007 = vmax.f32 %v1700, 0.0
        %v2008 = vmax.f32 %v1702, 0.0
        %v2009 = vmax.f32 %v1861, 0.0
        %v2010 = vmax.f32 %v1863, 0.0
        %v2011 = vmax.f32 %v740, 0.0
        %v2012 = vmax.f32 %v742, 0.0
        %v2013 = vmax.f32 %v901, 0.0
        %v2014 = vmax.f32 %v903, 0.0
        %v2015 = vmax.f32 %v1062, 0.0
        %v2016 = vmax.f32 %v1064, 0.0
        %v2017 = vmax.f32 %v1223, 0.0
        %v2018 = vmax.f32 %v1225, 0.0
        %v2019 = vmax.f32 %v1384, 0.0
        %v2020 = vmax.f32 %v1386, 0.0
        %v2021 = vmax.f32 %v1545, 0.0
        %v2022 = vmax.f32 %v1547, 0.0
        %v2023 = vmax.f32 %v1706, 0.0
        %v2024 = vmax.f32 %v1708, 0.0
        %v2025 = vmax.f32 %v1867, 0.0
        %v2026 = vmax.f32 %v1869, 0.0
        %v2027 = vmax.f32 %v746, 0.0
        %v2028 = vmax.f32 %v748, 0.0
        %v2029 = vmax.f32 %v907, 0.0
        %v2030 = vmax.f32 %v909, 0.0
        %v2031 = vmax.f32 %v1068, 0.0
        %v2032 = vmax.f32 %v1070, 0.0
        %v2033 = vmax.f32 %v1229, 0.0
        %v2034 = vmax.f32 %v1231, 0.0
        %v2035 = vmax.f32 %v1390, 0.0
        %v2036 = vmax.f32 %v1392, 0.0
        %v2037 = vmax.f32 %v1551, 0.0
        %v2038 = vmax.f32 %v1553, 0.0
        %v2039 = vmax.f32 %v1712, 0.0
        %v2040 = vmax.f32 %v1714, 0.0
        %v2041 = vmax.f32 %v1873, 0.0
        %v2042 = vmax.f32 %v1875, 0.0
        %v2043 = vmax.f32 %v752, 0.0
        %v2044 = vmax.f32 %v754, 0.0
        %v2045 = vmax.f32 %v913, 0.0
        %v2046 = vmax.f32 %v915, 0.0
        %v2047 = vmax.f32 %v1074, 0.0
        %v2048 = vmax.f32 %v1076, 0.0
        %v2049 = vmax.f32 %v1235, 0.0
        %v2050 = vmax.f32 %v1237, 0.0
        %v2051 = vmax.f32 %v1396, 0.0
        %v2052 = vmax.f32 %v1398, 0.0
        %v2053 = vmax.f32 %v1557, 0.0
        %v2054 = vmax.f32 %v1559, 0.0
        %v2055 = vmax.f32 %v1718, 0.0
        %v2056 = vmax.f32 %v1720, 0.0
        %v2057 = vmax.f32 %v1879, 0.0
        %v2058 = vmax.f32 %v1881, 0.0
        %v2059 = vmax.f32 %v758, 0.0
        %v2060 = vmax.f32 %v760, 0.0
        %v2061 = vmax.f32 %v919, 0.0
        %v2062 = vmax.f32 %v921, 0.0
        %v2063 = vmax.f32 %v1080, 0.0
        %v2064 = vmax.f32 %v1082, 0.0
        %v2065 = vmax.f32 %v1241, 0.0
        %v2066 = vmax.f32 %v1243, 0.0
        %v2067 = vmax.f32 %v1402, 0.0
        %v2068 = vmax.f32 %v1404, 0.0
        %v2069 = vmax.f32 %v1563, 0.0
        %v2070 = vmax.f32 %v1565, 0.0
        %v2071 = vmax.f32 %v1724, 0.0
        %v2072 = vmax.f32 %v1726, 0.0
        %v2073 = vmax.f32 %v1885, 0.0
        %v2074 = vmax.f32 %v1887, 0.0
        %v2075 = vmax.f32 %v764, 0.0
        %v2076 = vmax.f32 %v766, 0.0
        %v2077 = vmax.f32 %v925, 0.0
        %v2078 = vmax.f32 %v927, 0.0
        %v2079 = vmax.f32 %v1086, 0.0
        %v2080 = vmax.f32 %v1088, 0.0
        %v2081 = vmax.f32 %v1247, 0.0
        %v2082 = vmax.f32 %v1249, 0.0
        %v2083 = vmax.f32 %v1408, 0.0
        %v2084 = vmax.f32 %v1410, 0.0
        %v2085 = vmax.f32 %v1569, 0.0
        %v2086 = vmax.f32 %v1571, 0.0
        %v2087 = vmax.f32 %v1730, 0.0
        %v2088 = vmax.f32 %v1732, 0.0
        %v2089 = vmax.f32 %v1891, 0.0
        %v2090 = vmax.f32 %v1893, 0.0
        %v2091 = vmax.f32 %v770, 0.0
        %v2092 = vmax.f32 %v772, 0.0
        %v2093 = vmax.f32 %v931, 0.0
        %v2094 = vmax.f32 %v933, 0.0
        %v2095 = vmax.f32 %v1092, 0.0
        %v2096 = vmax.f32 %v1094, 0.0
        %v2097 = vmax.f32 %v1253, 0.0
        %v2098 = vmax.f32 %v1255, 0.0
        %v2099 = vmax.f32 %v1414, 0.0
        %v2100 = vmax.f32 %v1416, 0.0
        %v2101 = vmax.f32 %v1575, 0.0
        %v2102 = vmax.f32 %v1577, 0.0
        %v2103 = vmax.f32 %v1736, 0.0
        %v2104 = vmax.f32 %v1738, 0.0
        %v2105 = vmax.f32 %v1897, 0.0
        %v2106 = vmax.f32 %v1899, 0.0
        %v2107 = vmax.f32 %v776, 0.0
        %v2108 = vmax.f32 %v778, 0.0
        %v2109 = vmax.f32 %v937, 0.0
        %v2110 = vmax.f32 %v939, 0.0
        %v2111 = vmax.f32 %v1098, 0.0
        %v2112 = vmax.f32 %v1100, 0.0
        %v2113 = vmax.f32 %v1259, 0.0
        %v2114 = vmax.f32 %v1261, 0.0
        %v2115 = vmax.f32 %v1420, 0.0
        %v2116 = vmax.f32 %v1422, 0.0
        %v2117 = vmax.f32 %v1581, 0.0
        %v2118 = vmax.f32 %v1583, 0.0
        %v2119 = vmax.f32 %v1742, 0.0
        %v2120 = vmax.f32 %v1744, 0.0
        %v2121 = vmax.f32 %v1903, 0.0
        %v2122 = vmax.f32 %v1905, 0.0
        %v2123 = vmax.f32 %v782, 0.0
        %v2124 = vmax.f32 %v784, 0.0
        %v2125 = vmax.f32 %v943, 0.0
        %v2126 = vmax.f32 %v945, 0.0
        %v2127 = vmax.f32 %v1104, 0.0
        %v2128 = vmax.f32 %v1106, 0.0
        %v2129 = vmax.f32 %v1265, 0.0
        %v2130 = vmax.f32 %v1267, 0.0
        %v2131 = vmax.f32 %v1426, 0.0
        %v2132 = vmax.f32 %v1428, 0.0
        %v2133 = vmax.f32 %v1587, 0.0
        %v2134 = vmax.f32 %v1589, 0.0
        %v2135 = vmax.f32 %v1748, 0.0
        %v2136 = vmax.f32 %v1750, 0.0
        %v2137 = vmax.f32 %v1909, 0.0
        %v2138 = vmax.f32 %v1911, 0.0
        %v2139 = vmax.f32 %v788, 0.0
        %v2140 = vmax.f32 %v790, 0.0
        %v2141 = vmax.f32 %v949, 0.0
        %v2142 = vmax.f32 %v951, 0.0
        %v2143 = vmax.f32 %v1110, 0.0
        %v2144 = vmax.f32 %v1112, 0.0
        %v2145 = vmax.f32 %v1271, 0.0
        %v2146 = vmax.f32 %v1273, 0.0
        %v2147 = vmax.f32 %v1432, 0.0
        %v2148 = vmax.f32 %v1434, 0.0
        %v2149 = vmax.f32 %v1593, 0.0
        %v2150 = vmax.f32 %v1595, 0.0
        %v2151 = vmax.f32 %v1754, 0.0
        %v2152 = vmax.f32 %v1756, 0.0
        %v2153 = vmax.f32 %v1915, 0.0
        %v2154 = vmax.f32 %v1917, 0.0
        %v2155 = vmax.f32 %v794, 0.0
        %v2156 = vmax.f32 %v796, 0.0
        %v2157 = vmax.f32 %v955, 0.0
        %v2158 = vmax.f32 %v957, 0.0
        %v2159 = vmax.f32 %v1116, 0.0
        %v2160 = vmax.f32 %v1118, 0.0
        %v2161 = vmax.f32 %v1277, 0.0
        %v2162 = vmax.f32 %v1279, 0.0
        %v2163 = vmax.f32 %v1438, 0.0
        %v2164 = vmax.f32 %v1440, 0.0
        %v2165 = vmax.f32 %v1599, 0.0
        %v2166 = vmax.f32 %v1601, 0.0
        %v2167 = vmax.f32 %v1760, 0.0
        %v2168 = vmax.f32 %v1762, 0.0
        %v2169 = vmax.f32 %v1921, 0.0
        %v2170 = vmax.f32 %v1923, 0.0
        %v2171 = vmax.f32 %v800, 0.0
        %v2172 = vmax.f32 %v802, 0.0
        %v2173 = vmax.f32 %v961, 0.0
        %v2174 = vmax.f32 %v963, 0.0
        %v2175 = vmax.f32 %v1122, 0.0
        %v2176 = vmax.f32 %v1124, 0.0
        %v2177 = vmax.f32 %v1283, 0.0
        %v2178 = vmax.f32 %v1285, 0.0
        %v2179 = vmax.f32 %v1444, 0.0
        %v2180 = vmax.f32 %v1446, 0.0
        %v2181 = vmax.f32 %v1605, 0.0
        %v2182 = vmax.f32 %v1607, 0.0
        %v2183 = vmax.f32 %v1766, 0.0
        %v2184 = vmax.f32 %v1768, 0.0
        %v2185 = vmax.f32 %v1927, 0.0
        %v2186 = vmax.f32 %v1929, 0.0
        %v2187 = vld [vmem:[#allocation8] sm:$0xff]
        %v2188 = vld [vmem:[#allocation8 + $0x8] sm:$0xff]
        %v2189 = vld [vmem:[#allocation8 + $0x10] sm:$0xff]
        %v2190 = vld [vmem:[#allocation8 + $0x18] sm:$0xff]
        %v2191 = vld [vmem:[#allocation8 + $0x20] sm:$0xff]
        %v2192 = vld [vmem:[#allocation8 + $0x28] sm:$0xff]
        %v2193 = vld [vmem:[#allocation8 + $0x30] sm:$0xff]
        %v2194 = vld [vmem:[#allocation8 + $0x38] sm:$0xff]
        %v2195 = vld [vmem:[#allocation8 + $0x40] sm:$0xff]
        %v2196 = vld [vmem:[#allocation8 + $0x48] sm:$0xff]
        %v2197 = vld [vmem:[#allocation8 + $0x50] sm:$0xff]
        %v2198 = vld [vmem:[#allocation8 + $0x58] sm:$0xff]
        %v2199 = vld [vmem:[#allocation8 + $0x60] sm:$0xff]
        %v2200 = vld [vmem:[#allocation8 + $0x68] sm:$0xff]
        %v2201 = vld [vmem:[#allocation8 + $0x70] sm:$0xff]
        %v2202 = vld [vmem:[#allocation8 + $0x78] sm:$0xff]
        %v2203 = vld [vmem:[#allocation8 + $0x80] sm:$0xff]
        %v2204 = vld [vmem:[#allocation8 + $0x88] sm:$0xff]
        %v2205 = vld [vmem:[#allocation8 + $0x90] sm:$0xff]
        %v2206 = vld [vmem:[#allocation8 + $0x98] sm:$0xff]
        %v2207 = vld [vmem:[#allocation8 + $0xa0] sm:$0xff]
        %v2208 = vld [vmem:[#allocation8 + $0xa8] sm:$0xff]
        %v2209 = vld [vmem:[#allocation8 + $0xb0] sm:$0xff]
        %v2210 = vld [vmem:[#allocation8 + $0xb8] sm:$0xff]
        %v2211 = vld [vmem:[#allocation8 + $0xc0] sm:$0xff]
        %v2212 = vld [vmem:[#allocation8 + $0xc8] sm:$0xff]
        %v2213 = vld [vmem:[#allocation8 + $0xd0] sm:$0xff]
        %v2214 = vld [vmem:[#allocation8 + $0xd8] sm:$0xff]
        %v2215 = vld [vmem:[#allocation8 + $0xe0] sm:$0xff]
        %v2216 = vld [vmem:[#allocation8 + $0xe8] sm:$0xff]
        %v2217 = vld [vmem:[#allocation8 + $0xf0] sm:$0xff]
        %v2218 = vld [vmem:[#allocation8 + $0xf8] sm:$0xff]
        %v2219 = vld [vmem:[#allocation8 + $0x100] sm:$0xff]
        %v2220 = vld [vmem:[#allocation8 + $0x108] sm:$0xff]
        %v2221 = vld [vmem:[#allocation8 + $0x110] sm:$0xff]
        %v2222 = vld [vmem:[#allocation8 + $0x118] sm:$0xff]
        %v2223 = vld [vmem:[#allocation8 + $0x120] sm:$0xff]
        %v2224 = vld [vmem:[#allocation8 + $0x128] sm:$0xff]
        %v2225 = vld [vmem:[#allocation8 + $0x130] sm:$0xff]
        %v2226 = vld [vmem:[#allocation8 + $0x138] sm:$0xff]
        %v2227 = vld [vmem:[#allocation8 + $0x140] sm:$0xff]
        %v2228 = vld [vmem:[#allocation8 + $0x148] sm:$0xff]
        %v2229 = vld [vmem:[#allocation8 + $0x150] sm:$0xff]
        %v2230 = vld [vmem:[#allocation8 + $0x158] sm:$0xff]
        %v2231 = vld [vmem:[#allocation8 + $0x160] sm:$0xff]
        %v2232 = vld [vmem:[#allocation8 + $0x168] sm:$0xff]
        %v2233 = vld [vmem:[#allocation8 + $0x170] sm:$0xff]
        %v2234 = vld [vmem:[#allocation8 + $0x178] sm:$0xff]
        %v2235 = vld [vmem:[#allocation8 + $0x180] sm:$0xff]
        %v2236 = vld [vmem:[#allocation8 + $0x188] sm:$0xff]
        %v2237 = vld [vmem:[#allocation8 + $0x190] sm:$0xff]
        %v2238 = vld [vmem:[#allocation8 + $0x198] sm:$0xff]
        %v2239 = vld [vmem:[#allocation8 + $0x1a0] sm:$0xff]
        %v2240 = vld [vmem:[#allocation8 + $0x1a8] sm:$0xff]
        %v2241 = vld [vmem:[#allocation8 + $0x1b0] sm:$0xff]
        %v2242 = vld [vmem:[#allocation8 + $0x1b8] sm:$0xff]
        %v2243 = vld [vmem:[#allocation8 + $0x1c0] sm:$0xff]
        %v2244 = vld [vmem:[#allocation8 + $0x1c8] sm:$0xff]
        %v2245 = vld [vmem:[#allocation8 + $0x1d0] sm:$0xff]
        %v2246 = vld [vmem:[#allocation8 + $0x1d8] sm:$0xff]
        %v2247 = vld [vmem:[#allocation8 + $0x1e0] sm:$0xff]
        %v2248 = vld [vmem:[#allocation8 + $0x1e8] sm:$0xff]
        %v2249 = vld [vmem:[#allocation8 + $0x1f0] sm:$0xff]
        %v2250 = vld [vmem:[#allocation8 + $0x1f8] sm:$0xff]
        %v2251 = vld [vmem:[#allocation8 + $0x200] sm:$0xff]
        %v2252 = vld [vmem:[#allocation8 + $0x208] sm:$0xff]
        %v2253 = vld [vmem:[#allocation8 + $0x210] sm:$0xff]
        %v2254 = vld [vmem:[#allocation8 + $0x218] sm:$0xff]
        %v2255 = vld [vmem:[#allocation8 + $0x220] sm:$0xff]
        %v2256 = vld [vmem:[#allocation8 + $0x228] sm:$0xff]
        %v2257 = vld [vmem:[#allocation8 + $0x230] sm:$0xff]
        %v2258 = vld [vmem:[#allocation8 + $0x238] sm:$0xff]
        %v2259 = vld [vmem:[#allocation8 + $0x240] sm:$0xff]
        %v2260 = vld [vmem:[#allocation8 + $0x248] sm:$0xff]
        %v2261 = vld [vmem:[#allocation8 + $0x250] sm:$0xff]
        %v2262 = vld [vmem:[#allocation8 + $0x258] sm:$0xff]
        %v2263 = vld [vmem:[#allocation8 + $0x260] sm:$0xff]
        %v2264 = vld [vmem:[#allocation8 + $0x268] sm:$0xff]
        %v2265 = vld [vmem:[#allocation8 + $0x270] sm:$0xff]
        %v2266 = vld [vmem:[#allocation8 + $0x278] sm:$0xff]
        %v2267 = vld [vmem:[#allocation8 + $0x280] sm:$0xff]
        %v2268 = vld [vmem:[#allocation8 + $0x288] sm:$0xff]
        %v2269 = vld [vmem:[#allocation8 + $0x290] sm:$0xff]
        %v2270 = vld [vmem:[#allocation8 + $0x298] sm:$0xff]
        %v2271 = vld [vmem:[#allocation8 + $0x2a0] sm:$0xff]
        %v2272 = vld [vmem:[#allocation8 + $0x2a8] sm:$0xff]
        %v2273 = vld [vmem:[#allocation8 + $0x2b0] sm:$0xff]
        %v2274 = vld [vmem:[#allocation8 + $0x2b8] sm:$0xff]
        %v2275 = vld [vmem:[#allocation8 + $0x2c0] sm:$0xff]
        %v2276 = vld [vmem:[#allocation8 + $0x2c8] sm:$0xff]
        %v2277 = vld [vmem:[#allocation8 + $0x2d0] sm:$0xff]
        %v2278 = vld [vmem:[#allocation8 + $0x2d8] sm:$0xff]
        %v2279 = vld [vmem:[#allocation8 + $0x2e0] sm:$0xff]
        %v2280 = vld [vmem:[#allocation8 + $0x2e8] sm:$0xff]
        %v2281 = vld [vmem:[#allocation8 + $0x2f0] sm:$0xff]
        %v2282 = vld [vmem:[#allocation8 + $0x2f8] sm:$0xff]
        %v2283 = vld [vmem:[#allocation8 + $0x300] sm:$0xff]
        %v2284 = vld [vmem:[#allocation8 + $0x308] sm:$0xff]
        %v2285 = vld [vmem:[#allocation8 + $0x310] sm:$0xff]
        %v2286 = vld [vmem:[#allocation8 + $0x318] sm:$0xff]
        %v2287 = vld [vmem:[#allocation8 + $0x320] sm:$0xff]
        %v2288 = vld [vmem:[#allocation8 + $0x328] sm:$0xff]
        %v2289 = vld [vmem:[#allocation8 + $0x330] sm:$0xff]
        %v2290 = vld [vmem:[#allocation8 + $0x338] sm:$0xff]
        %v2291 = vld [vmem:[#allocation8 + $0x340] sm:$0xff]
        %v2292 = vld [vmem:[#allocation8 + $0x348] sm:$0xff]
        %v2293 = vld [vmem:[#allocation8 + $0x350] sm:$0xff]
        %v2294 = vld [vmem:[#allocation8 + $0x358] sm:$0xff]
        %v2295 = vld [vmem:[#allocation8 + $0x360] sm:$0xff]
        %v2296 = vld [vmem:[#allocation8 + $0x368] sm:$0xff]
        %v2297 = vld [vmem:[#allocation8 + $0x370] sm:$0xff]
        %v2298 = vld [vmem:[#allocation8 + $0x378] sm:$0xff]
        %v2299 = vld [vmem:[#allocation8 + $0x380] sm:$0xff]
        %v2300 = vld [vmem:[#allocation8 + $0x388] sm:$0xff]
        %v2301 = vld [vmem:[#allocation8 + $0x390] sm:$0xff]
        %v2302 = vld [vmem:[#allocation8 + $0x398] sm:$0xff]
        %v2303 = vld [vmem:[#allocation8 + $0x3a0] sm:$0xff]
        %v2304 = vld [vmem:[#allocation8 + $0x3a8] sm:$0xff]
        %v2305 = vld [vmem:[#allocation8 + $0x3b0] sm:$0xff]
        %v2306 = vld [vmem:[#allocation8 + $0x3b8] sm:$0xff]
        %v2307 = vld [vmem:[#allocation8 + $0x3c0] sm:$0xff]
        %v2308 = vld [vmem:[#allocation8 + $0x3c8] sm:$0xff]
        %v2309 = vld [vmem:[#allocation8 + $0x3d0] sm:$0xff]
        %v2310 = vld [vmem:[#allocation8 + $0x3d8] sm:$0xff]
        %v2311 = vld [vmem:[#allocation8 + $0x3e0] sm:$0xff]
        %v2312 = vld [vmem:[#allocation8 + $0x3e8] sm:$0xff]
        %v2313 = vld [vmem:[#allocation8 + $0x3f0] sm:$0xff]
        %v2314 = vld [vmem:[#allocation8 + $0x3f8] sm:$0xff]
        %v2315 = vld [vmem:[#allocation8 + $0x400] sm:$0xff]
        %v2316 = vld [vmem:[#allocation8 + $0x408] sm:$0xff]
        %v2317 = vld [vmem:[#allocation8 + $0x410] sm:$0xff]
        %v2318 = vld [vmem:[#allocation8 + $0x418] sm:$0xff]
        %v2319 = vld [vmem:[#allocation8 + $0x420] sm:$0xff]
        %v2320 = vld [vmem:[#allocation8 + $0x428] sm:$0xff]
        %v2321 = vld [vmem:[#allocation8 + $0x430] sm:$0xff]
        %v2322 = vld [vmem:[#allocation8 + $0x438] sm:$0xff]
        %v2323 = vld [vmem:[#allocation8 + $0x440] sm:$0xff]
        %v2324 = vld [vmem:[#allocation8 + $0x448] sm:$0xff]
        %v2325 = vld [vmem:[#allocation8 + $0x450] sm:$0xff]
        %v2326 = vld [vmem:[#allocation8 + $0x458] sm:$0xff]
        %v2327 = vld [vmem:[#allocation8 + $0x460] sm:$0xff]
        %v2328 = vld [vmem:[#allocation8 + $0x468] sm:$0xff]
        %v2329 = vld [vmem:[#allocation8 + $0x470] sm:$0xff]
        %v2330 = vld [vmem:[#allocation8 + $0x478] sm:$0xff]
        %v2331 = vld [vmem:[#allocation8 + $0x480] sm:$0xff]
        %v2332 = vld [vmem:[#allocation8 + $0x488] sm:$0xff]
        %v2333 = vld [vmem:[#allocation8 + $0x490] sm:$0xff]
        %v2334 = vld [vmem:[#allocation8 + $0x498] sm:$0xff]
        %v2335 = vld [vmem:[#allocation8 + $0x4a0] sm:$0xff]
        %v2336 = vld [vmem:[#allocation8 + $0x4a8] sm:$0xff]
        %v2337 = vld [vmem:[#allocation8 + $0x4b0] sm:$0xff]
        %v2338 = vld [vmem:[#allocation8 + $0x4b8] sm:$0xff]
        %v2339 = vld [vmem:[#allocation8 + $0x4c0] sm:$0xff]
        %v2340 = vld [vmem:[#allocation8 + $0x4c8] sm:$0xff]
        %v2341 = vld [vmem:[#allocation8 + $0x4d0] sm:$0xff]
        %v2342 = vld [vmem:[#allocation8 + $0x4d8] sm:$0xff]
        %v2343 = vld [vmem:[#allocation8 + $0x4e0] sm:$0xff]
        %v2344 = vld [vmem:[#allocation8 + $0x4e8] sm:$0xff]
        %v2345 = vld [vmem:[#allocation8 + $0x4f0] sm:$0xff]
        %v2346 = vld [vmem:[#allocation8 + $0x4f8] sm:$0xff]
        %v2347 = vld [vmem:[#allocation8 + $0x500] sm:$0xff]
        %v2348 = vld [vmem:[#allocation8 + $0x508] sm:$0xff]
        %v2349 = vld [vmem:[#allocation8 + $0x510] sm:$0xff]
        %v2350 = vld [vmem:[#allocation8 + $0x518] sm:$0xff]
        %v2351 = vld [vmem:[#allocation8 + $0x520] sm:$0xff]
        %v2352 = vld [vmem:[#allocation8 + $0x528] sm:$0xff]
        %v2353 = vld [vmem:[#allocation8 + $0x530] sm:$0xff]
        %v2354 = vld [vmem:[#allocation8 + $0x538] sm:$0xff]
        %v2355 = vld [vmem:[#allocation8 + $0x540] sm:$0xff]
        %v2356 = vld [vmem:[#allocation8 + $0x548] sm:$0xff]
        %v2357 = vld [vmem:[#allocation8 + $0x550] sm:$0xff]
        %v2358 = vld [vmem:[#allocation8 + $0x558] sm:$0xff]
        %v2359 = vld [vmem:[#allocation8 + $0x560] sm:$0xff]
        %v2360 = vld [vmem:[#allocation8 + $0x568] sm:$0xff]
        %v2361 = vld [vmem:[#allocation8 + $0x570] sm:$0xff]
        %v2362 = vld [vmem:[#allocation8 + $0x578] sm:$0xff]
        %v2363 = vld [vmem:[#allocation8 + $0x580] sm:$0xff]
        %v2364 = vld [vmem:[#allocation8 + $0x588] sm:$0xff]
        %v2365 = vld [vmem:[#allocation8 + $0x590] sm:$0xff]
        %v2366 = vld [vmem:[#allocation8 + $0x598] sm:$0xff]
        %v2367 = vld [vmem:[#allocation8 + $0x5a0] sm:$0xff]
        %v2368 = vld [vmem:[#allocation8 + $0x5a8] sm:$0xff]
        %v2369 = vld [vmem:[#allocation8 + $0x5b0] sm:$0xff]
        %v2370 = vld [vmem:[#allocation8 + $0x5b8] sm:$0xff]
        %v2371 = vld [vmem:[#allocation8 + $0x5c0] sm:$0xff]
        %v2372 = vld [vmem:[#allocation8 + $0x5c8] sm:$0xff]
        %v2373 = vld [vmem:[#allocation8 + $0x5d0] sm:$0xff]
        %v2374 = vld [vmem:[#allocation8 + $0x5d8] sm:$0xff]
        %v2375 = vld [vmem:[#allocation8 + $0x5e0] sm:$0xff]
        %v2376 = vld [vmem:[#allocation8 + $0x5e8] sm:$0xff]
        %v2377 = vld [vmem:[#allocation8 + $0x5f0] sm:$0xff]
        %v2378 = vld [vmem:[#allocation8 + $0x5f8] sm:$0xff]
        %v2379 = vld [vmem:[#allocation8 + $0x600] sm:$0xff]
        %v2380 = vld [vmem:[#allocation8 + $0x608] sm:$0xff]
        %v2381 = vld [vmem:[#allocation8 + $0x610] sm:$0xff]
        %v2382 = vld [vmem:[#allocation8 + $0x618] sm:$0xff]
        %v2383 = vld [vmem:[#allocation8 + $0x620] sm:$0xff]
        %v2384 = vld [vmem:[#allocation8 + $0x628] sm:$0xff]
        %v2385 = vld [vmem:[#allocation8 + $0x630] sm:$0xff]
        %v2386 = vld [vmem:[#allocation8 + $0x638] sm:$0xff]
        %v2387 = vld [vmem:[#allocation8 + $0x640] sm:$0xff]
        %v2388 = vld [vmem:[#allocation8 + $0x648] sm:$0xff]
        %v2389 = vld [vmem:[#allocation8 + $0x650] sm:$0xff]
        %v2390 = vld [vmem:[#allocation8 + $0x658] sm:$0xff]
        %v2391 = vld [vmem:[#allocation8 + $0x660] sm:$0xff]
        %v2392 = vld [vmem:[#allocation8 + $0x668] sm:$0xff]
        %v2393 = vld [vmem:[#allocation8 + $0x670] sm:$0xff]
        %v2394 = vld [vmem:[#allocation8 + $0x678] sm:$0xff]
        %v2395 = vld [vmem:[#allocation8 + $0x680] sm:$0xff]
        %v2396 = vld [vmem:[#allocation8 + $0x688] sm:$0xff]
        %v2397 = vld [vmem:[#allocation8 + $0x690] sm:$0xff]
        %v2398 = vld [vmem:[#allocation8 + $0x698] sm:$0xff]
        %v2399 = vld [vmem:[#allocation8 + $0x6a0] sm:$0xff]
        %v2400 = vld [vmem:[#allocation8 + $0x6a8] sm:$0xff]
        %v2401 = vld [vmem:[#allocation8 + $0x6b0] sm:$0xff]
        %v2402 = vld [vmem:[#allocation8 + $0x6b8] sm:$0xff]
        %v2403 = vld [vmem:[#allocation8 + $0x6c0] sm:$0xff]
        %v2404 = vld [vmem:[#allocation8 + $0x6c8] sm:$0xff]
        %v2405 = vld [vmem:[#allocation8 + $0x6d0] sm:$0xff]
        %v2406 = vld [vmem:[#allocation8 + $0x6d8] sm:$0xff]
        %v2407 = vld [vmem:[#allocation8 + $0x6e0] sm:$0xff]
        %v2408 = vld [vmem:[#allocation8 + $0x6e8] sm:$0xff]
        %v2409 = vld [vmem:[#allocation8 + $0x6f0] sm:$0xff]
        %v2410 = vld [vmem:[#allocation8 + $0x6f8] sm:$0xff]
        %v2411 = vld [vmem:[#allocation8 + $0x700] sm:$0xff]
        %v2412 = vld [vmem:[#allocation8 + $0x708] sm:$0xff]
        %v2413 = vld [vmem:[#allocation8 + $0x710] sm:$0xff]
        %v2414 = vld [vmem:[#allocation8 + $0x718] sm:$0xff]
        %v2415 = vld [vmem:[#allocation8 + $0x720] sm:$0xff]
        %v2416 = vld [vmem:[#allocation8 + $0x728] sm:$0xff]
        %v2417 = vld [vmem:[#allocation8 + $0x730] sm:$0xff]
        %v2418 = vld [vmem:[#allocation8 + $0x738] sm:$0xff]
        %v2419 = vld [vmem:[#allocation8 + $0x740] sm:$0xff]
        %v2420 = vld [vmem:[#allocation8 + $0x748] sm:$0xff]
        %v2421 = vld [vmem:[#allocation8 + $0x750] sm:$0xff]
        %v2422 = vld [vmem:[#allocation8 + $0x758] sm:$0xff]
        %v2423 = vld [vmem:[#allocation8 + $0x760] sm:$0xff]
        %v2424 = vld [vmem:[#allocation8 + $0x768] sm:$0xff]
        %v2425 = vld [vmem:[#allocation8 + $0x770] sm:$0xff]
        %v2426 = vld [vmem:[#allocation8 + $0x778] sm:$0xff]
        %v2427 = vld [vmem:[#allocation8 + $0x780] sm:$0xff]
        %v2428 = vld [vmem:[#allocation8 + $0x788] sm:$0xff]
        %v2429 = vld [vmem:[#allocation8 + $0x790] sm:$0xff]
        %v2430 = vld [vmem:[#allocation8 + $0x798] sm:$0xff]
        %v2431 = vld [vmem:[#allocation8 + $0x7a0] sm:$0xff]
        %v2432 = vld [vmem:[#allocation8 + $0x7a8] sm:$0xff]
        %v2433 = vld [vmem:[#allocation8 + $0x7b0] sm:$0xff]
        %v2434 = vld [vmem:[#allocation8 + $0x7b8] sm:$0xff]
        %v2435 = vld [vmem:[#allocation8 + $0x7c0] sm:$0xff]
        %v2436 = vld [vmem:[#allocation8 + $0x7c8] sm:$0xff]
        %v2437 = vld [vmem:[#allocation8 + $0x7d0] sm:$0xff]
        %v2438 = vld [vmem:[#allocation8 + $0x7d8] sm:$0xff]
        %v2439 = vld [vmem:[#allocation8 + $0x7e0] sm:$0xff]
        %v2440 = vld [vmem:[#allocation8 + $0x7e8] sm:$0xff]
        %v2441 = vld [vmem:[#allocation8 + $0x7f0] sm:$0xff]
        %v2442 = vld [vmem:[#allocation8 + $0x7f8] sm:$0xff]
        %v2443 = vld [vmem:[%s4] sm:$0x1]
        %v2445 = vlaneseq
        %v2446 = vshrl.u32 %v2445, 7
        %v2447 = vsub.s32 0, %v2446
        %v2448 = vrot.slane %v2443, %v2447
        %2450 = vmatprep.subr.mxu0 0.0
        %2451 = vmatpush1.msra.mxu0 %v2187
        %2452 = vmatprep.subr.mxu0 0.0
        %2453 = vmatpush1.msra.mxu0 %v2188
        %2454 = vmatprep.subr.mxu0 0.0
        %2455 = vmatpush1.msra.mxu0 %v2189
        %2456 = vmatprep.subr.mxu0 0.0
        %2457 = vmatpush1.msra.mxu0 %v2190
        %2458 = vmatprep.subr.mxu0 0.0
        %2459 = vmatpush1.msra.mxu0 %v2191
        %2460 = vmatprep.subr.mxu0 0.0
        %2461 = vmatpush1.msra.mxu0 %v2192
        %2462 = vmatprep.subr.mxu0 0.0
        %2463 = vmatpush1.msra.mxu0 %v2193
        %2464 = vmatprep.subr.mxu0 0.0
        %2465 = vmatpush1.msra.mxu0 %v2194
        %2466 = vmatprep.subr.mxu0 0.0
        %2467 = vmatpush1.msra.mxu0 %v2195
        %2468 = vmatprep.subr.mxu0 0.0
        %2469 = vmatpush1.msra.mxu0 %v2196
        %2470 = vmatprep.subr.mxu0 0.0
        %2471 = vmatpush1.msra.mxu0 %v2197
        %2472 = vmatprep.subr.mxu0 0.0
        %2473 = vmatpush1.msra.mxu0 %v2198
        %2474 = vmatprep.subr.mxu0 0.0
        %2475 = vmatpush1.msra.mxu0 %v2199
        %2476 = vmatprep.subr.mxu0 0.0
        %2477 = vmatpush1.msra.mxu0 %v2200
        %2478 = vmatprep.subr.mxu0 0.0
        %2479 = vmatpush1.msra.mxu0 %v2201
        %2480 = vmatprep.subr.mxu0 0.0
        %2481 = vmatpush1.msra.mxu0 %v2202
        %2482 = vmatprep.subr.mxu0 0.0
        %2483 = vmatpush1.msra.mxu0 %v2203
        %2484 = vmatprep.subr.mxu0 0.0
        %2485 = vmatpush1.msra.mxu0 %v2204
        %2486 = vmatprep.subr.mxu0 0.0
        %2487 = vmatpush1.msra.mxu0 %v2205
        %2488 = vmatprep.subr.mxu0 0.0
        %2489 = vmatpush1.msra.mxu0 %v2206
        %2490 = vmatprep.subr.mxu0 0.0
        %2491 = vmatpush1.msra.mxu0 %v2207
        %2492 = vmatprep.subr.mxu0 0.0
        %2493 = vmatpush1.msra.mxu0 %v2208
        %2494 = vmatprep.subr.mxu0 0.0
        %2495 = vmatpush1.msra.mxu0 %v2209
        %2496 = vmatprep.subr.mxu0 0.0
        %2497 = vmatpush1.msra.mxu0 %v2210
        %2498 = vmatprep.subr.mxu0 0.0
        %2499 = vmatpush1.msra.mxu0 %v2211
        %2500 = vmatprep.subr.mxu0 0.0
        %2501 = vmatpush1.msra.mxu0 %v2212
        %2502 = vmatprep.subr.mxu0 0.0
        %2503 = vmatpush1.msra.mxu0 %v2213
        %2504 = vmatprep.subr.mxu0 0.0
        %2505 = vmatpush1.msra.mxu0 %v2214
        %2506 = vmatprep.subr.mxu0 0.0
        %2507 = vmatpush1.msra.mxu0 %v2215
        %2508 = vmatprep.subr.mxu0 0.0
        %2509 = vmatpush1.msra.mxu0 %v2216
        %2510 = vmatprep.subr.mxu0 0.0
        %2511 = vmatpush1.msra.mxu0 %v2217
        %2512 = vmatprep.subr.mxu0 0.0
        %2513 = vmatpush1.msra.mxu0 %v2218
        %2514 = vmatprep.mubr.f32.mxu0 %v1932
        %2515 = vmatmul.mubr.f32.gmra.mrb[0].mxu0 %v1931
        %v2516 = vpop.f32.mrb[0].mxu0
        %v2517 = vadd.f32 %v2448, %v2516
        %v2518 = vpop.f32.mrb[0].mxu0
        %2519 = vmatprep.mubr.f32.mxu0 %v1948
        %2520 = vmatmul.mubr.f32.gmra.mrb[0].mxu0 %v1947
        %v2521 = vpop.f32.mrb[0].mxu0
        %v2522 = vadd.f32 %v2448, %v2521
        %v2523 = vpop.f32.mrb[0].mxu0
        %2524 = vmatprep.mubr.f32.mxu0 %v1964
        %2525 = vmatmul.mubr.f32.gmra.mrb[0].mxu0 %v1963
        %v2526 = vpop.f32.mrb[0].mxu0
        %v2527 = vadd.f32 %v2448, %v2526
        %v2528 = vpop.f32.mrb[0].mxu0
        %2529 = vmatprep.mubr.f32.mxu0 %v1980
        %2530 = vmatmul.mubr.f32.gmra.mrb[0].mxu0 %v1979
        %v2531 = vpop.f32.mrb[0].mxu0
        %v2532 = vadd.f32 %v2448, %v2531
        %v2533 = vpop.f32.mrb[0].mxu0
        %2534 = vmatprep.mubr.f32.mxu0 %v1996
        %2535 = vmatmul.mubr.f32.gmra.mrb[0].mxu0 %v1995
        %v2536 = vpop.f32.mrb[0].mxu0
        %v2537 = vadd.f32 %v2448, %v2536
        %v2538 = vpop.f32.mrb[0].mxu0
        %2539 = vmatprep.mubr.f32.mxu0 %v2012
        %2540 = vmatmul.mubr.f32.gmra.mrb[0].mxu0 %v2011
        %v2541 = vpop.f32.mrb[0].mxu0
        %v2542 = vadd.f32 %v2448, %v2541
        %v2543 = vpop.f32.mrb[0].mxu0
        %2544 = vmatprep.mubr.f32.mxu0 %v2028
        %2545 = vmatmul.mubr.f32.gmra.mrb[0].mxu0 %v2027
        %v2546 = vpop.f32.mrb[0].mxu0
        %v2547 = vadd.f32 %v2448, %v2546
        %v2548 = vpop.f32.mrb[0].mxu0
        %2549 = vmatprep.mubr.f32.mxu0 %v2044
        %2550 = vmatmul.mubr.f32.gmra.mrb[0].mxu0 %v2043
        %v2551 = vpop.f32.mrb[0].mxu0
        %v2552 = vadd.f32 %v2448, %v2551
        %v2553 = vpop.f32.mrb[0].mxu0
        %2554 = vmatprep.mubr.f32.mxu0 %v2060
        %2555 = vmatmul.mubr.f32.gmra.mrb[0].mxu0 %v2059
        %v2556 = vpop.f32.mrb[0].mxu0
        %v2557 = vadd.f32 %v2448, %v2556
        %v2558 = vpop.f32.mrb[0].mxu0
        %2559 = vmatprep.mubr.f32.mxu0 %v2076
        %2560 = vmatmul.mubr.f32.gmra.mrb[0].mxu0 %v2075
        %v2561 = vpop.f32.mrb[0].mxu0
        %v2562 = vadd.f32 %v2448, %v2561
        %v2563 = vpop.f32.mrb[0].mxu0
        %2564 = vmatprep.mubr.f32.mxu0 %v2092
        %2565 = vmatmul.mubr.f32.gmra.mrb[0].mxu0 %v2091
        %v2566 = vpop.f32.mrb[0].mxu0
        %v2567 = vadd.f32 %v2448, %v2566
        %v2568 = vpop.f32.mrb[0].mxu0
        %2569 = vmatprep.mubr.f32.mxu0 %v2108
        %2570 = vmatmul.mubr.f32.gmra.mrb[0].mxu0 %v2107
        %v2571 = vpop.f32.mrb[0].mxu0
        %v2572 = vadd.f32 %v2448, %v2571
        %v2573 = vpop.f32.mrb[0].mxu0
        %2574 = vmatprep.mubr.f32.mxu0 %v2124
        %2575 = vmatmul.mubr.f32.gmra.mrb[0].mxu0 %v2123
        %v2576 = vpop.f32.mrb[0].mxu0
        %v2577 = vadd.f32 %v2448, %v2576
        %v2578 = vpop.f32.mrb[0].mxu0
        %2579 = vmatprep.mubr.f32.mxu0 %v2140
        %2580 = vmatmul.mubr.f32.gmra.mrb[0].mxu0 %v2139
        %v2581 = vpop.f32.mrb[0].mxu0
        %v2582 = vadd.f32 %v2448, %v2581
        %v2583 = vpop.f32.mrb[0].mxu0
        %2584 = vmatprep.mubr.f32.mxu0 %v2156
        %2585 = vmatmul.mubr.f32.gmra.mrb[0].mxu0 %v2155
        %v2586 = vpop.f32.mrb[0].mxu0
        %v2587 = vadd.f32 %v2448, %v2586
        %v2588 = vpop.f32.mrb[0].mxu0
        %2589 = vmatprep.mubr.f32.mxu0 %v2172
        %2590 = vmatmul.mubr.f32.gmra.mrb[0].mxu0 %v2171
        %v2591 = vpop.f32.mrb[0].mxu0
        %v2592 = vadd.f32 %v2448, %v2591
        %v2593 = vpop.f32.mrb[0].mxu0
        %2594 = vdwg.mxu0
        %2595 = vmatprep.subr.mxu0 0.0
        %2596 = vmatpush1.msra.mxu0 %v2219
        %2597 = vmatprep.subr.mxu0 0.0
        %2598 = vmatpush1.msra.mxu0 %v2220
        %2599 = vmatprep.subr.mxu0 0.0
        %2600 = vmatpush1.msra.mxu0 %v2221
        %2601 = vmatprep.subr.mxu0 0.0
        %2602 = vmatpush1.msra.mxu0 %v2222
        %2603 = vmatprep.subr.mxu0 0.0
        %2604 = vmatpush1.msra.mxu0 %v2223
        %2605 = vmatprep.subr.mxu0 0.0
        %2606 = vmatpush1.msra.mxu0 %v2224
        %2607 = vmatprep.subr.mxu0 0.0
        %2608 = vmatpush1.msra.mxu0 %v2225
        %2609 = vmatprep.subr.mxu0 0.0
        %2610 = vmatpush1.msra.mxu0 %v2226
        %2611 = vmatprep.subr.mxu0 0.0
        %2612 = vmatpush1.msra.mxu0 %v2227
        %2613 = vmatprep.subr.mxu0 0.0
        %2614 = vmatpush1.msra.mxu0 %v2228
        %2615 = vmatprep.subr.mxu0 0.0
        %2616 = vmatpush1.msra.mxu0 %v2229
        %2617 = vmatprep.subr.mxu0 0.0
        %2618 = vmatpush1.msra.mxu0 %v2230
        %2619 = vmatprep.subr.mxu0 0.0
        %2620 = vmatpush1.msra.mxu0 %v2231
        %2621 = vmatprep.subr.mxu0 0.0
        %2622 = vmatpush1.msra.mxu0 %v2232
        %2623 = vmatprep.subr.mxu0 0.0
        %2624 = vmatpush1.msra.mxu0 %v2233
        %2625 = vmatprep.subr.mxu0 0.0
        %2626 = vmatpush1.msra.mxu0 %v2234
        %2627 = vmatprep.subr.mxu0 0.0
        %2628 = vmatpush1.msra.mxu0 %v2235
        %2629 = vmatprep.subr.mxu0 0.0
        %2630 = vmatpush1.msra.mxu0 %v2236
        %2631 = vmatprep.subr.mxu0 0.0
        %2632 = vmatpush1.msra.mxu0 %v2237
        %2633 = vmatprep.subr.mxu0 0.0
        %2634 = vmatpush1.msra.mxu0 %v2238
        %2635 = vmatprep.subr.mxu0 0.0
        %2636 = vmatpush1.msra.mxu0 %v2239
        %2637 = vmatprep.subr.mxu0 0.0
        %2638 = vmatpush1.msra.mxu0 %v2240
        %2639 = vmatprep.subr.mxu0 0.0
        %2640 = vmatpush1.msra.mxu0 %v2241
        %2641 = vmatprep.subr.mxu0 0.0
        %2642 = vmatpush1.msra.mxu0 %v2242
        %2643 = vmatprep.subr.mxu0 0.0
        %2644 = vmatpush1.msra.mxu0 %v2243
        %2645 = vmatprep.subr.mxu0 0.0
        %2646 = vmatpush1.msra.mxu0 %v2244
        %2647 = vmatprep.subr.mxu0 0.0
        %2648 = vmatpush1.msra.mxu0 %v2245
        %2649 = vmatprep.subr.mxu0 0.0
        %2650 = vmatpush1.msra.mxu0 %v2246
        %2651 = vmatprep.subr.mxu0 0.0
        %2652 = vmatpush1.msra.mxu0 %v2247
        %2653 = vmatprep.subr.mxu0 0.0
        %2654 = vmatpush1.msra.mxu0 %v2248
        %2655 = vmatprep.subr.mxu0 0.0
        %2656 = vmatpush1.msra.mxu0 %v2249
        %2657 = vmatprep.subr.mxu0 0.0
        %2658 = vmatpush1.msra.mxu0 %v2250
        %2659 = vmatprep.mubr.f32.mxu0 %v1934
        %2660 = vmatmul.mubr.f32.gmra.mrb[0].mxu0 %v1933
        %v2661 = vpop.f32.mrb[0].mxu0
        %v2662 = vadd.f32 %v2517, %v2661
        %v2663 = vpop.f32.mrb[0].mxu0
        %2664 = vmatprep.mubr.f32.mxu0 %v1950
        %2665 = vmatmul.mubr.f32.gmra.mrb[0].mxu0 %v1949
        %v2666 = vpop.f32.mrb[0].mxu0
        %v2667 = vadd.f32 %v2522, %v2666
        %v2668 = vpop.f32.mrb[0].mxu0
        %2669 = vmatprep.mubr.f32.mxu0 %v1966
        %2670 = vmatmul.mubr.f32.gmra.mrb[0].mxu0 %v1965
        %v2671 = vpop.f32.mrb[0].mxu0
        %v2672 = vadd.f32 %v2527, %v2671
        %v2673 = vpop.f32.mrb[0].mxu0
        %2674 = vmatprep.mubr.f32.mxu0 %v1982
        %2675 = vmatmul.mubr.f32.gmra.mrb[0].mxu0 %v1981
        %v2676 = vpop.f32.mrb[0].mxu0
        %v2677 = vadd.f32 %v2532, %v2676
        %v2678 = vpop.f32.mrb[0].mxu0
        %2679 = vmatprep.mubr.f32.mxu0 %v1998
        %2680 = vmatmul.mubr.f32.gmra.mrb[0].mxu0 %v1997
        %v2681 = vpop.f32.mrb[0].mxu0
        %v2682 = vadd.f32 %v2537, %v2681
        %v2683 = vpop.f32.mrb[0].mxu0
        %2684 = vmatprep.mubr.f32.mxu0 %v2014
        %2685 = vmatmul.mubr.f32.gmra.mrb[0].mxu0 %v2013
        %v2686 = vpop.f32.mrb[0].mxu0
        %v2687 = vadd.f32 %v2542, %v2686
        %v2688 = vpop.f32.mrb[0].mxu0
        %2689 = vmatprep.mubr.f32.mxu0 %v2030
        %2690 = vmatmul.mubr.f32.gmra.mrb[0].mxu0 %v2029
        %v2691 = vpop.f32.mrb[0].mxu0
        %v2692 = vadd.f32 %v2547, %v2691
        %v2693 = vpop.f32.mrb[0].mxu0
        %2694 = vmatprep.mubr.f32.mxu0 %v2046
        %2695 = vmatmul.mubr.f32.gmra.mrb[0].mxu0 %v2045
        %v2696 = vpop.f32.mrb[0].mxu0
        %v2697 = vadd.f32 %v2552, %v2696
        %v2698 = vpop.f32.mrb[0].mxu0
        %2699 = vmatprep.mubr.f32.mxu0 %v2062
        %2700 = vmatmul.mubr.f32.gmra.mrb[0].mxu0 %v2061
        %v2701 = vpop.f32.mrb[0].mxu0
        %v2702 = vadd.f32 %v2557, %v2701
        %v2703 = vpop.f32.mrb[0].mxu0
        %2704 = vmatprep.mubr.f32.mxu0 %v2078
        %2705 = vmatmul.mubr.f32.gmra.mrb[0].mxu0 %v2077
        %v2706 = vpop.f32.mrb[0].mxu0
        %v2707 = vadd.f32 %v2562, %v2706
        %v2708 = vpop.f32.mrb[0].mxu0
        %2709 = vmatprep.mubr.f32.mxu0 %v2094
        %2710 = vmatmul.mubr.f32.gmra.mrb[0].mxu0 %v2093
        %v2711 = vpop.f32.mrb[0].mxu0
        %v2712 = vadd.f32 %v2567, %v2711
        %v2713 = vpop.f32.mrb[0].mxu0
        %2714 = vmatprep.mubr.f32.mxu0 %v2110
        %2715 = vmatmul.mubr.f32.gmra.mrb[0].mxu0 %v2109
        %v2716 = vpop.f32.mrb[0].mxu0
        %v2717 = vadd.f32 %v2572, %v2716
        %v2718 = vpop.f32.mrb[0].mxu0
        %2719 = vmatprep.mubr.f32.mxu0 %v2126
        %2720 = vmatmul.mubr.f32.gmra.mrb[0].mxu0 %v2125
        %v2721 = vpop.f32.mrb[0].mxu0
        %v2722 = vadd.f32 %v2577, %v2721
        %v2723 = vpop.f32.mrb[0].mxu0
        %2724 = vmatprep.mubr.f32.mxu0 %v2142
        %2725 = vmatmul.mubr.f32.gmra.mrb[0].mxu0 %v2141
        %v2726 = vpop.f32.mrb[0].mxu0
        %v2727 = vadd.f32 %v2582, %v2726
        %v2728 = vpop.f32.mrb[0].mxu0
        %2729 = vmatprep.mubr.f32.mxu0 %v2158
        %2730 = vmatmul.mubr.f32.gmra.mrb[0].mxu0 %v2157
        %v2731 = vpop.f32.mrb[0].mxu0
        %v2732 = vadd.f32 %v2587, %v2731
        %v2733 = vpop.f32.mrb[0].mxu0
        %2734 = vmatprep.mubr.f32.mxu0 %v2174
        %2735 = vmatmul.mubr.f32.gmra.mrb[0].mxu0 %v2173
        %v2736 = vpop.f32.mrb[0].mxu0
        %v2737 = vadd.f32 %v2592, %v2736
        %v2738 = vpop.f32.mrb[0].mxu0
        %2739 = vdwg.mxu0
        %2740 = vmatprep.subr.mxu0 0.0
        %2741 = vmatpush1.msra.mxu0 %v2251
        %2742 = vmatprep.subr.mxu0 0.0
        %2743 = vmatpush1.msra.mxu0 %v2252
        %2744 = vmatprep.subr.mxu0 0.0
        %2745 = vmatpush1.msra.mxu0 %v2253
        %2746 = vmatprep.subr.mxu0 0.0
        %2747 = vmatpush1.msra.mxu0 %v2254
        %2748 = vmatprep.subr.mxu0 0.0
        %2749 = vmatpush1.msra.mxu0 %v2255
        %2750 = vmatprep.subr.mxu0 0.0
        %2751 = vmatpush1.msra.mxu0 %v2256
        %2752 = vmatprep.subr.mxu0 0.0
        %2753 = vmatpush1.msra.mxu0 %v2257
        %2754 = vmatprep.subr.mxu0 0.0
        %2755 = vmatpush1.msra.mxu0 %v2258
        %2756 = vmatprep.subr.mxu0 0.0
        %2757 = vmatpush1.msra.mxu0 %v2259
        %2758 = vmatprep.subr.mxu0 0.0
        %2759 = vmatpush1.msra.mxu0 %v2260
        %2760 = vmatprep.subr.mxu0 0.0
        %2761 = vmatpush1.msra.mxu0 %v2261
        %2762 = vmatprep.subr.mxu0 0.0
        %2763 = vmatpush1.msra.mxu0 %v2262
        %2764 = vmatprep.subr.mxu0 0.0
        %2765 = vmatpush1.msra.mxu0 %v2263
        %2766 = vmatprep.subr.mxu0 0.0
        %2767 = vmatpush1.msra.mxu0 %v2264
        %2768 = vmatprep.subr.mxu0 0.0
        %2769 = vmatpush1.msra.mxu0 %v2265
        %2770 = vmatprep.subr.mxu0 0.0
        %2771 = vmatpush1.msra.mxu0 %v2266
        %2772 = vmatprep.subr.mxu0 0.0
        %2773 = vmatpush1.msra.mxu0 %v2267
        %2774 = vmatprep.subr.mxu0 0.0
        %2775 = vmatpush1.msra.mxu0 %v2268
        %2776 = vmatprep.subr.mxu0 0.0
        %2777 = vmatpush1.msra.mxu0 %v2269
        %2778 = vmatprep.subr.mxu0 0.0
        %2779 = vmatpush1.msra.mxu0 %v2270
        %2780 = vmatprep.subr.mxu0 0.0
        %2781 = vmatpush1.msra.mxu0 %v2271
        %2782 = vmatprep.subr.mxu0 0.0
        %2783 = vmatpush1.msra.mxu0 %v2272
        %2784 = vmatprep.subr.mxu0 0.0
        %2785 = vmatpush1.msra.mxu0 %v2273
        %2786 = vmatprep.subr.mxu0 0.0
        %2787 = vmatpush1.msra.mxu0 %v2274
        %2788 = vmatprep.subr.mxu0 0.0
        %2789 = vmatpush1.msra.mxu0 %v2275
        %2790 = vmatprep.subr.mxu0 0.0
        %2791 = vmatpush1.msra.mxu0 %v2276
        %2792 = vmatprep.subr.mxu0 0.0
        %2793 = vmatpush1.msra.mxu0 %v2277
        %2794 = vmatprep.subr.mxu0 0.0
        %2795 = vmatpush1.msra.mxu0 %v2278
        %2796 = vmatprep.subr.mxu0 0.0
        %2797 = vmatpush1.msra.mxu0 %v2279
        %2798 = vmatprep.subr.mxu0 0.0
        %2799 = vmatpush1.msra.mxu0 %v2280
        %2800 = vmatprep.subr.mxu0 0.0
        %2801 = vmatpush1.msra.mxu0 %v2281
        %2802 = vmatprep.subr.mxu0 0.0
        %2803 = vmatpush1.msra.mxu0 %v2282
        %2804 = vmatprep.mubr.f32.mxu0 %v1936
        %2805 = vmatmul.mubr.f32.gmra.mrb[0].mxu0 %v1935
        %v2806 = vpop.f32.mrb[0].mxu0
        %v2807 = vadd.f32 %v2662, %v2806
        %v2808 = vpop.f32.mrb[0].mxu0
        %2809 = vmatprep.mubr.f32.mxu0 %v1952
        %2810 = vmatmul.mubr.f32.gmra.mrb[0].mxu0 %v1951
        %v2811 = vpop.f32.mrb[0].mxu0
        %v2812 = vadd.f32 %v2667, %v2811
        %v2813 = vpop.f32.mrb[0].mxu0
        %2814 = vmatprep.mubr.f32.mxu0 %v1968
        %2815 = vmatmul.mubr.f32.gmra.mrb[0].mxu0 %v1967
        %v2816 = vpop.f32.mrb[0].mxu0
        %v2817 = vadd.f32 %v2672, %v2816
        %v2818 = vpop.f32.mrb[0].mxu0
        %2819 = vmatprep.mubr.f32.mxu0 %v1984
        %2820 = vmatmul.mubr.f32.gmra.mrb[0].mxu0 %v1983
        %v2821 = vpop.f32.mrb[0].mxu0
        %v2822 = vadd.f32 %v2677, %v2821
        %v2823 = vpop.f32.mrb[0].mxu0
        %2824 = vmatprep.mubr.f32.mxu0 %v2000
        %2825 = vmatmul.mubr.f32.gmra.mrb[0].mxu0 %v1999
        %v2826 = vpop.f32.mrb[0].mxu0
        %v2827 = vadd.f32 %v2682, %v2826
        %v2828 = vpop.f32.mrb[0].mxu0
        %2829 = vmatprep.mubr.f32.mxu0 %v2016
        %2830 = vmatmul.mubr.f32.gmra.mrb[0].mxu0 %v2015
        %v2831 = vpop.f32.mrb[0].mxu0
        %v2832 = vadd.f32 %v2687, %v2831
        %v2833 = vpop.f32.mrb[0].mxu0
        %2834 = vmatprep.mubr.f32.mxu0 %v2032
        %2835 = vmatmul.mubr.f32.gmra.mrb[0].mxu0 %v2031
        %v2836 = vpop.f32.mrb[0].mxu0
        %v2837 = vadd.f32 %v2692, %v2836
        %v2838 = vpop.f32.mrb[0].mxu0
        %2839 = vmatprep.mubr.f32.mxu0 %v2048
        %2840 = vmatmul.mubr.f32.gmra.mrb[0].mxu0 %v2047
        %v2841 = vpop.f32.mrb[0].mxu0
        %v2842 = vadd.f32 %v2697, %v2841
        %v2843 = vpop.f32.mrb[0].mxu0
        %2844 = vmatprep.mubr.f32.mxu0 %v2064
        %2845 = vmatmul.mubr.f32.gmra.mrb[0].mxu0 %v2063
        %v2846 = vpop.f32.mrb[0].mxu0
        %v2847 = vadd.f32 %v2702, %v2846
        %v2848 = vpop.f32.mrb[0].mxu0
        %2849 = vmatprep.mubr.f32.mxu0 %v2080
        %2850 = vmatmul.mubr.f32.gmra.mrb[0].mxu0 %v2079
        %v2851 = vpop.f32.mrb[0].mxu0
        %v2852 = vadd.f32 %v2707, %v2851
        %v2853 = vpop.f32.mrb[0].mxu0
        %2854 = vmatprep.mubr.f32.mxu0 %v2096
        %2855 = vmatmul.mubr.f32.gmra.mrb[0].mxu0 %v2095
        %v2856 = vpop.f32.mrb[0].mxu0
        %v2857 = vadd.f32 %v2712, %v2856
        %v2858 = vpop.f32.mrb[0].mxu0
        %2859 = vmatprep.mubr.f32.mxu0 %v2112
        %2860 = vmatmul.mubr.f32.gmra.mrb[0].mxu0 %v2111
        %v2861 = vpop.f32.mrb[0].mxu0
        %v2862 = vadd.f32 %v2717, %v2861
        %v2863 = vpop.f32.mrb[0].mxu0
        %2864 = vmatprep.mubr.f32.mxu0 %v2128
        %2865 = vmatmul.mubr.f32.gmra.mrb[0].mxu0 %v2127
        %v2866 = vpop.f32.mrb[0].mxu0
        %v2867 = vadd.f32 %v2722, %v2866
        %v2868 = vpop.f32.mrb[0].mxu0
        %2869 = vmatprep.mubr.f32.mxu0 %v2144
        %2870 = vmatmul.mubr.f32.gmra.mrb[0].mxu0 %v2143
        %v2871 = vpop.f32.mrb[0].mxu0
        %v2872 = vadd.f32 %v2727, %v2871
        %v2873 = vpop.f32.mrb[0].mxu0
        %2874 = vmatprep.mubr.f32.mxu0 %v2160
        %2875 = vmatmul.mubr.f32.gmra.mrb[0].mxu0 %v2159
        %v2876 = vpop.f32.mrb[0].mxu0
        %v2877 = vadd.f32 %v2732, %v2876
        %v2878 = vpop.f32.mrb[0].mxu0
        %2879 = vmatprep.mubr.f32.mxu0 %v2176
        %2880 = vmatmul.mubr.f32.gmra.mrb[0].mxu0 %v2175
        %v2881 = vpop.f32.mrb[0].mxu0
        %v2882 = vadd.f32 %v2737, %v2881
        %v2883 = vpop.f32.mrb[0].mxu0
        %2884 = vdwg.mxu0
        %2885 = vmatprep.subr.mxu0 0.0
        %2886 = vmatpush1.msra.mxu0 %v2283
        %2887 = vmatprep.subr.mxu0 0.0
        %2888 = vmatpush1.msra.mxu0 %v2284
        %2889 = vmatprep.subr.mxu0 0.0
        %2890 = vmatpush1.msra.mxu0 %v2285
        %2891 = vmatprep.subr.mxu0 0.0
        %2892 = vmatpush1.msra.mxu0 %v2286
        %2893 = vmatprep.subr.mxu0 0.0
        %2894 = vmatpush1.msra.mxu0 %v2287
        %2895 = vmatprep.subr.mxu0 0.0
        %2896 = vmatpush1.msra.mxu0 %v2288
        %2897 = vmatprep.subr.mxu0 0.0
        %2898 = vmatpush1.msra.mxu0 %v2289
        %2899 = vmatprep.subr.mxu0 0.0
        %2900 = vmatpush1.msra.mxu0 %v2290
        %2901 = vmatprep.subr.mxu0 0.0
        %2902 = vmatpush1.msra.mxu0 %v2291
        %2903 = vmatprep.subr.mxu0 0.0
        %2904 = vmatpush1.msra.mxu0 %v2292
        %2905 = vmatprep.subr.mxu0 0.0
        %2906 = vmatpush1.msra.mxu0 %v2293
        %2907 = vmatprep.subr.mxu0 0.0
        %2908 = vmatpush1.msra.mxu0 %v2294
        %2909 = vmatprep.subr.mxu0 0.0
        %2910 = vmatpush1.msra.mxu0 %v2295
        %2911 = vmatprep.subr.mxu0 0.0
        %2912 = vmatpush1.msra.mxu0 %v2296
        %2913 = vmatprep.subr.mxu0 0.0
        %2914 = vmatpush1.msra.mxu0 %v2297
        %2915 = vmatprep.subr.mxu0 0.0
        %2916 = vmatpush1.msra.mxu0 %v2298
        %2917 = vmatprep.subr.mxu0 0.0
        %2918 = vmatpush1.msra.mxu0 %v2299
        %2919 = vmatprep.subr.mxu0 0.0
        %2920 = vmatpush1.msra.mxu0 %v2300
        %2921 = vmatprep.subr.mxu0 0.0
        %2922 = vmatpush1.msra.mxu0 %v2301
        %2923 = vmatprep.subr.mxu0 0.0
        %2924 = vmatpush1.msra.mxu0 %v2302
        %2925 = vmatprep.subr.mxu0 0.0
        %2926 = vmatpush1.msra.mxu0 %v2303
        %2927 = vmatprep.subr.mxu0 0.0
        %2928 = vmatpush1.msra.mxu0 %v2304
        %2929 = vmatprep.subr.mxu0 0.0
        %2930 = vmatpush1.msra.mxu0 %v2305
        %2931 = vmatprep.subr.mxu0 0.0
        %2932 = vmatpush1.msra.mxu0 %v2306
        %2933 = vmatprep.subr.mxu0 0.0
        %2934 = vmatpush1.msra.mxu0 %v2307
        %2935 = vmatprep.subr.mxu0 0.0
        %2936 = vmatpush1.msra.mxu0 %v2308
        %2937 = vmatprep.subr.mxu0 0.0
        %2938 = vmatpush1.msra.mxu0 %v2309
        %2939 = vmatprep.subr.mxu0 0.0
        %2940 = vmatpush1.msra.mxu0 %v2310
        %2941 = vmatprep.subr.mxu0 0.0
        %2942 = vmatpush1.msra.mxu0 %v2311
        %2943 = vmatprep.subr.mxu0 0.0
        %2944 = vmatpush1.msra.mxu0 %v2312
        %2945 = vmatprep.subr.mxu0 0.0
        %2946 = vmatpush1.msra.mxu0 %v2313
        %2947 = vmatprep.subr.mxu0 0.0
        %2948 = vmatpush1.msra.mxu0 %v2314
        %2949 = vmatprep.mubr.f32.mxu0 %v1938
        %2950 = vmatmul.mubr.f32.gmra.mrb[0].mxu0 %v1937
        %v2951 = vpop.f32.mrb[0].mxu0
        %v2952 = vadd.f32 %v2807, %v2951
        %v2953 = vpop.f32.mrb[0].mxu0
        %2954 = vmatprep.mubr.f32.mxu0 %v1954
        %2955 = vmatmul.mubr.f32.gmra.mrb[0].mxu0 %v1953
        %v2956 = vpop.f32.mrb[0].mxu0
        %v2957 = vadd.f32 %v2812, %v2956
        %v2958 = vpop.f32.mrb[0].mxu0
        %2959 = vmatprep.mubr.f32.mxu0 %v1970
        %2960 = vmatmul.mubr.f32.gmra.mrb[0].mxu0 %v1969
        %v2961 = vpop.f32.mrb[0].mxu0
        %v2962 = vadd.f32 %v2817, %v2961
        %v2963 = vpop.f32.mrb[0].mxu0
        %2964 = vmatprep.mubr.f32.mxu0 %v1986
        %2965 = vmatmul.mubr.f32.gmra.mrb[0].mxu0 %v1985
        %v2966 = vpop.f32.mrb[0].mxu0
        %v2967 = vadd.f32 %v2822, %v2966
        %v2968 = vpop.f32.mrb[0].mxu0
        %2969 = vmatprep.mubr.f32.mxu0 %v2002
        %2970 = vmatmul.mubr.f32.gmra.mrb[0].mxu0 %v2001
        %v2971 = vpop.f32.mrb[0].mxu0
        %v2972 = vadd.f32 %v2827, %v2971
        %v2973 = vpop.f32.mrb[0].mxu0
        %2974 = vmatprep.mubr.f32.mxu0 %v2018
        %2975 = vmatmul.mubr.f32.gmra.mrb[0].mxu0 %v2017
        %v2976 = vpop.f32.mrb[0].mxu0
        %v2977 = vadd.f32 %v2832, %v2976
        %v2978 = vpop.f32.mrb[0].mxu0
        %2979 = vmatprep.mubr.f32.mxu0 %v2034
        %2980 = vmatmul.mubr.f32.gmra.mrb[0].mxu0 %v2033
        %v2981 = vpop.f32.mrb[0].mxu0
        %v2982 = vadd.f32 %v2837, %v2981
        %v2983 = vpop.f32.mrb[0].mxu0
        %2984 = vmatprep.mubr.f32.mxu0 %v2050
        %2985 = vmatmul.mubr.f32.gmra.mrb[0].mxu0 %v2049
        %v2986 = vpop.f32.mrb[0].mxu0
        %v2987 = vadd.f32 %v2842, %v2986
        %v2988 = vpop.f32.mrb[0].mxu0
        %2989 = vmatprep.mubr.f32.mxu0 %v2066
        %2990 = vmatmul.mubr.f32.gmra.mrb[0].mxu0 %v2065
        %v2991 = vpop.f32.mrb[0].mxu0
        %v2992 = vadd.f32 %v2847, %v2991
        %v2993 = vpop.f32.mrb[0].mxu0
        %2994 = vmatprep.mubr.f32.mxu0 %v2082
        %2995 = vmatmul.mubr.f32.gmra.mrb[0].mxu0 %v2081
        %v2996 = vpop.f32.mrb[0].mxu0
        %v2997 = vadd.f32 %v2852, %v2996
        %v2998 = vpop.f32.mrb[0].mxu0
        %2999 = vmatprep.mubr.f32.mxu0 %v2098
        %3000 = vmatmul.mubr.f32.gmra.mrb[0].mxu0 %v2097
        %v3001 = vpop.f32.mrb[0].mxu0
        %v3002 = vadd.f32 %v2857, %v3001
        %v3003 = vpop.f32.mrb[0].mxu0
        %3004 = vmatprep.mubr.f32.mxu0 %v2114
        %3005 = vmatmul.mubr.f32.gmra.mrb[0].mxu0 %v2113
        %v3006 = vpop.f32.mrb[0].mxu0
        %v3007 = vadd.f32 %v2862, %v3006
        %v3008 = vpop.f32.mrb[0].mxu0
        %3009 = vmatprep.mubr.f32.mxu0 %v2130
        %3010 = vmatmul.mubr.f32.gmra.mrb[0].mxu0 %v2129
        %v3011 = vpop.f32.mrb[0].mxu0
        %v3012 = vadd.f32 %v2867, %v3011
        %v3013 = vpop.f32.mrb[0].mxu0
        %3014 = vmatprep.mubr.f32.mxu0 %v2146
        %3015 = vmatmul.mubr.f32.gmra.mrb[0].mxu0 %v2145
        %v3016 = vpop.f32.mrb[0].mxu0
        %v3017 = vadd.f32 %v2872, %v3016
        %v3018 = vpop.f32.mrb[0].mxu0
        %3019 = vmatprep.mubr.f32.mxu0 %v2162
        %3020 = vmatmul.mubr.f32.gmra.mrb[0].mxu0 %v2161
        %v3021 = vpop.f32.mrb[0].mxu0
        %v3022 = vadd.f32 %v2877, %v3021
        %v3023 = vpop.f32.mrb[0].mxu0
        %3024 = vmatprep.mubr.f32.mxu0 %v2178
        %3025 = vmatmul.mubr.f32.gmra.mrb[0].mxu0 %v2177
        %v3026 = vpop.f32.mrb[0].mxu0
        %v3027 = vadd.f32 %v2882, %v3026
        %v3028 = vpop.f32.mrb[0].mxu0
        %3029 = vdwg.mxu0
        %3030 = vmatprep.subr.mxu0 0.0
        %3031 = vmatpush1.msra.mxu0 %v2315
        %3032 = vmatprep.subr.mxu0 0.0
        %3033 = vmatpush1.msra.mxu0 %v2316
        %3034 = vmatprep.subr.mxu0 0.0
        %3035 = vmatpush1.msra.mxu0 %v2317
        %3036 = vmatprep.subr.mxu0 0.0
        %3037 = vmatpush1.msra.mxu0 %v2318
        %3038 = vmatprep.subr.mxu0 0.0
        %3039 = vmatpush1.msra.mxu0 %v2319
        %3040 = vmatprep.subr.mxu0 0.0
        %3041 = vmatpush1.msra.mxu0 %v2320
        %3042 = vmatprep.subr.mxu0 0.0
        %3043 = vmatpush1.msra.mxu0 %v2321
        %3044 = vmatprep.subr.mxu0 0.0
        %3045 = vmatpush1.msra.mxu0 %v2322
        %3046 = vmatprep.subr.mxu0 0.0
        %3047 = vmatpush1.msra.mxu0 %v2323
        %3048 = vmatprep.subr.mxu0 0.0
        %3049 = vmatpush1.msra.mxu0 %v2324
        %3050 = vmatprep.subr.mxu0 0.0
        %3051 = vmatpush1.msra.mxu0 %v2325
        %3052 = vmatprep.subr.mxu0 0.0
        %3053 = vmatpush1.msra.mxu0 %v2326
        %3054 = vmatprep.subr.mxu0 0.0
        %3055 = vmatpush1.msra.mxu0 %v2327
        %3056 = vmatprep.subr.mxu0 0.0
        %3057 = vmatpush1.msra.mxu0 %v2328
        %3058 = vmatprep.subr.mxu0 0.0
        %3059 = vmatpush1.msra.mxu0 %v2329
        %3060 = vmatprep.subr.mxu0 0.0
        %3061 = vmatpush1.msra.mxu0 %v2330
        %3062 = vmatprep.subr.mxu0 0.0
        %3063 = vmatpush1.msra.mxu0 %v2331
        %3064 = vmatprep.subr.mxu0 0.0
        %3065 = vmatpush1.msra.mxu0 %v2332
        %3066 = vmatprep.subr.mxu0 0.0
        %3067 = vmatpush1.msra.mxu0 %v2333
        %3068 = vmatprep.subr.mxu0 0.0
        %3069 = vmatpush1.msra.mxu0 %v2334
        %3070 = vmatprep.subr.mxu0 0.0
        %3071 = vmatpush1.msra.mxu0 %v2335
        %3072 = vmatprep.subr.mxu0 0.0
        %3073 = vmatpush1.msra.mxu0 %v2336
        %3074 = vmatprep.subr.mxu0 0.0
        %3075 = vmatpush1.msra.mxu0 %v2337
        %3076 = vmatprep.subr.mxu0 0.0
        %3077 = vmatpush1.msra.mxu0 %v2338
        %3078 = vmatprep.subr.mxu0 0.0
        %3079 = vmatpush1.msra.mxu0 %v2339
        %3080 = vmatprep.subr.mxu0 0.0
        %3081 = vmatpush1.msra.mxu0 %v2340
        %3082 = vmatprep.subr.mxu0 0.0
        %3083 = vmatpush1.msra.mxu0 %v2341
        %3084 = vmatprep.subr.mxu0 0.0
        %3085 = vmatpush1.msra.mxu0 %v2342
        %3086 = vmatprep.subr.mxu0 0.0
        %3087 = vmatpush1.msra.mxu0 %v2343
        %3088 = vmatprep.subr.mxu0 0.0
        %3089 = vmatpush1.msra.mxu0 %v2344
        %3090 = vmatprep.subr.mxu0 0.0
        %3091 = vmatpush1.msra.mxu0 %v2345
        %3092 = vmatprep.subr.mxu0 0.0
        %3093 = vmatpush1.msra.mxu0 %v2346
        %3094 = vmatprep.mubr.f32.mxu0 %v1940
        %3095 = vmatmul.mubr.f32.gmra.mrb[0].mxu0 %v1939
        %v3096 = vpop.f32.mrb[0].mxu0
        %v3097 = vadd.f32 %v2952, %v3096
        %v3098 = vpop.f32.mrb[0].mxu0
        %3099 = vmatprep.mubr.f32.mxu0 %v1956
        %3100 = vmatmul.mubr.f32.gmra.mrb[0].mxu0 %v1955
        %v3101 = vpop.f32.mrb[0].mxu0
        %v3102 = vadd.f32 %v2957, %v3101
        %v3103 = vpop.f32.mrb[0].mxu0
        %3104 = vmatprep.mubr.f32.mxu0 %v1972
        %3105 = vmatmul.mubr.f32.gmra.mrb[0].mxu0 %v1971
        %v3106 = vpop.f32.mrb[0].mxu0
        %v3107 = vadd.f32 %v2962, %v3106
        %v3108 = vpop.f32.mrb[0].mxu0
        %3109 = vmatprep.mubr.f32.mxu0 %v1988
        %3110 = vmatmul.mubr.f32.gmra.mrb[0].mxu0 %v1987
        %v3111 = vpop.f32.mrb[0].mxu0
        %v3112 = vadd.f32 %v2967, %v3111
        %v3113 = vpop.f32.mrb[0].mxu0
        %3114 = vmatprep.mubr.f32.mxu0 %v2004
        %3115 = vmatmul.mubr.f32.gmra.mrb[0].mxu0 %v2003
        %v3116 = vpop.f32.mrb[0].mxu0
        %v3117 = vadd.f32 %v2972, %v3116
        %v3118 = vpop.f32.mrb[0].mxu0
        %3119 = vmatprep.mubr.f32.mxu0 %v2020
        %3120 = vmatmul.mubr.f32.gmra.mrb[0].mxu0 %v2019
        %v3121 = vpop.f32.mrb[0].mxu0
        %v3122 = vadd.f32 %v2977, %v3121
        %v3123 = vpop.f32.mrb[0].mxu0
        %3124 = vmatprep.mubr.f32.mxu0 %v2036
        %3125 = vmatmul.mubr.f32.gmra.mrb[0].mxu0 %v2035
        %v3126 = vpop.f32.mrb[0].mxu0
        %v3127 = vadd.f32 %v2982, %v3126
        %v3128 = vpop.f32.mrb[0].mxu0
        %3129 = vmatprep.mubr.f32.mxu0 %v2052
        %3130 = vmatmul.mubr.f32.gmra.mrb[0].mxu0 %v2051
        %v3131 = vpop.f32.mrb[0].mxu0
        %v3132 = vadd.f32 %v2987, %v3131
        %v3133 = vpop.f32.mrb[0].mxu0
        %3134 = vmatprep.mubr.f32.mxu0 %v2068
        %3135 = vmatmul.mubr.f32.gmra.mrb[0].mxu0 %v2067
        %v3136 = vpop.f32.mrb[0].mxu0
        %v3137 = vadd.f32 %v2992, %v3136
        %v3138 = vpop.f32.mrb[0].mxu0
        %3139 = vmatprep.mubr.f32.mxu0 %v2084
        %3140 = vmatmul.mubr.f32.gmra.mrb[0].mxu0 %v2083
        %v3141 = vpop.f32.mrb[0].mxu0
        %v3142 = vadd.f32 %v2997, %v3141
        %v3143 = vpop.f32.mrb[0].mxu0
        %3144 = vmatprep.mubr.f32.mxu0 %v2100
        %3145 = vmatmul.mubr.f32.gmra.mrb[0].mxu0 %v2099
        %v3146 = vpop.f32.mrb[0].mxu0
        %v3147 = vadd.f32 %v3002, %v3146
        %v3148 = vpop.f32.mrb[0].mxu0
        %3149 = vmatprep.mubr.f32.mxu0 %v2116
        %3150 = vmatmul.mubr.f32.gmra.mrb[0].mxu0 %v2115
        %v3151 = vpop.f32.mrb[0].mxu0
        %v3152 = vadd.f32 %v3007, %v3151
        %v3153 = vpop.f32.mrb[0].mxu0
        %3154 = vmatprep.mubr.f32.mxu0 %v2132
        %3155 = vmatmul.mubr.f32.gmra.mrb[0].mxu0 %v2131
        %v3156 = vpop.f32.mrb[0].mxu0
        %v3157 = vadd.f32 %v3012, %v3156
        %v3158 = vpop.f32.mrb[0].mxu0
        %3159 = vmatprep.mubr.f32.mxu0 %v2148
        %3160 = vmatmul.mubr.f32.gmra.mrb[0].mxu0 %v2147
        %v3161 = vpop.f32.mrb[0].mxu0
        %v3162 = vadd.f32 %v3017, %v3161
        %v3163 = vpop.f32.mrb[0].mxu0
        %3164 = vmatprep.mubr.f32.mxu0 %v2164
        %3165 = vmatmul.mubr.f32.gmra.mrb[0].mxu0 %v2163
        %v3166 = vpop.f32.mrb[0].mxu0
        %v3167 = vadd.f32 %v3022, %v3166
        %v3168 = vpop.f32.mrb[0].mxu0
        %3169 = vmatprep.mubr.f32.mxu0 %v2180
        %3170 = vmatmul.mubr.f32.gmra.mrb[0].mxu0 %v2179
        %v3171 = vpop.f32.mrb[0].mxu0
        %v3172 = vadd.f32 %v3027, %v3171
        %v3173 = vpop.f32.mrb[0].mxu0
        %3174 = vdwg.mxu0
        %3175 = vmatprep.subr.mxu0 0.0
        %3176 = vmatpush1.msra.mxu0 %v2347
        %3177 = vmatprep.subr.mxu0 0.0
        %3178 = vmatpush1.msra.mxu0 %v2348
        %3179 = vmatprep.subr.mxu0 0.0
        %3180 = vmatpush1.msra.mxu0 %v2349
        %3181 = vmatprep.subr.mxu0 0.0
        %3182 = vmatpush1.msra.mxu0 %v2350
        %3183 = vmatprep.subr.mxu0 0.0
        %3184 = vmatpush1.msra.mxu0 %v2351
        %3185 = vmatprep.subr.mxu0 0.0
        %3186 = vmatpush1.msra.mxu0 %v2352
        %3187 = vmatprep.subr.mxu0 0.0
        %3188 = vmatpush1.msra.mxu0 %v2353
        %3189 = vmatprep.subr.mxu0 0.0
        %3190 = vmatpush1.msra.mxu0 %v2354
        %3191 = vmatprep.subr.mxu0 0.0
        %3192 = vmatpush1.msra.mxu0 %v2355
        %3193 = vmatprep.subr.mxu0 0.0
        %3194 = vmatpush1.msra.mxu0 %v2356
        %3195 = vmatprep.subr.mxu0 0.0
        %3196 = vmatpush1.msra.mxu0 %v2357
        %3197 = vmatprep.subr.mxu0 0.0
        %3198 = vmatpush1.msra.mxu0 %v2358
        %3199 = vmatprep.subr.mxu0 0.0
        %3200 = vmatpush1.msra.mxu0 %v2359
        %3201 = vmatprep.subr.mxu0 0.0
        %3202 = vmatpush1.msra.mxu0 %v2360
        %3203 = vmatprep.subr.mxu0 0.0
        %3204 = vmatpush1.msra.mxu0 %v2361
        %3205 = vmatprep.subr.mxu0 0.0
        %3206 = vmatpush1.msra.mxu0 %v2362
        %3207 = vmatprep.subr.mxu0 0.0
        %3208 = vmatpush1.msra.mxu0 %v2363
        %3209 = vmatprep.subr.mxu0 0.0
        %3210 = vmatpush1.msra.mxu0 %v2364
        %3211 = vmatprep.subr.mxu0 0.0
        %3212 = vmatpush1.msra.mxu0 %v2365
        %3213 = vmatprep.subr.mxu0 0.0
        %3214 = vmatpush1.msra.mxu0 %v2366
        %3215 = vmatprep.subr.mxu0 0.0
        %3216 = vmatpush1.msra.mxu0 %v2367
        %3217 = vmatprep.subr.mxu0 0.0
        %3218 = vmatpush1.msra.mxu0 %v2368
        %3219 = vmatprep.subr.mxu0 0.0
        %3220 = vmatpush1.msra.mxu0 %v2369
        %3221 = vmatprep.subr.mxu0 0.0
        %3222 = vmatpush1.msra.mxu0 %v2370
        %3223 = vmatprep.subr.mxu0 0.0
        %3224 = vmatpush1.msra.mxu0 %v2371
        %3225 = vmatprep.subr.mxu0 0.0
        %3226 = vmatpush1.msra.mxu0 %v2372
        %3227 = vmatprep.subr.mxu0 0.0
        %3228 = vmatpush1.msra.mxu0 %v2373
        %3229 = vmatprep.subr.mxu0 0.0
        %3230 = vmatpush1.msra.mxu0 %v2374
        %3231 = vmatprep.subr.mxu0 0.0
        %3232 = vmatpush1.msra.mxu0 %v2375
        %3233 = vmatprep.subr.mxu0 0.0
        %3234 = vmatpush1.msra.mxu0 %v2376
        %3235 = vmatprep.subr.mxu0 0.0
        %3236 = vmatpush1.msra.mxu0 %v2377
        %3237 = vmatprep.subr.mxu0 0.0
        %3238 = vmatpush1.msra.mxu0 %v2378
        %3239 = vmatprep.mubr.f32.mxu0 %v1942
        %3240 = vmatmul.mubr.f32.gmra.mrb[0].mxu0 %v1941
        %v3241 = vpop.f32.mrb[0].mxu0
        %v3242 = vadd.f32 %v3097, %v3241
        %v3243 = vpop.f32.mrb[0].mxu0
        %3244 = vmatprep.mubr.f32.mxu0 %v1958
        %3245 = vmatmul.mubr.f32.gmra.mrb[0].mxu0 %v1957
        %v3246 = vpop.f32.mrb[0].mxu0
        %v3247 = vadd.f32 %v3102, %v3246
        %v3248 = vpop.f32.mrb[0].mxu0
        %3249 = vmatprep.mubr.f32.mxu0 %v1974
        %3250 = vmatmul.mubr.f32.gmra.mrb[0].mxu0 %v1973
        %v3251 = vpop.f32.mrb[0].mxu0
        %v3252 = vadd.f32 %v3107, %v3251
        %v3253 = vpop.f32.mrb[0].mxu0
        %3254 = vmatprep.mubr.f32.mxu0 %v1990
        %3255 = vmatmul.mubr.f32.gmra.mrb[0].mxu0 %v1989
        %v3256 = vpop.f32.mrb[0].mxu0
        %v3257 = vadd.f32 %v3112, %v3256
        %v3258 = vpop.f32.mrb[0].mxu0
        %3259 = vmatprep.mubr.f32.mxu0 %v2006
        %3260 = vmatmul.mubr.f32.gmra.mrb[0].mxu0 %v2005
        %v3261 = vpop.f32.mrb[0].mxu0
        %v3262 = vadd.f32 %v3117, %v3261
        %v3263 = vpop.f32.mrb[0].mxu0
        %3264 = vmatprep.mubr.f32.mxu0 %v2022
        %3265 = vmatmul.mubr.f32.gmra.mrb[0].mxu0 %v2021
        %v3266 = vpop.f32.mrb[0].mxu0
        %v3267 = vadd.f32 %v3122, %v3266
        %v3268 = vpop.f32.mrb[0].mxu0
        %3269 = vmatprep.mubr.f32.mxu0 %v2038
        %3270 = vmatmul.mubr.f32.gmra.mrb[0].mxu0 %v2037
        %v3271 = vpop.f32.mrb[0].mxu0
        %v3272 = vadd.f32 %v3127, %v3271
        %v3273 = vpop.f32.mrb[0].mxu0
        %3274 = vmatprep.mubr.f32.mxu0 %v2054
        %3275 = vmatmul.mubr.f32.gmra.mrb[0].mxu0 %v2053
        %v3276 = vpop.f32.mrb[0].mxu0
        %v3277 = vadd.f32 %v3132, %v3276
        %v3278 = vpop.f32.mrb[0].mxu0
        %3279 = vmatprep.mubr.f32.mxu0 %v2070
        %3280 = vmatmul.mubr.f32.gmra.mrb[0].mxu0 %v2069
        %v3281 = vpop.f32.mrb[0].mxu0
        %v3282 = vadd.f32 %v3137, %v3281
        %v3283 = vpop.f32.mrb[0].mxu0
        %3284 = vmatprep.mubr.f32.mxu0 %v2086
        %3285 = vmatmul.mubr.f32.gmra.mrb[0].mxu0 %v2085
        %v3286 = vpop.f32.mrb[0].mxu0
        %v3287 = vadd.f32 %v3142, %v3286
        %v3288 = vpop.f32.mrb[0].mxu0
        %3289 = vmatprep.mubr.f32.mxu0 %v2102
        %3290 = vmatmul.mubr.f32.gmra.mrb[0].mxu0 %v2101
        %v3291 = vpop.f32.mrb[0].mxu0
        %v3292 = vadd.f32 %v3147, %v3291
        %v3293 = vpop.f32.mrb[0].mxu0
        %3294 = vmatprep.mubr.f32.mxu0 %v2118
        %3295 = vmatmul.mubr.f32.gmra.mrb[0].mxu0 %v2117
        %v3296 = vpop.f32.mrb[0].mxu0
        %v3297 = vadd.f32 %v3152, %v3296
        %v3298 = vpop.f32.mrb[0].mxu0
        %3299 = vmatprep.mubr.f32.mxu0 %v2134
        %3300 = vmatmul.mubr.f32.gmra.mrb[0].mxu0 %v2133
        %v3301 = vpop.f32.mrb[0].mxu0
        %v3302 = vadd.f32 %v3157, %v3301
        %v3303 = vpop.f32.mrb[0].mxu0
        %3304 = vmatprep.mubr.f32.mxu0 %v2150
        %3305 = vmatmul.mubr.f32.gmra.mrb[0].mxu0 %v2149
        %v3306 = vpop.f32.mrb[0].mxu0
        %v3307 = vadd.f32 %v3162, %v3306
        %v3308 = vpop.f32.mrb[0].mxu0
        %3309 = vmatprep.mubr.f32.mxu0 %v2166
        %3310 = vmatmul.mubr.f32.gmra.mrb[0].mxu0 %v2165
        %v3311 = vpop.f32.mrb[0].mxu0
        %v3312 = vadd.f32 %v3167, %v3311
        %v3313 = vpop.f32.mrb[0].mxu0
        %3314 = vmatprep.mubr.f32.mxu0 %v2182
        %3315 = vmatmul.mubr.f32.gmra.mrb[0].mxu0 %v2181
        %v3316 = vpop.f32.mrb[0].mxu0
        %v3317 = vadd.f32 %v3172, %v3316
        %v3318 = vpop.f32.mrb[0].mxu0
        %3319 = vdwg.mxu0
        %3320 = vmatprep.subr.mxu0 0.0
        %3321 = vmatpush1.msra.mxu0 %v2379
        %3322 = vmatprep.subr.mxu0 0.0
        %3323 = vmatpush1.msra.mxu0 %v2380
        %3324 = vmatprep.subr.mxu0 0.0
        %3325 = vmatpush1.msra.mxu0 %v2381
        %3326 = vmatprep.subr.mxu0 0.0
        %3327 = vmatpush1.msra.mxu0 %v2382
        %3328 = vmatprep.subr.mxu0 0.0
        %3329 = vmatpush1.msra.mxu0 %v2383
        %3330 = vmatprep.subr.mxu0 0.0
        %3331 = vmatpush1.msra.mxu0 %v2384
        %3332 = vmatprep.subr.mxu0 0.0
        %3333 = vmatpush1.msra.mxu0 %v2385
        %3334 = vmatprep.subr.mxu0 0.0
        %3335 = vmatpush1.msra.mxu0 %v2386
        %3336 = vmatprep.subr.mxu0 0.0
        %3337 = vmatpush1.msra.mxu0 %v2387
        %3338 = vmatprep.subr.mxu0 0.0
        %3339 = vmatpush1.msra.mxu0 %v2388
        %3340 = vmatprep.subr.mxu0 0.0
        %3341 = vmatpush1.msra.mxu0 %v2389
        %3342 = vmatprep.subr.mxu0 0.0
        %3343 = vmatpush1.msra.mxu0 %v2390
        %3344 = vmatprep.subr.mxu0 0.0
        %3345 = vmatpush1.msra.mxu0 %v2391
        %3346 = vmatprep.subr.mxu0 0.0
        %3347 = vmatpush1.msra.mxu0 %v2392
        %3348 = vmatprep.subr.mxu0 0.0
        %3349 = vmatpush1.msra.mxu0 %v2393
        %3350 = vmatprep.subr.mxu0 0.0
        %3351 = vmatpush1.msra.mxu0 %v2394
        %3352 = vmatprep.subr.mxu0 0.0
        %3353 = vmatpush1.msra.mxu0 %v2395
        %3354 = vmatprep.subr.mxu0 0.0
        %3355 = vmatpush1.msra.mxu0 %v2396
        %3356 = vmatprep.subr.mxu0 0.0
        %3357 = vmatpush1.msra.mxu0 %v2397
        %3358 = vmatprep.subr.mxu0 0.0
        %3359 = vmatpush1.msra.mxu0 %v2398
        %3360 = vmatprep.subr.mxu0 0.0
        %3361 = vmatpush1.msra.mxu0 %v2399
        %3362 = vmatprep.subr.mxu0 0.0
        %3363 = vmatpush1.msra.mxu0 %v2400
        %3364 = vmatprep.subr.mxu0 0.0
        %3365 = vmatpush1.msra.mxu0 %v2401
        %3366 = vmatprep.subr.mxu0 0.0
        %3367 = vmatpush1.msra.mxu0 %v2402
        %3368 = vmatprep.subr.mxu0 0.0
        %3369 = vmatpush1.msra.mxu0 %v2403
        %3370 = vmatprep.subr.mxu0 0.0
        %3371 = vmatpush1.msra.mxu0 %v2404
        %3372 = vmatprep.subr.mxu0 0.0
        %3373 = vmatpush1.msra.mxu0 %v2405
        %3374 = vmatprep.subr.mxu0 0.0
        %3375 = vmatpush1.msra.mxu0 %v2406
        %3376 = vmatprep.subr.mxu0 0.0
        %3377 = vmatpush1.msra.mxu0 %v2407
        %3378 = vmatprep.subr.mxu0 0.0
        %3379 = vmatpush1.msra.mxu0 %v2408
        %3380 = vmatprep.subr.mxu0 0.0
        %3381 = vmatpush1.msra.mxu0 %v2409
        %3382 = vmatprep.subr.mxu0 0.0
        %3383 = vmatpush1.msra.mxu0 %v2410
        %3384 = vmatprep.mubr.f32.mxu0 %v1944
        %3385 = vmatmul.mubr.f32.gmra.mrb[0].mxu0 %v1943
        %v3386 = vpop.f32.mrb[0].mxu0
        %v3387 = vadd.f32 %v3242, %v3386
        %v3388 = vpop.f32.mrb[0].mxu0
        %3389 = vmatprep.mubr.f32.mxu0 %v1960
        %3390 = vmatmul.mubr.f32.gmra.mrb[0].mxu0 %v1959
        %v3391 = vpop.f32.mrb[0].mxu0
        %v3392 = vadd.f32 %v3247, %v3391
        %v3393 = vpop.f32.mrb[0].mxu0
        %3394 = vmatprep.mubr.f32.mxu0 %v1976
        %3395 = vmatmul.mubr.f32.gmra.mrb[0].mxu0 %v1975
        %v3396 = vpop.f32.mrb[0].mxu0
        %v3397 = vadd.f32 %v3252, %v3396
        %v3398 = vpop.f32.mrb[0].mxu0
        %3399 = vmatprep.mubr.f32.mxu0 %v1992
        %3400 = vmatmul.mubr.f32.gmra.mrb[0].mxu0 %v1991
        %v3401 = vpop.f32.mrb[0].mxu0
        %v3402 = vadd.f32 %v3257, %v3401
        %v3403 = vpop.f32.mrb[0].mxu0
        %3404 = vmatprep.mubr.f32.mxu0 %v2008
        %3405 = vmatmul.mubr.f32.gmra.mrb[0].mxu0 %v2007
        %v3406 = vpop.f32.mrb[0].mxu0
        %v3407 = vadd.f32 %v3262, %v3406
        %v3408 = vpop.f32.mrb[0].mxu0
        %3409 = vmatprep.mubr.f32.mxu0 %v2024
        %3410 = vmatmul.mubr.f32.gmra.mrb[0].mxu0 %v2023
        %v3411 = vpop.f32.mrb[0].mxu0
        %v3412 = vadd.f32 %v3267, %v3411
        %v3413 = vpop.f32.mrb[0].mxu0
        %3414 = vmatprep.mubr.f32.mxu0 %v2040
        %3415 = vmatmul.mubr.f32.gmra.mrb[0].mxu0 %v2039
        %v3416 = vpop.f32.mrb[0].mxu0
        %v3417 = vadd.f32 %v3272, %v3416
        %v3418 = vpop.f32.mrb[0].mxu0
        %3419 = vmatprep.mubr.f32.mxu0 %v2056
        %3420 = vmatmul.mubr.f32.gmra.mrb[0].mxu0 %v2055
        %v3421 = vpop.f32.mrb[0].mxu0
        %v3422 = vadd.f32 %v3277, %v3421
        %v3423 = vpop.f32.mrb[0].mxu0
        %3424 = vmatprep.mubr.f32.mxu0 %v2072
        %3425 = vmatmul.mubr.f32.gmra.mrb[0].mxu0 %v2071
        %v3426 = vpop.f32.mrb[0].mxu0
        %v3427 = vadd.f32 %v3282, %v3426
        %v3428 = vpop.f32.mrb[0].mxu0
        %3429 = vmatprep.mubr.f32.mxu0 %v2088
        %3430 = vmatmul.mubr.f32.gmra.mrb[0].mxu0 %v2087
        %v3431 = vpop.f32.mrb[0].mxu0
        %v3432 = vadd.f32 %v3287, %v3431
        %v3433 = vpop.f32.mrb[0].mxu0
        %3434 = vmatprep.mubr.f32.mxu0 %v2104
        %3435 = vmatmul.mubr.f32.gmra.mrb[0].mxu0 %v2103
        %v3436 = vpop.f32.mrb[0].mxu0
        %v3437 = vadd.f32 %v3292, %v3436
        %v3438 = vpop.f32.mrb[0].mxu0
        %3439 = vmatprep.mubr.f32.mxu0 %v2120
        %3440 = vmatmul.mubr.f32.gmra.mrb[0].mxu0 %v2119
        %v3441 = vpop.f32.mrb[0].mxu0
        %v3442 = vadd.f32 %v3297, %v3441
        %v3443 = vpop.f32.mrb[0].mxu0
        %3444 = vmatprep.mubr.f32.mxu0 %v2136
        %3445 = vmatmul.mubr.f32.gmra.mrb[0].mxu0 %v2135
        %v3446 = vpop.f32.mrb[0].mxu0
        %v3447 = vadd.f32 %v3302, %v3446
        %v3448 = vpop.f32.mrb[0].mxu0
        %3449 = vmatprep.mubr.f32.mxu0 %v2152
        %3450 = vmatmul.mubr.f32.gmra.mrb[0].mxu0 %v2151
        %v3451 = vpop.f32.mrb[0].mxu0
        %v3452 = vadd.f32 %v3307, %v3451
        %v3453 = vpop.f32.mrb[0].mxu0
        %3454 = vmatprep.mubr.f32.mxu0 %v2168
        %3455 = vmatmul.mubr.f32.gmra.mrb[0].mxu0 %v2167
        %v3456 = vpop.f32.mrb[0].mxu0
        %v3457 = vadd.f32 %v3312, %v3456
        %v3458 = vpop.f32.mrb[0].mxu0
        %3459 = vmatprep.mubr.f32.mxu0 %v2184
        %3460 = vmatmul.mubr.f32.gmra.mrb[0].mxu0 %v2183
        %v3461 = vpop.f32.mrb[0].mxu0
        %v3462 = vadd.f32 %v3317, %v3461
        %v3463 = vpop.f32.mrb[0].mxu0
        %3464 = vdwg.mxu0
        %3465 = vmatprep.subr.mxu0 0.0
        %3466 = vmatpush1.msra.mxu0 %v2411
        %3467 = vmatprep.subr.mxu0 0.0
        %3468 = vmatpush1.msra.mxu0 %v2412
        %3469 = vmatprep.subr.mxu0 0.0
        %3470 = vmatpush1.msra.mxu0 %v2413
        %3471 = vmatprep.subr.mxu0 0.0
        %3472 = vmatpush1.msra.mxu0 %v2414
        %3473 = vmatprep.subr.mxu0 0.0
        %3474 = vmatpush1.msra.mxu0 %v2415
        %3475 = vmatprep.subr.mxu0 0.0
        %3476 = vmatpush1.msra.mxu0 %v2416
        %3477 = vmatprep.subr.mxu0 0.0
        %3478 = vmatpush1.msra.mxu0 %v2417
        %3479 = vmatprep.subr.mxu0 0.0
        %3480 = vmatpush1.msra.mxu0 %v2418
        %3481 = vmatprep.subr.mxu0 0.0
        %3482 = vmatpush1.msra.mxu0 %v2419
        %3483 = vmatprep.subr.mxu0 0.0
        %3484 = vmatpush1.msra.mxu0 %v2420
        %3485 = vmatprep.subr.mxu0 0.0
        %3486 = vmatpush1.msra.mxu0 %v2421
        %3487 = vmatprep.subr.mxu0 0.0
        %3488 = vmatpush1.msra.mxu0 %v2422
        %3489 = vmatprep.subr.mxu0 0.0
        %3490 = vmatpush1.msra.mxu0 %v2423
        %3491 = vmatprep.subr.mxu0 0.0
        %3492 = vmatpush1.msra.mxu0 %v2424
        %3493 = vmatprep.subr.mxu0 0.0
        %3494 = vmatpush1.msra.mxu0 %v2425
        %3495 = vmatprep.subr.mxu0 0.0
        %3496 = vmatpush1.msra.mxu0 %v2426
        %3497 = vmatprep.subr.mxu0 0.0
        %3498 = vmatpush1.msra.mxu0 %v2427
        %3499 = vmatprep.subr.mxu0 0.0
        %3500 = vmatpush1.msra.mxu0 %v2428
        %3501 = vmatprep.subr.mxu0 0.0
        %3502 = vmatpush1.msra.mxu0 %v2429
        %3503 = vmatprep.subr.mxu0 0.0
        %3504 = vmatpush1.msra.mxu0 %v2430
        %3505 = vmatprep.subr.mxu0 0.0
        %3506 = vmatpush1.msra.mxu0 %v2431
        %3507 = vmatprep.subr.mxu0 0.0
        %3508 = vmatpush1.msra.mxu0 %v2432
        %3509 = vmatprep.subr.mxu0 0.0
        %3510 = vmatpush1.msra.mxu0 %v2433
        %3511 = vmatprep.subr.mxu0 0.0
        %3512 = vmatpush1.msra.mxu0 %v2434
        %3513 = vmatprep.subr.mxu0 0.0
        %3514 = vmatpush1.msra.mxu0 %v2435
        %3515 = vmatprep.subr.mxu0 0.0
        %3516 = vmatpush1.msra.mxu0 %v2436
        %3517 = vmatprep.subr.mxu0 0.0
        %3518 = vmatpush1.msra.mxu0 %v2437
        %3519 = vmatprep.subr.mxu0 0.0
        %3520 = vmatpush1.msra.mxu0 %v2438
        %3521 = vmatprep.subr.mxu0 0.0
        %3522 = vmatpush1.msra.mxu0 %v2439
        %3523 = vmatprep.subr.mxu0 0.0
        %3524 = vmatpush1.msra.mxu0 %v2440
        %3525 = vmatprep.subr.mxu0 0.0
        %3526 = vmatpush1.msra.mxu0 %v2441
        %3527 = vmatprep.subr.mxu0 0.0
        %3528 = vmatpush1.msra.mxu0 %v2442
        %3529 = vmatprep.mubr.f32.mxu0 %v1946
        %3530 = vmatmul.mubr.f32.gmra.mrb[0].mxu0 %v1945
        %v3531 = vpop.f32.mrb[0].mxu0
        %v3532 = vadd.f32 %v3387, %v3531
        %v3533 = vpop.f32.mrb[0].mxu0
        %3534 = vmatprep.mubr.f32.mxu0 %v1962
        %3535 = vmatmul.mubr.f32.gmra.mrb[0].mxu0 %v1961
        %v3536 = vpop.f32.mrb[0].mxu0
        %v3537 = vadd.f32 %v3392, %v3536
        %v3538 = vpop.f32.mrb[0].mxu0
        %3539 = vmatprep.mubr.f32.mxu0 %v1978
        %3540 = vmatmul.mubr.f32.gmra.mrb[0].mxu0 %v1977
        %v3541 = vpop.f32.mrb[0].mxu0
        %v3542 = vadd.f32 %v3397, %v3541
        %v3543 = vpop.f32.mrb[0].mxu0
        %3544 = vmatprep.mubr.f32.mxu0 %v1994
        %3545 = vmatmul.mubr.f32.gmra.mrb[0].mxu0 %v1993
        %v3546 = vpop.f32.mrb[0].mxu0
        %v3547 = vadd.f32 %v3402, %v3546
        %v3548 = vpop.f32.mrb[0].mxu0
        %3549 = vmatprep.mubr.f32.mxu0 %v2010
        %3550 = vmatmul.mubr.f32.gmra.mrb[0].mxu0 %v2009
        %v3551 = vpop.f32.mrb[0].mxu0
        %v3552 = vadd.f32 %v3407, %v3551
        %v3553 = vpop.f32.mrb[0].mxu0
        %3554 = vmatprep.mubr.f32.mxu0 %v2026
        %3555 = vmatmul.mubr.f32.gmra.mrb[0].mxu0 %v2025
        %v3556 = vpop.f32.mrb[0].mxu0
        %v3557 = vadd.f32 %v3412, %v3556
        %v3558 = vpop.f32.mrb[0].mxu0
        %3559 = vmatprep.mubr.f32.mxu0 %v2042
        %3560 = vmatmul.mubr.f32.gmra.mrb[0].mxu0 %v2041
        %v3561 = vpop.f32.mrb[0].mxu0
        %v3562 = vadd.f32 %v3417, %v3561
        %v3563 = vpop.f32.mrb[0].mxu0
        %3564 = vmatprep.mubr.f32.mxu0 %v2058
        %3565 = vmatmul.mubr.f32.gmra.mrb[0].mxu0 %v2057
        %v3566 = vpop.f32.mrb[0].mxu0
        %v3567 = vadd.f32 %v3422, %v3566
        %v3568 = vpop.f32.mrb[0].mxu0
        %3569 = vmatprep.mubr.f32.mxu0 %v2074
        %3570 = vmatmul.mubr.f32.gmra.mrb[0].mxu0 %v2073
        %v3571 = vpop.f32.mrb[0].mxu0
        %v3572 = vadd.f32 %v3427, %v3571
        %v3573 = vpop.f32.mrb[0].mxu0
        %3574 = vmatprep.mubr.f32.mxu0 %v2090
        %3575 = vmatmul.mubr.f32.gmra.mrb[0].mxu0 %v2089
        %v3576 = vpop.f32.mrb[0].mxu0
        %v3577 = vadd.f32 %v3432, %v3576
        %v3578 = vpop.f32.mrb[0].mxu0
        %3579 = vmatprep.mubr.f32.mxu0 %v2106
        %3580 = vmatmul.mubr.f32.gmra.mrb[0].mxu0 %v2105
        %v3581 = vpop.f32.mrb[0].mxu0
        %v3582 = vadd.f32 %v3437, %v3581
        %v3583 = vpop.f32.mrb[0].mxu0
        %3584 = vmatprep.mubr.f32.mxu0 %v2122
        %3585 = vmatmul.mubr.f32.gmra.mrb[0].mxu0 %v2121
        %v3586 = vpop.f32.mrb[0].mxu0
        %v3587 = vadd.f32 %v3442, %v3586
        %v3588 = vpop.f32.mrb[0].mxu0
        %3589 = vmatprep.mubr.f32.mxu0 %v2138
        %3590 = vmatmul.mubr.f32.gmra.mrb[0].mxu0 %v2137
        %v3591 = vpop.f32.mrb[0].mxu0
        %v3592 = vadd.f32 %v3447, %v3591
        %v3593 = vpop.f32.mrb[0].mxu0
        %3594 = vmatprep.mubr.f32.mxu0 %v2154
        %3595 = vmatmul.mubr.f32.gmra.mrb[0].mxu0 %v2153
        %v3596 = vpop.f32.mrb[0].mxu0
        %v3597 = vadd.f32 %v3452, %v3596
        %v3598 = vpop.f32.mrb[0].mxu0
        %3599 = vmatprep.mubr.f32.mxu0 %v2170
        %3600 = vmatmul.mubr.f32.gmra.mrb[0].mxu0 %v2169
        %v3601 = vpop.f32.mrb[0].mxu0
        %v3602 = vadd.f32 %v3457, %v3601
        %v3603 = vpop.f32.mrb[0].mxu0
        %3604 = vmatprep.mubr.f32.mxu0 %v2186
        %3605 = vmatmul.mubr.f32.gmra.mrb[0].mxu0 %v2185
        %v3606 = vpop.f32.mrb[0].mxu0
        %v3607 = vadd.f32 %v3462, %v3606
        %v3608 = vpop.f32.mrb[0].mxu0
        %3609 = vdwg.mxu0
        %3610 = vst [vmem:[%s284] sm:$0xff] %v3532
        %3611 = vst [vmem:[%s284 + $0x8] sm:$0xff] %v3537
        %3612 = vst [vmem:[%s284 + $0x10] sm:$0xff] %v3542
        %3613 = vst [vmem:[%s284 + $0x18] sm:$0xff] %v3547
        %3614 = vst [vmem:[%s284 + $0x20] sm:$0xff] %v3552
        %3615 = vst [vmem:[%s284 + $0x28] sm:$0xff] %v3557
        %3616 = vst [vmem:[%s284 + $0x30] sm:$0xff] %v3562
        %3617 = vst [vmem:[%s284 + $0x38] sm:$0xff] %v3567
        %3618 = vst [vmem:[%s284 + $0x40] sm:$0xff] %v3572
        %3619 = vst [vmem:[%s284 + $0x48] sm:$0xff] %v3577
        %3620 = vst [vmem:[%s284 + $0x50] sm:$0xff] %v3582
        %3621 = vst [vmem:[%s284 + $0x58] sm:$0xff] %v3587
        %3622 = vst [vmem:[%s284 + $0x60] sm:$0xff] %v3592
        %3623 = vst [vmem:[%s284 + $0x68] sm:$0xff] %v3597
        %3624 = vst [vmem:[%s284 + $0x70] sm:$0xff] %v3602
        %3625 = vst [vmem:[%s284 + $0x78] sm:$0xff] %v3607
        %s3626 = sand.u32 %s142, 1
        %s3627 = scalar_lea.sflag [#allocation4], %s3626
        %s3628 = sand.u32 %s142, 1
        %s3629 = smul.addr %s3628, 128
        %s3630 = scalar_lea.vmem [#allocation10], %s3629
        // Predicated region
        $region57: #{tpu_custom_call.1} parent=39 // pred_check
          %p3631 = pneg %p152
        $region58: #{tpu_custom_call.1} parent=39 // pred_check_branch
          %3633 = sbr.rel (%p3631) target = $region60
        $region59: #{tpu_custom_call.1} parent=39 // pred_region
          %s3634 = smul.u32 16, %s24
          %s3636 = ssub.s32 2048, 2048
          %3637 = vsyncadd %s3627, %s3636
          %s3638 = smul.addr %s3634, 128
          %s3639 = scalar_lea.hbm %s5, %s3638
          %s3640 = sshll.u32 %s3630, 4
          %s3641 = int_to_ptr.vmem [resolvable:$true] %s3640
          %3646 = dma.vmem_to_hbm [thread:$0]  %s3641, 2048, %s3639, %s3627, 128, 128, 8
        $region60: #{tpu_custom_call.1} parent=39 // pred_fallthru
          _
      $region40: #{tpu_custom_call.1} parent=5 // pred_fallthru
        _
      %p3647 = scmp.le.s32.totalorder 2, %s19
      // Predicated region
      $region61: #{tpu_custom_call.1} parent=5 // pred_check
        %p3648 = pneg %p3647
      $region62: #{tpu_custom_call.1} parent=5 // pred_check_branch
        %3650 = sbr.rel (%p3648) target = $region64
      $region63: #{tpu_custom_call.1} parent=5 // pred_region
        %s3651 = ssub.s32 %s19, 2
        // Predicated region
        $region65: #{tpu_custom_call.1} parent=63 // pred_check
          %p3652 = pneg %p158
        $region66: #{tpu_custom_call.1} parent=63 // pred_check_branch
          %3654 = sbr.rel (%p3652) target = $region68
        $region67: #{tpu_custom_call.1} parent=63 // pred_region
          %s3655 = sand.u32 %s143, 1
          %s3656 = scalar_lea.sflag [#allocation4], %s3655
          %s3657 = sand.u32 %s143, 1
          %s3658 = smul.addr %s3657, 128
          %s3659 = scalar_lea.vmem [#allocation10], %s3658
          %3660 = dma.done %s3656, 2048
        $region68: #{tpu_custom_call.1} parent=63 // pred_fallthru
          _
      $region64: #{tpu_custom_call.1} parent=5 // pred_fallthru
        _
    $region6: #{tpu_custom_call.1} parent=1 // loop_footer
      %s23 = sadd.s32 1, %s19
    $region7: #{tpu_custom_call.1} parent=1 // loop_footer_branch
      %18 = sbr.rel target = $region3
    $region8: #{tpu_custom_call.1} parent=1 // loop_exit
      _
    %3661 = vsyncpa [#allocation3], 1
    %s3662 = scalar_lea.sflag [#allocation3], 1
    %3663 = vsyncpa %s3662, 1
    %3664 = vsyncpa [#allocation6], 1
    %3665 = vsyncpa [#allocation9], 1
    %3666 = vsyncpa [#allocation4], 1
    %s3667 = scalar_lea.sflag [#allocation4], 1
    %3668 = vsyncpa %s3667, 1

</llo_original>
